<compile_context>
chip_gen: v7x
topology: tpu7x:2x2x1
jax: 0.10.0
libtpu: 0.0.40
codegen_flags: <defaults>
</compile_context>

<pallas_src>
import functools
import math

import jax
import jax.numpy as jnp
from jax.experimental import pallas as pl
from jax.experimental.pallas import tpu as pltpu

# ----------------------------- configuration --------------------------------
DIM = 64                    # channel dim of the block
NUM_HEADS = 8
HEAD_DIM = DIM // NUM_HEADS
EXPAN = 6                   # expan_ratio
POS_HID = 32                # PositionalEncodingFourier hidden_dim (default)
EPS_LN = 1e-6
NEG_INF = -1e30             # additive mask for cross-head attn entries


# ------------------------------ math helpers --------------------------------
def _gelu_tanh(x):
    # tanh-approx GELU: exp/tanh run on the EUP slot.  nn.GELU() is erf-based;
    # the approximation error (<~3e-4 at these magnitudes) plus optional bf16
    # rounding is covered by the final tolerance check.
    c = 0.7978845608028654  # sqrt(2/pi)
    return 0.5 * x * (1.0 + jnp.tanh(c * (x + 0.044715 * x * x * x)))


# ------------------------------ Pallas kernel --------------------------------
def cab_kernel(x_ref, pos_ref, mask_ref, cols_ref,
               wqkv_ref, wproj_ref, w1_ref, b1_ref, w2_ref,
               o_ref, *, bf16_gelu):
    f32, bf16 = jnp.float32, jnp.bfloat16
    C = DIM
    N = x_ref.shape[-1]

    pos = pos_ref[...]                   # (C, N)  precomputed positional projection
    mask = mask_ref[...]                 # (C, C)  0 in-head / -1e30 cross-head
    cols = cols_ref[...]                 # (C, 16) packed column parameters
    wqkv, wproj = wqkv_ref[...], wproj_ref[...]      # bf16 weights
    w1, w2 = w1_ref[...], w2_ref[...]

    # Hoisted lane-broadcasts of every loop-invariant column (JAX does not CSE
    # broadcast_in_dim, so leaving these inside the batch loop re-runs them).
    col = lambda j: cols[:, j:j + 1]                  # (C, 1) static slice
    bc = lambda c: jnp.broadcast_to(c, (C, N))        # (C, N)
    nxw_b, nxb_b = bc(col(0)), bc(col(1))
    bq_b, bk_b, bv_b = bc(col(2)), bc(col(3)), bc(col(4))
    bproj_b, gxca_b = bc(col(5)), bc(col(6))
    nw_b, nb_b = bc(col(7)), bc(col(8))
    b2_b, gamma_b = bc(col(9)), bc(col(10))
    temp_cc = jnp.broadcast_to(col(11), (C, C))
    b1_b = jnp.broadcast_to(b1_ref[...], (EXPAN * C, N))

    def ln(x, w_b, b_b):
        # One-pass LayerNorm over the channel axis (axis 0) of a (C, N) tile.
        m = jnp.mean(x, axis=0, keepdims=True)
        m2 = jnp.mean(x * x, axis=0, keepdims=True)
        return (x - m) * jax.lax.rsqrt(m2 - m * m + EPS_LN) * w_b + b_b

    def body(b, carry):
        x_in = x_ref[b]                  # (C, N)  original tokens (final residual)
        x = x_in + pos                   # + positional encoding

        # ---------------- XCA (block-diagonal cross-covariance) -------------
        y = ln(x, nxw_b, nxb_b)
        qkv = jnp.dot(wqkv, y.astype(bf16), preferred_element_type=f32)   # (3C, N)
        q = qkv[0 * C:1 * C, :] + bq_b
        k = qkv[1 * C:2 * C, :] + bk_b
        v = qkv[2 * C:3 * C, :] + bv_b
        # F.normalize(dim=-1) on the transposed tensors == per-channel L2 norm
        # over the N tokens (eps clamp 1e-12 folded into max(sumsq, 1e-24)).
        qn = q * jax.lax.rsqrt(jnp.maximum(jnp.sum(q * q, axis=1, keepdims=True), 1e-24))
        kn = k * jax.lax.rsqrt(jnp.maximum(jnp.sum(k * k, axis=1, keepdims=True), 1e-24))
        # Full (C, C) cross-covariance; cross-head entries killed by `mask`.
        logits = jax.lax.dot_general(qn.astype(bf16), kn.astype(bf16),
                                     (((1,), (1,)), ((), ())),
                                     preferred_element_type=f32)
        # No max-subtraction: q/k are unit-norm and |temp| ~ O(1), so exp is
        # bounded above; exp(-1e30) underflows to exactly 0 for masked entries.
        p = jnp.exp(logits * temp_cc + mask)
        p = p * pl.reciprocal(jnp.sum(p, axis=-1, keepdims=True), approx=True)
        xca = jnp.dot(p.astype(bf16), v.astype(bf16), preferred_element_type=f32)
        xca = jnp.dot(wproj, xca.astype(bf16), preferred_element_type=f32) + bproj_b
        x = x + gxca_b * xca

        # ---------------- pointwise MLP (norm -> 6x -> GELU -> project) -----
        y = ln(x, nw_b, nb_b)
        h = jnp.dot(w1, y.astype(bf16), preferred_element_type=f32) + b1_b   # (6C, N)
        h = _gelu_tanh(h.astype(bf16) if bf16_gelu else h)
        h = jnp.dot(w2, h.astype(bf16), preferred_element_type=f32) + b2_b   # (C, N)
        # final residual from the ORIGINAL block input (drop_path = Identity)
        o_ref[b] = x_in + gamma_b * h
        return carry

    jax.lax.fori_loop(0, x_ref.shape[0], body, None, unroll=True)


# ------------------------------ wrapper --------------------------------------
def _pick_batch_block(B):
    # Prefer a grid of >= 4 steps (v7x megacore sharding + step-level DMA
    # pipelining), falling back to >= 2, then 1; within that, the biggest
    # batch block so per-step overhead and weight staging amortize.
    for min_steps in (4, 2, 1):
        for cand in (8, 4, 2, 1):
            if B % cand == 0 and B // cand >= min_steps:
                return cand
    return 1


def _bf16_elementwise_ok():
    # v6e / v7x have a bf16 VPU + EUP; v5e and older do not (keep GELU f32).
    try:
        kind = jax.devices()[0].device_kind.lower()
    except Exception:
        return False
    return ("v6" in kind) or ("v7" in kind)


def channel_attention_block(x_nchw, params):
    B, C, H, W = x_nchw.shape
    assert C == DIM
    N = H * W
    x_cn = x_nchw.reshape(B, C, N)                    # free reshape, NO transpose
    bb = _pick_batch_block(B)
    grid = (B // bb,)

    # --- batch-independent precompute (tiny, plain JAX, done once) ----------
    posf = pos_fourier_features(H, W)                                      # (N, 2*hid)
    pos_cn = (params['wp'] @ posf.T + params['bp'][:, None]).astype(jnp.float32)  # (C, N)
    head = jnp.arange(DIM, dtype=jnp.int32) // HEAD_DIM
    mask = jnp.where(head[:, None] == head[None, :], 0.0, NEG_INF).astype(jnp.float32)

    # Pack the twelve (C,) column parameters into a single (C, 16) f32 block.
    f32 = lambda v: v.astype(jnp.float32)
    cols = jnp.stack([
        f32(params['nxw']), f32(params['nxb']),
        f32(params['bqkv'][0:DIM]), f32(params['bqkv'][DIM:2 * DIM]),
        f32(params['bqkv'][2 * DIM:3 * DIM]),
        f32(params['bproj']), f32(params['gxca']),
        f32(params['nw']), f32(params['nb']),
        f32(params['b2']), f32(params['gamma']),
        f32(jnp.repeat(params['temp'], HEAD_DIM)),
    ], axis=1)                                                             # (C, 12)
    cols = jnp.pad(cols, ((0, 0), (0, 16 - cols.shape[1])))                # (C, 16)

    bfm = lambda m: m.astype(jnp.bfloat16)                                 # MXU operands
    b1_col = params['b1'].reshape(-1, 1).astype(jnp.float32)               # (6C, 1)

    args = (x_cn, pos_cn, mask, cols,
            bfm(params['wqkv']), bfm(params['wproj']),
            bfm(params['w1']), b1_col, bfm(params['w2']))

    in_specs = [pl.BlockSpec((bb, C, N), lambda i: (i, 0, 0))]
    in_specs += [pl.BlockSpec(a.shape, lambda i: (0, 0)) for a in args[1:]]

    kernel = functools.partial(cab_kernel, bf16_gelu=_bf16_elementwise_ok())

    out_cn = pl.pallas_call(
        kernel,
        out_shape=jax.ShapeDtypeStruct((B, C, N), jnp.float32),
        grid_spec=pltpu.PrefetchScalarGridSpec(
            num_scalar_prefetch=0,
            grid=grid,
            in_specs=in_specs,
            out_specs=pl.BlockSpec((bb, C, N), lambda i: (i, 0, 0))),
        compiler_params=pltpu.CompilerParams(
            dimension_semantics=("parallel",),
            vmem_limit_bytes=32 * 1024 * 1024),
    )(*args)

    return out_cn.reshape(B, C, H, W)                 # free reshape back to NCHW


# ------------------- Fourier positional features (parameter-free glue) -------
def pos_fourier_features(H, W, hidden_dim=POS_HID, temperature=10000.0):
    scale = 2.0 * math.pi
    eps = 1e-6
    y_embed = jnp.arange(1, H + 1, dtype=jnp.float32) / (H + eps) * scale   # (H,)
    x_embed = jnp.arange(1, W + 1, dtype=jnp.float32) / (W + eps) * scale   # (W,)
    dim_t = jnp.arange(hidden_dim, dtype=jnp.float32)
    dim_t = temperature ** (2.0 * jnp.floor(dim_t / 2.0) / hidden_dim)

    def interleave(p):   # sin(even)/cos(odd) interleaved == torch stack+flatten
        s = jnp.sin(p[..., 0::2])
        c = jnp.cos(p[..., 1::2])
        return jnp.stack([s, c], axis=-1).reshape(p.shape[0], -1)

    pos_y = interleave(y_embed[:, None] / dim_t)                            # (H, hid)
    pos_x = interleave(x_embed[:, None] / dim_t)                            # (W, hid)
    pos_y_full = jnp.broadcast_to(pos_y[:, None, :], (H, W, hidden_dim))
    pos_x_full = jnp.broadcast_to(pos_x[None, :, :], (H, W, hidden_dim))
    feat = jnp.concatenate([pos_y_full, pos_x_full], axis=-1)               # (H, W, 2*hid)
    return feat.reshape(H * W, 2 * hidden_dim).astype(jnp.float32)


# ------------------------------ parameters -----------------------------------
def init_params(key):
    # Deterministic synthetic init, torch (out, in) weight convention.
    ks = jax.random.split(key, 17)
    w = lambda k, shape, s=0.05: s * jax.random.normal(k, shape, dtype=jnp.float32)
    return dict(
        wp=w(ks[0], (DIM, 2 * POS_HID)),        # Conv2d(2*hid, dim, 1) weight
        bp=w(ks[1], (DIM,)),
        nxw=1.0 + 0.1 * jax.random.normal(ks[2], (DIM,), dtype=jnp.float32),
        nxb=0.05 * jax.random.normal(ks[3], (DIM,), dtype=jnp.float32),
        temp=1.0 + 0.1 * jax.random.normal(ks[4], (NUM_HEADS,), dtype=jnp.float32),
        wqkv=w(ks[5], (3 * DIM, DIM)),          # Linear(dim, 3*dim) weight
        bqkv=w(ks[6], (3 * DIM,)),
        wproj=w(ks[7], (DIM, DIM)),
        bproj=w(ks[8], (DIM,)),
        gxca=0.5 + 0.1 * jax.random.normal(ks[9], (DIM,), dtype=jnp.float32),
        nw=1.0 + 0.1 * jax.random.normal(ks[10], (DIM,), dtype=jnp.float32),
        nb=0.05 * jax.random.normal(ks[11], (DIM,), dtype=jnp.float32),
        w1=w(ks[12], (EXPAN * DIM, DIM)),       # pwconv1 weight
        b1=w(ks[13], (EXPAN * DIM,)),
        w2=w(ks[14], (DIM, EXPAN * DIM)),       # pwconv2 weight
        b2=w(ks[15], (DIM,)),
        gamma=0.5 + 0.1 * jax.random.normal(ks[16], (DIM,), dtype=jnp.float32),
    )


# --------------------------- pure-JAX exact f32 reference --------------------
def _ln_last(x, w, b):
    mu = jnp.mean(x, axis=-1, keepdims=True)
    var = jnp.mean((x - mu) ** 2, axis=-1, keepdims=True)
    return (x - mu) * jax.lax.rsqrt(var + EPS_LN) * w + b


def reference_forward(x_nchw, p):
    B, C, H, W = x_nchw.shape
    N = H * W
    x_tok = x_nchw.reshape(B, C, N).transpose(0, 2, 1)          # (B, N, C)
    posf = pos_fourier_features(H, W)
    pos = posf @ p['wp'].T + p['bp']                            # (N, C)
    x = x_tok + pos[None]
    y = _ln_last(x, p['nxw'], p['nxb'])
    qkv = y @ p['wqkv'].T + p['bqkv']
    qkv = qkv.reshape(B, N, 3, NUM_HEADS, HEAD_DIM).transpose(2, 0, 3, 1, 4)
    q, k, v = qkv[0], qkv[1], qkv[2]                            # (B, h, N, hd)
    q = jnp.swapaxes(q, -2, -1)                                 # (B, h, hd, N)
    k = jnp.swapaxes(k, -2, -1)
    v = jnp.swapaxes(v, -2, -1)
    q = q / jnp.maximum(jnp.sqrt(jnp.sum(q * q, -1, keepdims=True)), 1e-12)
    k = k / jnp.maximum(jnp.sqrt(jnp.sum(k * k, -1, keepdims=True)), 1e-12)
    attn = jnp.einsum('bhdn,bhen->bhde', q, k) * p['temp'][None, :, None, None]
    attn = jax.nn.softmax(attn, axis=-1)
    xca = jnp.einsum('bhde,bhen->bhdn', attn, v)
    xca = xca.transpose(0, 3, 1, 2).reshape(B, N, C)
    xca = xca @ p['wproj'].T + p['bproj']
    x = x + p['gxca'] * xca
    y = _ln_last(x, p['nw'], p['nb'])
    h1 = jax.nn.gelu(y @ p['w1'].T + p['b1'], approximate=False)
    h2 = h1 @ p['w2'].T + p['b2']
    h2 = p['gamma'] * h2
    out_tok = x_tok + h2
    return out_tok.transpose(0, 2, 1).reshape(B, C, H, W)


# ------------------------------------ main ------------------------------------
if __name__ == "__main__":
    key = jax.random.PRNGKey(0)
    kx, kp = jax.random.split(key)
    B, H, W = 4, 16, 16                      # N = 256 tokens, bb = 1, grid = (4,)
    x = jax.random.normal(kx, (B, DIM, H, W), dtype=jnp.float32)
    params = init_params(kp)

    out = channel_attention_block(x, params)
    out = jax.block_until_ready(out)
    assert out.shape == (B, DIM, H, W)

    ref = reference_forward(x, params)
    max_err = float(jnp.max(jnp.abs(out - ref)))
    # Kernel uses bf16 MXU operands (+ bf16 GELU on v6e/v7x) and tanh-approx
    # GELU; reference is exact f32, so allow a few-e-3-scale drift.
    if max_err > 3e-2:
        raise SystemExit(f"mismatch vs reference: max_err={max_err}")
    print("KERNEL_OK")
</pallas_src>

<mosaic_0001>
module attributes {stable_mosaic.version = 11 : i64} {
  func.func @cab_kernel(%arg0: i32, %arg1: memref<1x64x256xf32, #tpu.memory_space<vmem>>, %arg2: memref<64x256xf32, #tpu.memory_space<vmem>>, %arg3: memref<64x64xf32, #tpu.memory_space<vmem>>, %arg4: memref<64x16xf32, #tpu.memory_space<vmem>>, %arg5: memref<192x64xbf16, #tpu.memory_space<vmem>>, %arg6: memref<64x64xbf16, #tpu.memory_space<vmem>>, %arg7: memref<384x64xbf16, #tpu.memory_space<vmem>>, %arg8: memref<384x1xf32, #tpu.memory_space<vmem>>, %arg9: memref<64x384xbf16, #tpu.memory_space<vmem>>, %arg10: memref<1x64x256xf32, #tpu.memory_space<vmem>>) attributes {dimension_semantics = [#tpu.dimension_semantics<parallel>], iteration_bounds = array<i64: 4>, scalar_prefetch = 0 : i64, scratch_operands = 0 : i64, tpu.core_type = #tpu.core_type<tc>, window_params = [{transform_indices = @transform_0, window_bounds = array<i64: 1, 64, 256>}, {pipeline_mode = #tpu.pipeline_mode<synchronous>, transform_indices = @transform_1, window_bounds = array<i64: 64, 256>}, {pipeline_mode = #tpu.pipeline_mode<synchronous>, transform_indices = @transform_2, window_bounds = array<i64: 64, 64>}, {pipeline_mode = #tpu.pipeline_mode<synchronous>, transform_indices = @transform_3, window_bounds = array<i64: 64, 16>}, {pipeline_mode = #tpu.pipeline_mode<synchronous>, transform_indices = @transform_4, window_bounds = array<i64: 192, 64>}, {pipeline_mode = #tpu.pipeline_mode<synchronous>, transform_indices = @transform_5, window_bounds = array<i64: 64, 64>}, {pipeline_mode = #tpu.pipeline_mode<synchronous>, transform_indices = @transform_6, window_bounds = array<i64: 384, 64>}, {pipeline_mode = #tpu.pipeline_mode<synchronous>, transform_indices = @transform_7, window_bounds = array<i64: 384, 1>}, {pipeline_mode = #tpu.pipeline_mode<synchronous>, transform_indices = @transform_8, window_bounds = array<i64: 64, 384>}, {transform_indices = @transform_9, window_bounds = array<i64: 1, 64, 256>}]} {
    %c0 = arith.constant 0 : index
    %c0_0 = arith.constant 0 : index
    %0 = vector.load %arg2[%c0, %c0_0] : memref<64x256xf32, #tpu.memory_space<vmem>>, vector<64x256xf32>
    %c0_1 = arith.constant 0 : index
    %c0_2 = arith.constant 0 : index
    %1 = vector.load %arg3[%c0_1, %c0_2] : memref<64x64xf32, #tpu.memory_space<vmem>>, vector<64x64xf32>
    %c0_3 = arith.constant 0 : index
    %c0_4 = arith.constant 0 : index
    %2 = vector.load %arg4[%c0_3, %c0_4] : memref<64x16xf32, #tpu.memory_space<vmem>>, vector<64x16xf32>
    %c0_5 = arith.constant 0 : index
    %c0_6 = arith.constant 0 : index
    %3 = vector.load %arg5[%c0_5, %c0_6] : memref<192x64xbf16, #tpu.memory_space<vmem>>, vector<192x64xbf16>
    %c0_7 = arith.constant 0 : index
    %c0_8 = arith.constant 0 : index
    %4 = vector.load %arg6[%c0_7, %c0_8] : memref<64x64xbf16, #tpu.memory_space<vmem>>, vector<64x64xbf16>
    %c0_9 = arith.constant 0 : index
    %c0_10 = arith.constant 0 : index
    %5 = vector.load %arg7[%c0_9, %c0_10] : memref<384x64xbf16, #tpu.memory_space<vmem>>, vector<384x64xbf16>
    %c0_11 = arith.constant 0 : index
    %c0_12 = arith.constant 0 : index
    %6 = vector.load %arg9[%c0_11, %c0_12] : memref<64x384xbf16, #tpu.memory_space<vmem>>, vector<64x384xbf16>
    %7 = vector.extract_strided_slice %2 {offsets = [0, 0], sizes = [64, 1], strides = [1, 1]} : vector<64x16xf32> to vector<64x1xf32>
    %8 = vector.shape_cast %7 : vector<64x1xf32> to vector<64x1xf32>
    %9 = vector.broadcast %8 : vector<64x1xf32> to vector<64x256xf32>
    %10 = vector.extract_strided_slice %2 {offsets = [0, 1], sizes = [64, 1], strides = [1, 1]} : vector<64x16xf32> to vector<64x1xf32>
    %11 = vector.shape_cast %10 : vector<64x1xf32> to vector<64x1xf32>
    %12 = vector.broadcast %11 : vector<64x1xf32> to vector<64x256xf32>
    %13 = vector.extract_strided_slice %2 {offsets = [0, 2], sizes = [64, 1], strides = [1, 1]} : vector<64x16xf32> to vector<64x1xf32>
    %14 = vector.shape_cast %13 : vector<64x1xf32> to vector<64x1xf32>
    %15 = vector.broadcast %14 : vector<64x1xf32> to vector<64x256xf32>
    %16 = vector.extract_strided_slice %2 {offsets = [0, 3], sizes = [64, 1], strides = [1, 1]} : vector<64x16xf32> to vector<64x1xf32>
    %17 = vector.shape_cast %16 : vector<64x1xf32> to vector<64x1xf32>
    %18 = vector.broadcast %17 : vector<64x1xf32> to vector<64x256xf32>
    %19 = vector.extract_strided_slice %2 {offsets = [0, 4], sizes = [64, 1], strides = [1, 1]} : vector<64x16xf32> to vector<64x1xf32>
    %20 = vector.shape_cast %19 : vector<64x1xf32> to vector<64x1xf32>
    %21 = vector.broadcast %20 : vector<64x1xf32> to vector<64x256xf32>
    %22 = vector.extract_strided_slice %2 {offsets = [0, 5], sizes = [64, 1], strides = [1, 1]} : vector<64x16xf32> to vector<64x1xf32>
    %23 = vector.shape_cast %22 : vector<64x1xf32> to vector<64x1xf32>
    %24 = vector.broadcast %23 : vector<64x1xf32> to vector<64x256xf32>
    %25 = vector.extract_strided_slice %2 {offsets = [0, 6], sizes = [64, 1], strides = [1, 1]} : vector<64x16xf32> to vector<64x1xf32>
    %26 = vector.shape_cast %25 : vector<64x1xf32> to vector<64x1xf32>
    %27 = vector.broadcast %26 : vector<64x1xf32> to vector<64x256xf32>
    %28 = vector.extract_strided_slice %2 {offsets = [0, 7], sizes = [64, 1], strides = [1, 1]} : vector<64x16xf32> to vector<64x1xf32>
    %29 = vector.shape_cast %28 : vector<64x1xf32> to vector<64x1xf32>
    %30 = vector.broadcast %29 : vector<64x1xf32> to vector<64x256xf32>
    %31 = vector.extract_strided_slice %2 {offsets = [0, 8], sizes = [64, 1], strides = [1, 1]} : vector<64x16xf32> to vector<64x1xf32>
    %32 = vector.shape_cast %31 : vector<64x1xf32> to vector<64x1xf32>
    %33 = vector.broadcast %32 : vector<64x1xf32> to vector<64x256xf32>
    %34 = vector.extract_strided_slice %2 {offsets = [0, 9], sizes = [64, 1], strides = [1, 1]} : vector<64x16xf32> to vector<64x1xf32>
    %35 = vector.shape_cast %34 : vector<64x1xf32> to vector<64x1xf32>
    %36 = vector.broadcast %35 : vector<64x1xf32> to vector<64x256xf32>
    %37 = vector.extract_strided_slice %2 {offsets = [0, 10], sizes = [64, 1], strides = [1, 1]} : vector<64x16xf32> to vector<64x1xf32>
    %38 = vector.shape_cast %37 : vector<64x1xf32> to vector<64x1xf32>
    %39 = vector.broadcast %38 : vector<64x1xf32> to vector<64x256xf32>
    %40 = vector.extract_strided_slice %2 {offsets = [0, 11], sizes = [64, 1], strides = [1, 1]} : vector<64x16xf32> to vector<64x1xf32>
    %41 = vector.shape_cast %40 : vector<64x1xf32> to vector<64x1xf32>
    %42 = vector.broadcast %41 : vector<64x1xf32> to vector<64x64xf32>
    %c0_13 = arith.constant 0 : index
    %c0_14 = arith.constant 0 : index
    %43 = vector.load %arg8[%c0_13, %c0_14] : memref<384x1xf32, #tpu.memory_space<vmem>>, vector<384x1xf32>
    %44 = vector.shape_cast %43 : vector<384x1xf32> to vector<384x1xf32>
    %45 = vector.broadcast %44 : vector<384x1xf32> to vector<384x256xf32>
    %c0_i32 = arith.constant 0 : i32
    %46 = arith.index_cast %c0_i32 : i32 to index
    %c0_15 = arith.constant 0 : index
    %c0_16 = arith.constant 0 : index
    %47 = vector.load %arg1[%46, %c0_15, %c0_16] : memref<1x64x256xf32, #tpu.memory_space<vmem>>, vector<1x64x256xf32>
    %48 = vector.shape_cast %47 : vector<1x64x256xf32> to vector<64x256xf32>
    %49 = arith.addf %48, %0 : vector<64x256xf32>
    %cst = arith.constant dense<0.000000e+00> : vector<256xf32>
    %50 = vector.multi_reduction <add>, %49, %cst [0] : vector<64x256xf32> to vector<256xf32>
    %51 = vector.shape_cast %50 : vector<256xf32> to vector<1x256xf32>
    %cst_17 = arith.constant 6.400000e+01 : f32
    %52 = vector.broadcast %cst_17 : f32 to vector<1x256xf32>
    %53 = arith.divf %51, %52 : vector<1x256xf32>
    %54 = arith.mulf %49, %49 : vector<64x256xf32>
    %cst_18 = arith.constant dense<0.000000e+00> : vector<256xf32>
    %55 = vector.multi_reduction <add>, %54, %cst_18 [0] : vector<64x256xf32> to vector<256xf32>
    %56 = vector.shape_cast %55 : vector<256xf32> to vector<1x256xf32>
    %cst_19 = arith.constant 6.400000e+01 : f32
    %57 = vector.broadcast %cst_19 : f32 to vector<1x256xf32>
    %58 = arith.divf %56, %57 : vector<1x256xf32>
    %59 = vector.broadcast %53 : vector<1x256xf32> to vector<64x256xf32>
    %60 = arith.subf %49, %59 : vector<64x256xf32>
    %61 = arith.mulf %53, %53 : vector<1x256xf32>
    %62 = arith.subf %58, %61 : vector<1x256xf32>
    %cst_20 = arith.constant 9.99999997E-7 : f32
    %63 = vector.broadcast %cst_20 : f32 to vector<1x256xf32>
    %64 = arith.addf %62, %63 : vector<1x256xf32>
    %65 = math.rsqrt %64 : vector<1x256xf32>
    %66 = vector.broadcast %65 : vector<1x256xf32> to vector<64x256xf32>
    %67 = arith.mulf %60, %66 : vector<64x256xf32>
    %68 = arith.mulf %67, %9 : vector<64x256xf32>
    %69 = arith.addf %68, %12 : vector<64x256xf32>
    %70 = arith.truncf %69 : vector<64x256xf32> to vector<64x256xbf16>
    %cst_21 = arith.constant dense<0.000000e+00> : vector<192x256xf32>
    %71 = tpu.matmul %3, %70, %cst_21 {dimension_numbers = #tpu.dot_dimension_numbers<[1], [0], [0], [1], [0, 0, 1, 1], [], []>} : vector<192x64xbf16>, vector<64x256xbf16>, vector<192x256xf32> -> vector<192x256xf32>
    %72 = vector.extract_strided_slice %71 {offsets = [0, 0], sizes = [64, 256], strides = [1, 1]} : vector<192x256xf32> to vector<64x256xf32>
    %73 = arith.addf %72, %15 : vector<64x256xf32>
    %74 = vector.extract_strided_slice %71 {offsets = [64, 0], sizes = [64, 256], strides = [1, 1]} : vector<192x256xf32> to vector<64x256xf32>
    %75 = arith.addf %74, %18 : vector<64x256xf32>
    %76 = vector.extract_strided_slice %71 {offsets = [128, 0], sizes = [64, 256], strides = [1, 1]} : vector<192x256xf32> to vector<64x256xf32>
    %77 = arith.addf %76, %21 : vector<64x256xf32>
    %78 = arith.mulf %73, %73 : vector<64x256xf32>
    %cst_22 = arith.constant dense<0.000000e+00> : vector<64xf32>
    %79 = vector.multi_reduction <add>, %78, %cst_22 [1] : vector<64x256xf32> to vector<64xf32>
    %80 = vector.shape_cast %79 : vector<64xf32> to vector<64x1xf32>
    %cst_23 = arith.constant 1.000000e-24 : f32
    %81 = vector.broadcast %cst_23 : f32 to vector<64x1xf32>
    %82 = arith.maximumf %80, %81 : vector<64x1xf32>
    %83 = math.rsqrt %82 : vector<64x1xf32>
    %84 = vector.broadcast %83 : vector<64x1xf32> to vector<64x256xf32>
    %85 = arith.mulf %73, %84 : vector<64x256xf32>
    %86 = arith.mulf %75, %75 : vector<64x256xf32>
    %cst_24 = arith.constant dense<0.000000e+00> : vector<64xf32>
    %87 = vector.multi_reduction <add>, %86, %cst_24 [1] : vector<64x256xf32> to vector<64xf32>
    %88 = vector.shape_cast %87 : vector<64xf32> to vector<64x1xf32>
    %cst_25 = arith.constant 1.000000e-24 : f32
    %89 = vector.broadcast %cst_25 : f32 to vector<64x1xf32>
    %90 = arith.maximumf %88, %89 : vector<64x1xf32>
    %91 = math.rsqrt %90 : vector<64x1xf32>
    %92 = vector.broadcast %91 : vector<64x1xf32> to vector<64x256xf32>
    %93 = arith.mulf %75, %92 : vector<64x256xf32>
    %94 = arith.truncf %85 : vector<64x256xf32> to vector<64x256xbf16>
    %95 = arith.truncf %93 : vector<64x256xf32> to vector<64x256xbf16>
    %cst_26 = arith.constant dense<0.000000e+00> : vector<64x64xf32>
    %96 = tpu.matmul %94, %95, %cst_26 {dimension_numbers = #tpu.dot_dimension_numbers<[1], [1], [0], [0], [0, 0, 1, 0], [], []>} : vector<64x256xbf16>, vector<64x256xbf16>, vector<64x64xf32> -> vector<64x64xf32>
    %97 = arith.mulf %96, %42 : vector<64x64xf32>
    %98 = arith.addf %97, %1 : vector<64x64xf32>
    %99 = math.exp %98 : vector<64x64xf32>
    %cst_27 = arith.constant dense<0.000000e+00> : vector<64xf32>
    %100 = vector.multi_reduction <add>, %99, %cst_27 [1] : vector<64x64xf32> to vector<64xf32>
    %101 = vector.shape_cast %100 : vector<64xf32> to vector<64x1xf32>
    %102 = tpu.reciprocal %101 {approx = true} : vector<64x1xf32> -> vector<64x1xf32>
    %103 = vector.broadcast %102 : vector<64x1xf32> to vector<64x64xf32>
    %104 = arith.mulf %99, %103 : vector<64x64xf32>
    %105 = arith.truncf %104 : vector<64x64xf32> to vector<64x64xbf16>
    %106 = arith.truncf %77 : vector<64x256xf32> to vector<64x256xbf16>
    %cst_28 = arith.constant dense<0.000000e+00> : vector<64x256xf32>
    %107 = tpu.matmul %105, %106, %cst_28 {dimension_numbers = #tpu.dot_dimension_numbers<[1], [0], [0], [1], [0, 0, 1, 1], [], []>} : vector<64x64xbf16>, vector<64x256xbf16>, vector<64x256xf32> -> vector<64x256xf32>
    %108 = arith.truncf %107 : vector<64x256xf32> to vector<64x256xbf16>
    %cst_29 = arith.constant dense<0.000000e+00> : vector<64x256xf32>
    %109 = tpu.matmul %4, %108, %cst_29 {dimension_numbers = #tpu.dot_dimension_numbers<[1], [0], [0], [1], [0, 0, 1, 1], [], []>} : vector<64x64xbf16>, vector<64x256xbf16>, vector<64x256xf32> -> vector<64x256xf32>
    %110 = arith.addf %109, %24 : vector<64x256xf32>
    %111 = arith.mulf %27, %110 : vector<64x256xf32>
    %112 = arith.addf %49, %111 : vector<64x256xf32>
    %cst_30 = arith.constant dense<0.000000e+00> : vector<256xf32>
    %113 = vector.multi_reduction <add>, %112, %cst_30 [0] : vector<64x256xf32> to vector<256xf32>
    %114 = vector.shape_cast %113 : vector<256xf32> to vector<1x256xf32>
    %cst_31 = arith.constant 6.400000e+01 : f32
    %115 = vector.broadcast %cst_31 : f32 to vector<1x256xf32>
    %116 = arith.divf %114, %115 : vector<1x256xf32>
    %117 = arith.mulf %112, %112 : vector<64x256xf32>
    %cst_32 = arith.constant dense<0.000000e+00> : vector<256xf32>
    %118 = vector.multi_reduction <add>, %117, %cst_32 [0] : vector<64x256xf32> to vector<256xf32>
    %119 = vector.shape_cast %118 : vector<256xf32> to vector<1x256xf32>
    %cst_33 = arith.constant 6.400000e+01 : f32
    %120 = vector.broadcast %cst_33 : f32 to vector<1x256xf32>
    %121 = arith.divf %119, %120 : vector<1x256xf32>
    %122 = vector.broadcast %116 : vector<1x256xf32> to vector<64x256xf32>
    %123 = arith.subf %112, %122 : vector<64x256xf32>
    %124 = arith.mulf %116, %116 : vector<1x256xf32>
    %125 = arith.subf %121, %124 : vector<1x256xf32>
    %cst_34 = arith.constant 9.99999997E-7 : f32
    %126 = vector.broadcast %cst_34 : f32 to vector<1x256xf32>
    %127 = arith.addf %125, %126 : vector<1x256xf32>
    %128 = math.rsqrt %127 : vector<1x256xf32>
    %129 = vector.broadcast %128 : vector<1x256xf32> to vector<64x256xf32>
    %130 = arith.mulf %123, %129 : vector<64x256xf32>
    %131 = arith.mulf %130, %30 : vector<64x256xf32>
    %132 = arith.addf %131, %33 : vector<64x256xf32>
    %133 = arith.truncf %132 : vector<64x256xf32> to vector<64x256xbf16>
    %cst_35 = arith.constant dense<0.000000e+00> : vector<384x256xf32>
    %134 = tpu.matmul %5, %133, %cst_35 {dimension_numbers = #tpu.dot_dimension_numbers<[1], [0], [0], [1], [0, 0, 1, 1], [], []>} : vector<384x64xbf16>, vector<64x256xbf16>, vector<384x256xf32> -> vector<384x256xf32>
    %135 = arith.addf %134, %45 : vector<384x256xf32>
    %cst_36 = arith.constant 5.000000e-01 : f32
    %136 = vector.broadcast %cst_36 : f32 to vector<384x256xf32>
    %137 = arith.mulf %136, %135 : vector<384x256xf32>
    %cst_37 = arith.constant 4.471500e-02 : f32
    %138 = vector.broadcast %cst_37 : f32 to vector<384x256xf32>
    %139 = arith.mulf %138, %135 : vector<384x256xf32>
    %140 = arith.mulf %139, %135 : vector<384x256xf32>
    %141 = arith.mulf %140, %135 : vector<384x256xf32>
    %142 = arith.addf %135, %141 : vector<384x256xf32>
    %cst_38 = arith.constant 0.797884583 : f32
    %143 = vector.broadcast %cst_38 : f32 to vector<384x256xf32>
    %144 = arith.mulf %143, %142 : vector<384x256xf32>
    %145 = math.tanh %144 : vector<384x256xf32>
    %cst_39 = arith.constant 1.000000e+00 : f32
    %146 = vector.broadcast %cst_39 : f32 to vector<384x256xf32>
    %147 = arith.addf %146, %145 : vector<384x256xf32>
    %148 = arith.mulf %137, %147 : vector<384x256xf32>
    %149 = arith.truncf %148 : vector<384x256xf32> to vector<384x256xbf16>
    %cst_40 = arith.constant dense<0.000000e+00> : vector<64x256xf32>
    %150 = tpu.matmul %6, %149, %cst_40 {dimension_numbers = #tpu.dot_dimension_numbers<[1], [0], [0], [1], [0, 0, 1, 1], [], []>} : vector<64x384xbf16>, vector<384x256xbf16>, vector<64x256xf32> -> vector<64x256xf32>
    %151 = arith.addf %150, %36 : vector<64x256xf32>
    %152 = arith.mulf %39, %151 : vector<64x256xf32>
    %153 = arith.addf %48, %152 : vector<64x256xf32>
    %154 = arith.index_cast %c0_i32 : i32 to index
    %c0_41 = arith.constant 0 : index
    %c0_42 = arith.constant 0 : index
    %155 = vector.load %arg10[%154, %c0_41, %c0_42] : memref<1x64x256xf32, #tpu.memory_space<vmem>>, vector<1x64x256xf32>
    %156 = vector.shape_cast %155 : vector<1x64x256xf32> to vector<64x256xf32>
    %157 = vector.shape_cast %153 : vector<64x256xf32> to vector<1x64x256xf32>
    tpu.vector_store %arg10[%154, %c0_41, %c0_42], %157 {strides = array<i32>} : memref<1x64x256xf32, #tpu.memory_space<vmem>>, vector<1x64x256xf32>,
    %c1_i32 = arith.constant 1 : i32
    return
  }
  func.func @transform_0(%arg0: i32) -> (i32, i32, i32) {
    %c0_i32 = arith.constant 0 : i32
    %c0_i32_0 = arith.constant 0 : i32
    %c0_i32_1 = arith.constant 0 : i32
    return %arg0, %c0_i32, %c0_i32_0 : i32, i32, i32
  }
  func.func @transform_1(%arg0: i32) -> (i32, i32) {
    %c0_i32 = arith.constant 0 : i32
    %c0_i32_0 = arith.constant 0 : i32
    %c0_i32_1 = arith.constant 0 : i32
    return %c0_i32, %c0_i32_0 : i32, i32
  }
  func.func @transform_2(%arg0: i32) -> (i32, i32) {
    %c0_i32 = arith.constant 0 : i32
    %c0_i32_0 = arith.constant 0 : i32
    %c0_i32_1 = arith.constant 0 : i32
    return %c0_i32, %c0_i32_0 : i32, i32
  }
  func.func @transform_3(%arg0: i32) -> (i32, i32) {
    %c0_i32 = arith.constant 0 : i32
    %c0_i32_0 = arith.constant 0 : i32
    %c0_i32_1 = arith.constant 0 : i32
    return %c0_i32, %c0_i32_0 : i32, i32
  }
  func.func @transform_4(%arg0: i32) -> (i32, i32) {
    %c0_i32 = arith.constant 0 : i32
    %c0_i32_0 = arith.constant 0 : i32
    %c0_i32_1 = arith.constant 0 : i32
    return %c0_i32, %c0_i32_0 : i32, i32
  }
  func.func @transform_5(%arg0: i32) -> (i32, i32) {
    %c0_i32 = arith.constant 0 : i32
    %c0_i32_0 = arith.constant 0 : i32
    %c0_i32_1 = arith.constant 0 : i32
    return %c0_i32, %c0_i32_0 : i32, i32
  }
  func.func @transform_6(%arg0: i32) -> (i32, i32) {
    %c0_i32 = arith.constant 0 : i32
    %c0_i32_0 = arith.constant 0 : i32
    %c0_i32_1 = arith.constant 0 : i32
    return %c0_i32, %c0_i32_0 : i32, i32
  }
  func.func @transform_7(%arg0: i32) -> (i32, i32) {
    %c0_i32 = arith.constant 0 : i32
    %c0_i32_0 = arith.constant 0 : i32
    %c0_i32_1 = arith.constant 0 : i32
    return %c0_i32, %c0_i32_0 : i32, i32
  }
  func.func @transform_8(%arg0: i32) -> (i32, i32) {
    %c0_i32 = arith.constant 0 : i32
    %c0_i32_0 = arith.constant 0 : i32
    %c0_i32_1 = arith.constant 0 : i32
    return %c0_i32, %c0_i32_0 : i32, i32
  }
  func.func @transform_9(%arg0: i32) -> (i32, i32, i32) {
    %c0_i32 = arith.constant 0 : i32
    %c0_i32_0 = arith.constant 0 : i32
    %c0_i32_1 = arith.constant 0 : i32
    return %arg0, %c0_i32, %c0_i32_0 : i32, i32, i32
  }
}

</mosaic_0001>

<llo_original>
// kernel: tpu_custom_call.1
$region0: #{tpu_custom_call.1}
  #allocation0 [shape = 'u32[]', space=smem, size = 0x4, offset = 0x4, fixed_abs, tag = 'smem constant byte address 0x4 - core index']
  #allocation1 [shape = 'u32[144,128]{1,0:T(1,128)}', space=vmem, size = 0x12000, scoped, tag = 'internal scratch']
  %s0 = inlined_call_operand.vmem [shape: f32[4,64,256], index: 0, kind: input, shape index: {}]
  %s1 = inlined_call_operand.vmem [shape: f32[64,256], index: 1, kind: input, shape index: {}]
  %s2 = inlined_call_operand.vmem [shape: f32[64,64], index: 2, kind: input, shape index: {}]
  %s3 = inlined_call_operand.vmem [shape: f32[64,16], index: 3, kind: input, shape index: {}]
  %s4 = inlined_call_operand.vmem [shape: bf16[192,64], index: 4, kind: input, shape index: {}]
  %s5 = inlined_call_operand.hbm [shape: bf16[64,64], index: 5, kind: input, shape index: {}]
  %s6 = inlined_call_operand.vmem [shape: bf16[384,64], index: 6, kind: input, shape index: {}]
  %s7 = inlined_call_operand.vmem [shape: f32[384,1], index: 7, kind: input, shape index: {}]
  %s8 = inlined_call_operand.vmem [shape: bf16[64,384], index: 8, kind: input, shape index: {}]
  %s9 = inlined_call_operand.hbm [shape: f32[4,64,256], index: 9, kind: output, shape index: {}]
  %s10 = sld [smem:[#allocation0]]
  $region73: #{tpu_custom_call.1} parent=0
    _
  %s12 = ssub.s32 1, %s10
  %s13 = scalar_select 0, %s12, %s10
  $region1: #{tpu_custom_call.1} parent=0
    #allocation2 [shape = 'u8[16384]{0}', space=vmem, size = 0x4000, scoped, tag = 'input window, operand 5, single buffered']
    #allocation3 [shape = 's32[2]{0}', space=sflag, size = 0x8, scoped, tag = 'scoped memory for tpu_custom_call.1']
    #allocation4 [shape = 's32[2]{0}', space=sflag, size = 0x8, scoped, tag = 'scoped memory for tpu_custom_call.1']
    #allocation5 [shape = 'u8[131072]{0}', space=vmem, size = 0x20000, scoped, tag = 'output window, operand 0']
    %14 = vsyncpa [#allocation3], 0
    %15 = vsyncpa [#allocation4], 0
    %s16 = scalar_lea.sflag [#allocation4], 1
    %17 = vsyncpa %s16, 0
    loop: start=0, step=1, limit=6
    $region2: #{tpu_custom_call.1} parent=1 // loop_pre_header
      _
    $region3: #{tpu_custom_call.1} parent=1 // loop_header
      %s19 = sphi 0, %s23
      %p20 = scmp.ge.s32.totalorder %s19, 6
      %s29 = sphi 0, %s31
      %s32 = sphi 0, %s29
      %s33 = sphi 0, %s32
      %s49 = sphi 0, %s33
      %s53 = sphi 0, %s53
      %s55 = sphi 0, %s53
      %s56 = sphi 0, %s55
      %s70 = sphi 0, %s56
      %s74 = sphi 0, %s74
      %s76 = sphi 0, %s74
      %s77 = sphi 0, %s76
      %s91 = sphi 0, %s77
      %s95 = sphi 0, %s95
      %s97 = sphi 0, %s95
      %s98 = sphi 0, %s97
      %s112 = sphi 0, %s98
      %s116 = sphi 0, %s116
      %s118 = sphi 0, %s116
      %s119 = sphi 0, %s118
      %s133 = sphi 0, %s119
      %s137 = sphi 0, %s137
      %s139 = sphi 0, %s137
      %s140 = sphi 0, %s139
      %s154 = sphi 0, %s140
      %s158 = sphi 0, %s158
      %s160 = sphi 0, %s158
      %s161 = sphi 0, %s160
      %s175 = sphi 0, %s161
      %s179 = sphi 0, %s179
      %s181 = sphi 0, %s179
      %s182 = sphi 0, %s181
      %s196 = sphi 0, %s182
      %s200 = sphi 0, %s200
      %s202 = sphi 0, %s200
      %s203 = sphi 0, %s202
      %s217 = sphi 0, %s203
      %s223 = sphi 0, %s225
      %s226 = sphi 0, %s223
      %s227 = sphi 0, %s226
      %s243 = sphi 0, %s227
    $region4: #{tpu_custom_call.1} parent=1 // loop_header_branch
      %22 = sbr.rel (%p20) target = $region8
    $region5: #{tpu_custom_call.1} parent=1 // loop_body
      %s24 = ssub.s32 %s19, 1
      %s25 = ssub.s32 %s19, 2
      %s26 = sadd.s32 %s19, 1
      %s27 = ssub.s32 %s19, %s26
      %p28 = scmp.eq.s32.totalorder %s27, 0
      %s30 = sadd.s32 %s29, 1
      %s31 = scalar_select %p28, %s29, %s30
      %p34 = pneg %p28
      %p35 = scmp.eq.s32.totalorder %s19, 3
      %p36 = por %p34, %p35
      %p37 = scmp.ne.s32.totalorder %s29, %s32
      %p38 = scmp.eq.s32.totalorder %s19, 0
      %p39 = por %p37, %p38
      %p40 = scmp.ne.s32.totalorder %s29, %s32
      %p41 = scmp.eq.s32.totalorder %s24, 3
      %p42 = por %p40, %p41
      %p43 = scmp.ne.s32.totalorder %s32, %s33
      %p44 = scmp.eq.s32.totalorder %s24, 0
      %p45 = por %p43, %p44
      %p46 = scmp.ne.s32.totalorder %s32, %s33
      %p47 = scmp.eq.s32.totalorder %s25, 3
      %p48 = por %p46, %p47
      %p50 = scmp.ne.s32.totalorder %s33, %s49
      %p51 = scmp.eq.s32.totalorder %s25, 0
      %p52 = por %p50, %p51
      %s54 = sadd.s32 %s53, 1
      %p57 = scmp.eq.s32.totalorder %s19, 3
      %p58 = scmp.ne.s32.totalorder %s53, %s55
      %p59 = scmp.eq.s32.totalorder %s19, 0
      %p60 = por %p58, %p59
      %p61 = scmp.ne.s32.totalorder %s53, %s55
      %p62 = scmp.eq.s32.totalorder %s24, 3
      %p63 = por %p61, %p62
      %p64 = scmp.ne.s32.totalorder %s55, %s56
      %p65 = scmp.eq.s32.totalorder %s24, 0
      %p66 = por %p64, %p65
      %p67 = scmp.ne.s32.totalorder %s55, %s56
      %p68 = scmp.eq.s32.totalorder %s25, 3
      %p69 = por %p67, %p68
      %p71 = scmp.ne.s32.totalorder %s56, %s70
      %p72 = scmp.eq.s32.totalorder %s25, 0
      %p73 = por %p71, %p72
      %s75 = sadd.s32 %s74, 1
      %p78 = scmp.eq.s32.totalorder %s19, 3
      %p79 = scmp.ne.s32.totalorder %s74, %s76
      %p80 = scmp.eq.s32.totalorder %s19, 0
      %p81 = por %p79, %p80
      %p82 = scmp.ne.s32.totalorder %s74, %s76
      %p83 = scmp.eq.s32.totalorder %s24, 3
      %p84 = por %p82, %p83
      %p85 = scmp.ne.s32.totalorder %s76, %s77
      %p86 = scmp.eq.s32.totalorder %s24, 0
      %p87 = por %p85, %p86
      %p88 = scmp.ne.s32.totalorder %s76, %s77
      %p89 = scmp.eq.s32.totalorder %s25, 3
      %p90 = por %p88, %p89
      %p92 = scmp.ne.s32.totalorder %s77, %s91
      %p93 = scmp.eq.s32.totalorder %s25, 0
      %p94 = por %p92, %p93
      %s96 = sadd.s32 %s95, 1
      %p99 = scmp.eq.s32.totalorder %s19, 3
      %p100 = scmp.ne.s32.totalorder %s95, %s97
      %p101 = scmp.eq.s32.totalorder %s19, 0
      %p102 = por %p100, %p101
      %p103 = scmp.ne.s32.totalorder %s95, %s97
      %p104 = scmp.eq.s32.totalorder %s24, 3
      %p105 = por %p103, %p104
      %p106 = scmp.ne.s32.totalorder %s97, %s98
      %p107 = scmp.eq.s32.totalorder %s24, 0
      %p108 = por %p106, %p107
      %p109 = scmp.ne.s32.totalorder %s97, %s98
      %p110 = scmp.eq.s32.totalorder %s25, 3
      %p111 = por %p109, %p110
      %p113 = scmp.ne.s32.totalorder %s98, %s112
      %p114 = scmp.eq.s32.totalorder %s25, 0
      %p115 = por %p113, %p114
      %s117 = sadd.s32 %s116, 1
      %p120 = scmp.eq.s32.totalorder %s19, 3
      %p121 = scmp.ne.s32.totalorder %s116, %s118
      %p122 = scmp.eq.s32.totalorder %s19, 0
      %p123 = por %p121, %p122
      %p124 = scmp.ne.s32.totalorder %s116, %s118
      %p125 = scmp.eq.s32.totalorder %s24, 3
      %p126 = por %p124, %p125
      %p127 = scmp.ne.s32.totalorder %s118, %s119
      %p128 = scmp.eq.s32.totalorder %s24, 0
      %p129 = por %p127, %p128
      %p130 = scmp.ne.s32.totalorder %s118, %s119
      %p131 = scmp.eq.s32.totalorder %s25, 3
      %p132 = por %p130, %p131
      %p134 = scmp.ne.s32.totalorder %s119, %s133
      %p135 = scmp.eq.s32.totalorder %s25, 0
      %p136 = por %p134, %p135
      %s138 = sadd.s32 %s137, 1
      %p141 = scmp.eq.s32.totalorder %s19, 3
      %p142 = scmp.ne.s32.totalorder %s137, %s139
      %p143 = scmp.eq.s32.totalorder %s19, 0
      %p144 = por %p142, %p143
      %p145 = scmp.ne.s32.totalorder %s137, %s139
      %p146 = scmp.eq.s32.totalorder %s24, 3
      %p147 = por %p145, %p146
      %p148 = scmp.ne.s32.totalorder %s139, %s140
      %p149 = scmp.eq.s32.totalorder %s24, 0
      %p150 = por %p148, %p149
      %p151 = scmp.ne.s32.totalorder %s139, %s140
      %p152 = scmp.eq.s32.totalorder %s25, 3
      %p153 = por %p151, %p152
      %p155 = scmp.ne.s32.totalorder %s140, %s154
      %p156 = scmp.eq.s32.totalorder %s25, 0
      %p157 = por %p155, %p156
      %s159 = sadd.s32 %s158, 1
      %p162 = scmp.eq.s32.totalorder %s19, 3
      %p163 = scmp.ne.s32.totalorder %s158, %s160
      %p164 = scmp.eq.s32.totalorder %s19, 0
      %p165 = por %p163, %p164
      %p166 = scmp.ne.s32.totalorder %s158, %s160
      %p167 = scmp.eq.s32.totalorder %s24, 3
      %p168 = por %p166, %p167
      %p169 = scmp.ne.s32.totalorder %s160, %s161
      %p170 = scmp.eq.s32.totalorder %s24, 0
      %p171 = por %p169, %p170
      %p172 = scmp.ne.s32.totalorder %s160, %s161
      %p173 = scmp.eq.s32.totalorder %s25, 3
      %p174 = por %p172, %p173
      %p176 = scmp.ne.s32.totalorder %s161, %s175
      %p177 = scmp.eq.s32.totalorder %s25, 0
      %p178 = por %p176, %p177
      %s180 = sadd.s32 %s179, 1
      %p183 = scmp.eq.s32.totalorder %s19, 3
      %p184 = scmp.ne.s32.totalorder %s179, %s181
      %p185 = scmp.eq.s32.totalorder %s19, 0
      %p186 = por %p184, %p185
      %p187 = scmp.ne.s32.totalorder %s179, %s181
      %p188 = scmp.eq.s32.totalorder %s24, 3
      %p189 = por %p187, %p188
      %p190 = scmp.ne.s32.totalorder %s181, %s182
      %p191 = scmp.eq.s32.totalorder %s24, 0
      %p192 = por %p190, %p191
      %p193 = scmp.ne.s32.totalorder %s181, %s182
      %p194 = scmp.eq.s32.totalorder %s25, 3
      %p195 = por %p193, %p194
      %p197 = scmp.ne.s32.totalorder %s182, %s196
      %p198 = scmp.eq.s32.totalorder %s25, 0
      %p199 = por %p197, %p198
      %s201 = sadd.s32 %s200, 1
      %p204 = scmp.eq.s32.totalorder %s19, 3
      %p205 = scmp.ne.s32.totalorder %s200, %s202
      %p206 = scmp.eq.s32.totalorder %s19, 0
      %p207 = por %p205, %p206
      %p208 = scmp.ne.s32.totalorder %s200, %s202
      %p209 = scmp.eq.s32.totalorder %s24, 3
      %p210 = por %p208, %p209
      %p211 = scmp.ne.s32.totalorder %s202, %s203
      %p212 = scmp.eq.s32.totalorder %s24, 0
      %p213 = por %p211, %p212
      %p214 = scmp.ne.s32.totalorder %s202, %s203
      %p215 = scmp.eq.s32.totalorder %s25, 3
      %p216 = por %p214, %p215
      %p218 = scmp.ne.s32.totalorder %s203, %s217
      %p219 = scmp.eq.s32.totalorder %s25, 0
      %p220 = por %p218, %p219
      %s221 = ssub.s32 %s19, %s26
      %p222 = scmp.eq.s32.totalorder %s221, 0
      %s224 = sadd.s32 %s223, 1
      %s225 = scalar_select %p222, %s223, %s224
      %p228 = pneg %p222
      %p229 = scmp.eq.s32.totalorder %s19, 3
      %p230 = por %p228, %p229
      %p231 = scmp.ne.s32.totalorder %s223, %s226
      %p232 = scmp.eq.s32.totalorder %s19, 0
      %p233 = por %p231, %p232
      %p234 = scmp.ne.s32.totalorder %s223, %s226
      %p235 = scmp.eq.s32.totalorder %s24, 3
      %p236 = por %p234, %p235
      %p237 = scmp.ne.s32.totalorder %s226, %s227
      %p238 = scmp.eq.s32.totalorder %s24, 0
      %p239 = por %p237, %p238
      %p240 = scmp.ne.s32.totalorder %s226, %s227
      %p241 = scmp.eq.s32.totalorder %s25, 3
      %p242 = por %p240, %p241
      %p244 = scmp.ne.s32.totalorder %s227, %s243
      %p245 = scmp.eq.s32.totalorder %s25, 0
      %p246 = por %p244, %p245
      %p247 = scmp.le.s32.totalorder 1, %s19
      %p248 = scmp.lt.s32.totalorder %s19, 5
      %p249 = pnand %p247, %p248
      %p250 = pneg %p249
      // Predicated region
      $region9: #{tpu_custom_call.1} parent=5 // pred_check
        _
      $region10: #{tpu_custom_call.1} parent=5 // pred_check_branch
        %252 = sbr.rel (%p249) target = $region12
      $region11: #{tpu_custom_call.1} parent=5 // pred_region
        %s253 = ssub.s32 %s19, 1
        // Predicated region
        $region13: #{tpu_custom_call.1} parent=11 // pred_check
          %p254 = pneg %p66
        $region14: #{tpu_custom_call.1} parent=11 // pred_check_branch
          %256 = sbr.rel (%p254) target = $region16
        $region15: #{tpu_custom_call.1} parent=11 // pred_region
          _
        $region16: #{tpu_custom_call.1} parent=11 // pred_fallthru
          _
        // Predicated region
        $region17: #{tpu_custom_call.1} parent=11 // pred_check
          %p257 = pneg %p87
        $region18: #{tpu_custom_call.1} parent=11 // pred_check_branch
          %259 = sbr.rel (%p257) target = $region20
        $region19: #{tpu_custom_call.1} parent=11 // pred_region
          _
        $region20: #{tpu_custom_call.1} parent=11 // pred_fallthru
          _
        // Predicated region
        $region21: #{tpu_custom_call.1} parent=11 // pred_check
          %p260 = pneg %p108
        $region22: #{tpu_custom_call.1} parent=11 // pred_check_branch
          %262 = sbr.rel (%p260) target = $region24
        $region23: #{tpu_custom_call.1} parent=11 // pred_region
          _
        $region24: #{tpu_custom_call.1} parent=11 // pred_fallthru
          _
        // Predicated region
        $region25: #{tpu_custom_call.1} parent=11 // pred_check
          %p263 = pneg %p129
        $region26: #{tpu_custom_call.1} parent=11 // pred_check_branch
          %265 = sbr.rel (%p263) target = $region28
        $region27: #{tpu_custom_call.1} parent=11 // pred_region
          _
        $region28: #{tpu_custom_call.1} parent=11 // pred_fallthru
          _
        // Predicated region
        $region29: #{tpu_custom_call.1} parent=11 // pred_check
          %p266 = pneg %p150
        $region30: #{tpu_custom_call.1} parent=11 // pred_check_branch
          %268 = sbr.rel (%p266) target = $region32
        $region31: #{tpu_custom_call.1} parent=11 // pred_region
          %s270 = ssub.s32 512, 512
          %271 = vsyncadd [#allocation3], %s270
          %s272 = sshll.u32 [#allocation2], 4
          %s273 = int_to_ptr.vmem [resolvable:$true] %s272
          %278 = dma.hbm_to_vmem [thread:$0]  %s5, 512, %s273, [#allocation3], 64, 64, 4
        $region32: #{tpu_custom_call.1} parent=11 // pred_fallthru
          _
        // Predicated region
        $region33: #{tpu_custom_call.1} parent=11 // pred_check
          %p279 = pneg %p171
        $region34: #{tpu_custom_call.1} parent=11 // pred_check_branch
          %281 = sbr.rel (%p279) target = $region36
        $region35: #{tpu_custom_call.1} parent=11 // pred_region
          _
        $region36: #{tpu_custom_call.1} parent=11 // pred_fallthru
          _
        // Predicated region
        $region37: #{tpu_custom_call.1} parent=11 // pred_check
          %p282 = pneg %p192
        $region38: #{tpu_custom_call.1} parent=11 // pred_check_branch
          %284 = sbr.rel (%p282) target = $region40
        $region39: #{tpu_custom_call.1} parent=11 // pred_region
          _
        $region40: #{tpu_custom_call.1} parent=11 // pred_fallthru
          _
        // Predicated region
        $region41: #{tpu_custom_call.1} parent=11 // pred_check
          %p285 = pneg %p213
        $region42: #{tpu_custom_call.1} parent=11 // pred_check_branch
          %287 = sbr.rel (%p285) target = $region44
        $region43: #{tpu_custom_call.1} parent=11 // pred_region
          _
        $region44: #{tpu_custom_call.1} parent=11 // pred_fallthru
          _
      $region12: #{tpu_custom_call.1} parent=5 // pred_fallthru
        _
      %p288 = scmp.lt.s32.totalorder %s19, 4
      // Predicated region
      $region45: #{tpu_custom_call.1} parent=5 // pred_check
        %p289 = pneg %p288
      $region46: #{tpu_custom_call.1} parent=5 // pred_check_branch
        %291 = sbr.rel (%p289) target = $region48
      $region47: #{tpu_custom_call.1} parent=5 // pred_region
        // Predicated region
        $region49: #{tpu_custom_call.1} parent=47 // pred_check
          %p292 = pneg %p39
        $region50: #{tpu_custom_call.1} parent=47 // pred_check_branch
          %294 = sbr.rel (%p292) target = $region52
        $region51: #{tpu_custom_call.1} parent=47 // pred_region
          %p295 = scmp.lt.s32.totalorder %s19, 3
          %s296 = scalar_select %p295, %s19, 3
          %s297 = smul.addr %s296, 16
          %s298 = smul.addr %s297, 8
          %s299 = scalar_lea.vmem %s0, %s298
        $region52: #{tpu_custom_call.1} parent=47 // pred_fallthru
          _
      $region48: #{tpu_custom_call.1} parent=5 // pred_fallthru
        _
      %p300 = scmp.le.s32.totalorder 1, %s19
      %p301 = scmp.lt.s32.totalorder %s19, 5
      %p302 = pnand %p300, %p301
      %p303 = pneg %p302
      // Predicated region
      $region53: #{tpu_custom_call.1} parent=5 // pred_check
        _
      $region54: #{tpu_custom_call.1} parent=5 // pred_check_branch
        %305 = sbr.rel (%p302) target = $region56
      $region55: #{tpu_custom_call.1} parent=5 // pred_region
        %s306 = ssub.s32 %s19, 1
        // Predicated region
        $region57: #{tpu_custom_call.1} parent=55 // pred_check
          %p307 = pneg %p150
        $region58: #{tpu_custom_call.1} parent=55 // pred_check_branch
          %309 = sbr.rel (%p307) target = $region60
        $region59: #{tpu_custom_call.1} parent=55 // pred_region
          %310 = dma.done [#allocation3], 512
        $region60: #{tpu_custom_call.1} parent=55 // pred_fallthru
          _
        %p311 = scmp.lt.s32.totalorder %s24, 3
        %s312 = scalar_select %p311, %s24, 3
        %s313 = smul.addr %s312, 16
        %s314 = smul.addr %s313, 8
        %s315 = scalar_lea.vmem %s0, %s314
        %p316 = pneg %p45
        %p317 = pneg %p42
        %p318 = pneg %p66
        %p319 = pneg %p63
        %p320 = pneg %p87
        %p321 = pneg %p84
        %p322 = pneg %p108
        %p323 = pneg %p105
        %p324 = pneg %p129
        %p325 = pneg %p126
        %p326 = pneg %p150
        %p327 = pneg %p147
        %p328 = pneg %p171
        %p329 = pneg %p168
        %p330 = pneg %p192
        %p331 = pneg %p189
        %p332 = pneg %p213
        %p333 = pneg %p210
        %p334 = pneg %p239
        %p335 = pneg %p236
        %s336 = sand.u32 %s226, 1
        %s337 = scalar_lea.sflag [#allocation4], %s336
        %s338 = sand.u32 %s226, 1
        %s339 = smul.addr %s338, 128
        %s340 = scalar_lea.vmem [#allocation5], %s339
        %p341 = scmp.lt.s32.totalorder %s24, 3
        %s342 = scalar_select %p341, %s24, 3
        %s343 = smul.addr %s342, 16
        %s344 = smul.addr %s343, 8
        %s345 = scalar_lea.vmem %s0, %s344
        %v347 = vld [vmem:[%s1] sm:$0xff]
        %v348 = vld [vmem:[%s1 + $0x8] sm:$0xff]
        %v349 = vld [vmem:[%s1 + $0x10] sm:$0xff]
        %v350 = vld [vmem:[%s1 + $0x18] sm:$0xff]
        %v351 = vld [vmem:[%s1 + $0x20] sm:$0xff]
        %v352 = vld [vmem:[%s1 + $0x28] sm:$0xff]
        %v353 = vld [vmem:[%s1 + $0x30] sm:$0xff]
        %v354 = vld [vmem:[%s1 + $0x38] sm:$0xff]
        %v355 = vld [vmem:[%s1 + $0x40] sm:$0xff]
        %v356 = vld [vmem:[%s1 + $0x48] sm:$0xff]
        %v357 = vld [vmem:[%s1 + $0x50] sm:$0xff]
        %v358 = vld [vmem:[%s1 + $0x58] sm:$0xff]
        %v359 = vld [vmem:[%s1 + $0x60] sm:$0xff]
        %v360 = vld [vmem:[%s1 + $0x68] sm:$0xff]
        %v361 = vld [vmem:[%s1 + $0x70] sm:$0xff]
        %v362 = vld [vmem:[%s1 + $0x78] sm:$0xff]
        %v363 = vld [vmem:[%s2] sm:$0xff]
        %v364 = vld [vmem:[%s2 + $0x8] sm:$0xff]
        %v365 = vld [vmem:[%s2 + $0x10] sm:$0xff]
        %v366 = vld [vmem:[%s2 + $0x18] sm:$0xff]
        %v367 = vld [vmem:[%s2 + $0x20] sm:$0xff]
        %v368 = vld [vmem:[%s2 + $0x28] sm:$0xff]
        %v369 = vld [vmem:[%s2 + $0x30] sm:$0xff]
        %v370 = vld [vmem:[%s2 + $0x38] sm:$0xff]
        %v371 = vld [vmem:[%s3] sm:$0xff]
        %v372 = vld [vmem:[%s3 + $0x8] sm:$0xff]
        %v373 = vld [vmem:[%s3 + $0x10] sm:$0xff]
        %v374 = vld [vmem:[%s3 + $0x18] sm:$0xff]
        %v375 = vld [vmem:[%s3 + $0x20] sm:$0xff]
        %v376 = vld [vmem:[%s3 + $0x28] sm:$0xff]
        %v377 = vld [vmem:[%s3 + $0x30] sm:$0xff]
        %v378 = vld [vmem:[%s3 + $0x38] sm:$0xff]
        %v379 = vld [vmem:[%s4] sm:$0xf]
        %v380 = vld [vmem:[%s4 + $0x4] sm:$0xf]
        %v381 = vld [vmem:[%s4 + $0x8] sm:$0xf]
        %v382 = vld [vmem:[%s4 + $0xc] sm:$0xf]
        %v383 = vld [vmem:[%s4 + $0x10] sm:$0xf]
        %v384 = vld [vmem:[%s4 + $0x14] sm:$0xf]
        %v385 = vld [vmem:[%s4 + $0x18] sm:$0xf]
        %v386 = vld [vmem:[%s4 + $0x1c] sm:$0xf]
        %v387 = vld [vmem:[%s4 + $0x20] sm:$0xf]
        %v388 = vld [vmem:[%s4 + $0x24] sm:$0xf]
        %v389 = vld [vmem:[%s4 + $0x28] sm:$0xf]
        %v390 = vld [vmem:[%s4 + $0x2c] sm:$0xf]
        %v391 = vld [vmem:[%s4 + $0x30] sm:$0xf]
        %v392 = vld [vmem:[%s4 + $0x34] sm:$0xf]
        %v393 = vld [vmem:[%s4 + $0x38] sm:$0xf]
        %v394 = vld [vmem:[%s4 + $0x3c] sm:$0xf]
        %v395 = vld [vmem:[%s4 + $0x40] sm:$0xf]
        %v396 = vld [vmem:[%s4 + $0x44] sm:$0xf]
        %v397 = vld [vmem:[%s4 + $0x48] sm:$0xf]
        %v398 = vld [vmem:[%s4 + $0x4c] sm:$0xf]
        %v399 = vld [vmem:[%s4 + $0x50] sm:$0xf]
        %v400 = vld [vmem:[%s4 + $0x54] sm:$0xf]
        %v401 = vld [vmem:[%s4 + $0x58] sm:$0xf]
        %v402 = vld [vmem:[%s4 + $0x5c] sm:$0xf]
        %v403 = vld [vmem:[#allocation2] sm:$0xf]
        %v404 = vld [vmem:[#allocation2 + $0x4] sm:$0xf]
        %v405 = vld [vmem:[#allocation2 + $0x8] sm:$0xf]
        %v406 = vld [vmem:[#allocation2 + $0xc] sm:$0xf]
        %v407 = vld [vmem:[#allocation2 + $0x10] sm:$0xf]
        %v408 = vld [vmem:[#allocation2 + $0x14] sm:$0xf]
        %v409 = vld [vmem:[#allocation2 + $0x18] sm:$0xf]
        %v410 = vld [vmem:[#allocation2 + $0x1c] sm:$0xf]
        %v411 = vld [vmem:[%s6] sm:$0xf]
        %v412 = vld [vmem:[%s6 + $0x4] sm:$0xf]
        %v413 = vld [vmem:[%s6 + $0x8] sm:$0xf]
        %v414 = vld [vmem:[%s6 + $0xc] sm:$0xf]
        %v415 = vld [vmem:[%s6 + $0x10] sm:$0xf]
        %v416 = vld [vmem:[%s6 + $0x14] sm:$0xf]
        %v417 = vld [vmem:[%s6 + $0x18] sm:$0xf]
        %v418 = vld [vmem:[%s6 + $0x1c] sm:$0xf]
        %v419 = vld [vmem:[%s6 + $0x20] sm:$0xf]
        %v420 = vld [vmem:[%s6 + $0x24] sm:$0xf]
        %v421 = vld [vmem:[%s6 + $0x28] sm:$0xf]
        %v422 = vld [vmem:[%s6 + $0x2c] sm:$0xf]
        %v423 = vld [vmem:[%s6 + $0x30] sm:$0xf]
        %v424 = vld [vmem:[%s6 + $0x34] sm:$0xf]
        %v425 = vld [vmem:[%s6 + $0x38] sm:$0xf]
        %v426 = vld [vmem:[%s6 + $0x3c] sm:$0xf]
        %v427 = vld [vmem:[%s6 + $0x40] sm:$0xf]
        %v428 = vld [vmem:[%s6 + $0x44] sm:$0xf]
        %v429 = vld [vmem:[%s6 + $0x48] sm:$0xf]
        %v430 = vld [vmem:[%s6 + $0x4c] sm:$0xf]
        %v431 = vld [vmem:[%s6 + $0x50] sm:$0xf]
        %v432 = vld [vmem:[%s6 + $0x54] sm:$0xf]
        %v433 = vld [vmem:[%s6 + $0x58] sm:$0xf]
        %v434 = vld [vmem:[%s6 + $0x5c] sm:$0xf]
        %v435 = vld [vmem:[%s6 + $0x60] sm:$0xf]
        %v436 = vld [vmem:[%s6 + $0x64] sm:$0xf]
        %v437 = vld [vmem:[%s6 + $0x68] sm:$0xf]
        %v438 = vld [vmem:[%s6 + $0x6c] sm:$0xf]
        %v439 = vld [vmem:[%s6 + $0x70] sm:$0xf]
        %v440 = vld [vmem:[%s6 + $0x74] sm:$0xf]
        %v441 = vld [vmem:[%s6 + $0x78] sm:$0xf]
        %v442 = vld [vmem:[%s6 + $0x7c] sm:$0xf]
        %v443 = vld [vmem:[%s6 + $0x80] sm:$0xf]
        %v444 = vld [vmem:[%s6 + $0x84] sm:$0xf]
        %v445 = vld [vmem:[%s6 + $0x88] sm:$0xf]
        %v446 = vld [vmem:[%s6 + $0x8c] sm:$0xf]
        %v447 = vld [vmem:[%s6 + $0x90] sm:$0xf]
        %v448 = vld [vmem:[%s6 + $0x94] sm:$0xf]
        %v449 = vld [vmem:[%s6 + $0x98] sm:$0xf]
        %v450 = vld [vmem:[%s6 + $0x9c] sm:$0xf]
        %v451 = vld [vmem:[%s6 + $0xa0] sm:$0xf]
        %v452 = vld [vmem:[%s6 + $0xa4] sm:$0xf]
        %v453 = vld [vmem:[%s6 + $0xa8] sm:$0xf]
        %v454 = vld [vmem:[%s6 + $0xac] sm:$0xf]
        %v455 = vld [vmem:[%s6 + $0xb0] sm:$0xf]
        %v456 = vld [vmem:[%s6 + $0xb4] sm:$0xf]
        %v457 = vld [vmem:[%s6 + $0xb8] sm:$0xf]
        %v458 = vld [vmem:[%s6 + $0xbc] sm:$0xf]
        %v459 = vld [vmem:[%s8] sm:$0xff]
        %v460 = vld [vmem:[%s8 + $0x8] sm:$0xf]
        %v461 = vld [vmem:[%s8 + $0xc] sm:$0xff]
        %v462 = vld [vmem:[%s8 + $0x14] sm:$0xf]
        %v463 = vld [vmem:[%s8 + $0x18] sm:$0xff]
        %v464 = vld [vmem:[%s8 + $0x20] sm:$0xf]
        %v465 = vld [vmem:[%s8 + $0x24] sm:$0xff]
        %v466 = vld [vmem:[%s8 + $0x2c] sm:$0xf]
        %v467 = vld [vmem:[%s8 + $0x30] sm:$0xff]
        %v468 = vld [vmem:[%s8 + $0x38] sm:$0xf]
        %v469 = vld [vmem:[%s8 + $0x3c] sm:$0xff]
        %v470 = vld [vmem:[%s8 + $0x44] sm:$0xf]
        %v471 = vld [vmem:[%s8 + $0x48] sm:$0xff]
        %v472 = vld [vmem:[%s8 + $0x50] sm:$0xf]
        %v473 = vld [vmem:[%s8 + $0x54] sm:$0xff]
        %v474 = vld [vmem:[%s8 + $0x5c] sm:$0xf]
        %476 = vset.pattern.permute.xlu0 0
        %477 = vperm.xlu0 %476, %v371
        %v478 = vpop.permute.xlu0 %477
        %481 = vset.pattern.permute.xlu0 0
        %482 = vperm.xlu0 %481, %v372
        %v483 = vpop.permute.xlu0 %482
        %486 = vset.pattern.permute.xlu0 0
        %487 = vperm.xlu0 %486, %v373
        %v488 = vpop.permute.xlu0 %487
        %491 = vset.pattern.permute.xlu0 0
        %492 = vperm.xlu0 %491, %v374
        %v493 = vpop.permute.xlu0 %492
        %496 = vset.pattern.permute.xlu0 0
        %497 = vperm.xlu0 %496, %v375
        %v498 = vpop.permute.xlu0 %497
        %501 = vset.pattern.permute.xlu0 0
        %502 = vperm.xlu0 %501, %v376
        %v503 = vpop.permute.xlu0 %502
        %506 = vset.pattern.permute.xlu0 0
        %507 = vperm.xlu0 %506, %v377
        %v508 = vpop.permute.xlu0 %507
        %511 = vset.pattern.permute.xlu0 0
        %512 = vperm.xlu0 %511, %v378
        %v513 = vpop.permute.xlu0 %512
        %515 = vset.pattern.permute.xlu0 1
        %516 = vperm.xlu0 %515, %v371
        %v517 = vpop.permute.xlu0 %516
        %519 = vset.pattern.permute.xlu0 1
        %520 = vperm.xlu0 %519, %v372
        %v521 = vpop.permute.xlu0 %520
        %523 = vset.pattern.permute.xlu0 1
        %524 = vperm.xlu0 %523, %v373
        %v525 = vpop.permute.xlu0 %524
        %527 = vset.pattern.permute.xlu0 1
        %528 = vperm.xlu0 %527, %v374
        %v529 = vpop.permute.xlu0 %528
        %531 = vset.pattern.permute.xlu0 1
        %532 = vperm.xlu0 %531, %v375
        %v533 = vpop.permute.xlu0 %532
        %535 = vset.pattern.permute.xlu0 1
        %536 = vperm.xlu0 %535, %v376
        %v537 = vpop.permute.xlu0 %536
        %539 = vset.pattern.permute.xlu0 1
        %540 = vperm.xlu0 %539, %v377
        %v541 = vpop.permute.xlu0 %540
        %543 = vset.pattern.permute.xlu0 1
        %544 = vperm.xlu0 %543, %v378
        %v545 = vpop.permute.xlu0 %544
        %547 = vset.pattern.permute.xlu0 2
        %548 = vperm.xlu0 %547, %v371
        %v549 = vpop.permute.xlu0 %548
        %551 = vset.pattern.permute.xlu0 2
        %552 = vperm.xlu0 %551, %v372
        %v553 = vpop.permute.xlu0 %552
        %555 = vset.pattern.permute.xlu0 2
        %556 = vperm.xlu0 %555, %v373
        %v557 = vpop.permute.xlu0 %556
        %559 = vset.pattern.permute.xlu0 2
        %560 = vperm.xlu0 %559, %v374
        %v561 = vpop.permute.xlu0 %560
        %563 = vset.pattern.permute.xlu0 2
        %564 = vperm.xlu0 %563, %v375
        %v565 = vpop.permute.xlu0 %564
        %567 = vset.pattern.permute.xlu0 2
        %568 = vperm.xlu0 %567, %v376
        %v569 = vpop.permute.xlu0 %568
        %571 = vset.pattern.permute.xlu0 2
        %572 = vperm.xlu0 %571, %v377
        %v573 = vpop.permute.xlu0 %572
        %575 = vset.pattern.permute.xlu0 2
        %576 = vperm.xlu0 %575, %v378
        %v577 = vpop.permute.xlu0 %576
        %579 = vset.pattern.permute.xlu0 3
        %580 = vperm.xlu0 %579, %v371
        %v581 = vpop.permute.xlu0 %580
        %583 = vset.pattern.permute.xlu0 3
        %584 = vperm.xlu0 %583, %v372
        %v585 = vpop.permute.xlu0 %584
        %587 = vset.pattern.permute.xlu0 3
        %588 = vperm.xlu0 %587, %v373
        %v589 = vpop.permute.xlu0 %588
        %591 = vset.pattern.permute.xlu0 3
        %592 = vperm.xlu0 %591, %v374
        %v593 = vpop.permute.xlu0 %592
        %595 = vset.pattern.permute.xlu0 3
        %596 = vperm.xlu0 %595, %v375
        %v597 = vpop.permute.xlu0 %596
        %599 = vset.pattern.permute.xlu0 3
        %600 = vperm.xlu0 %599, %v376
        %v601 = vpop.permute.xlu0 %600
        %603 = vset.pattern.permute.xlu0 3
        %604 = vperm.xlu0 %603, %v377
        %v605 = vpop.permute.xlu0 %604
        %607 = vset.pattern.permute.xlu0 3
        %608 = vperm.xlu0 %607, %v378
        %v609 = vpop.permute.xlu0 %608
        %611 = vset.pattern.permute.xlu0 4
        %612 = vperm.xlu0 %611, %v371
        %v613 = vpop.permute.xlu0 %612
        %615 = vset.pattern.permute.xlu0 4
        %616 = vperm.xlu0 %615, %v372
        %v617 = vpop.permute.xlu0 %616
        %619 = vset.pattern.permute.xlu0 4
        %620 = vperm.xlu0 %619, %v373
        %v621 = vpop.permute.xlu0 %620
        %623 = vset.pattern.permute.xlu0 4
        %624 = vperm.xlu0 %623, %v374
        %v625 = vpop.permute.xlu0 %624
        %627 = vset.pattern.permute.xlu0 4
        %628 = vperm.xlu0 %627, %v375
        %v629 = vpop.permute.xlu0 %628
        %631 = vset.pattern.permute.xlu0 4
        %632 = vperm.xlu0 %631, %v376
        %v633 = vpop.permute.xlu0 %632
        %635 = vset.pattern.permute.xlu0 4
        %636 = vperm.xlu0 %635, %v377
        %v637 = vpop.permute.xlu0 %636
        %639 = vset.pattern.permute.xlu0 4
        %640 = vperm.xlu0 %639, %v378
        %v641 = vpop.permute.xlu0 %640
        %643 = vset.pattern.permute.xlu0 5
        %644 = vperm.xlu0 %643, %v371
        %v645 = vpop.permute.xlu0 %644
        %647 = vset.pattern.permute.xlu0 5
        %648 = vperm.xlu0 %647, %v372
        %v649 = vpop.permute.xlu0 %648
        %651 = vset.pattern.permute.xlu0 5
        %652 = vperm.xlu0 %651, %v373
        %v653 = vpop.permute.xlu0 %652
        %655 = vset.pattern.permute.xlu0 5
        %656 = vperm.xlu0 %655, %v374
        %v657 = vpop.permute.xlu0 %656
        %659 = vset.pattern.permute.xlu0 5
        %660 = vperm.xlu0 %659, %v375
        %v661 = vpop.permute.xlu0 %660
        %663 = vset.pattern.permute.xlu0 5
        %664 = vperm.xlu0 %663, %v376
        %v665 = vpop.permute.xlu0 %664
        %667 = vset.pattern.permute.xlu0 5
        %668 = vperm.xlu0 %667, %v377
        %v669 = vpop.permute.xlu0 %668
        %671 = vset.pattern.permute.xlu0 5
        %672 = vperm.xlu0 %671, %v378
        %v673 = vpop.permute.xlu0 %672
        %675 = vset.pattern.permute.xlu0 6
        %676 = vperm.xlu0 %675, %v371
        %v677 = vpop.permute.xlu0 %676
        %679 = vset.pattern.permute.xlu0 6
        %680 = vperm.xlu0 %679, %v372
        %v681 = vpop.permute.xlu0 %680
        %683 = vset.pattern.permute.xlu0 6
        %684 = vperm.xlu0 %683, %v373
        %v685 = vpop.permute.xlu0 %684
        %687 = vset.pattern.permute.xlu0 6
        %688 = vperm.xlu0 %687, %v374
        %v689 = vpop.permute.xlu0 %688
        %691 = vset.pattern.permute.xlu0 6
        %692 = vperm.xlu0 %691, %v375
        %v693 = vpop.permute.xlu0 %692
        %695 = vset.pattern.permute.xlu0 6
        %696 = vperm.xlu0 %695, %v376
        %v697 = vpop.permute.xlu0 %696
        %699 = vset.pattern.permute.xlu0 6
        %700 = vperm.xlu0 %699, %v377
        %v701 = vpop.permute.xlu0 %700
        %703 = vset.pattern.permute.xlu0 6
        %704 = vperm.xlu0 %703, %v378
        %v705 = vpop.permute.xlu0 %704
        %707 = vset.pattern.permute.xlu0 7
        %708 = vperm.xlu0 %707, %v371
        %v709 = vpop.permute.xlu0 %708
        %711 = vset.pattern.permute.xlu0 7
        %712 = vperm.xlu0 %711, %v372
        %v713 = vpop.permute.xlu0 %712
        %715 = vset.pattern.permute.xlu0 7
        %716 = vperm.xlu0 %715, %v373
        %v717 = vpop.permute.xlu0 %716
        %719 = vset.pattern.permute.xlu0 7
        %720 = vperm.xlu0 %719, %v374
        %v721 = vpop.permute.xlu0 %720
        %723 = vset.pattern.permute.xlu0 7
        %724 = vperm.xlu0 %723, %v375
        %v725 = vpop.permute.xlu0 %724
        %727 = vset.pattern.permute.xlu0 7
        %728 = vperm.xlu0 %727, %v376
        %v729 = vpop.permute.xlu0 %728
        %731 = vset.pattern.permute.xlu0 7
        %732 = vperm.xlu0 %731, %v377
        %v733 = vpop.permute.xlu0 %732
        %735 = vset.pattern.permute.xlu0 7
        %736 = vperm.xlu0 %735, %v378
        %v737 = vpop.permute.xlu0 %736
        %739 = vset.pattern.permute.xlu0 8
        %740 = vperm.xlu0 %739, %v371
        %v741 = vpop.permute.xlu0 %740
        %743 = vset.pattern.permute.xlu0 8
        %744 = vperm.xlu0 %743, %v372
        %v745 = vpop.permute.xlu0 %744
        %747 = vset.pattern.permute.xlu0 8
        %748 = vperm.xlu0 %747, %v373
        %v749 = vpop.permute.xlu0 %748
        %751 = vset.pattern.permute.xlu0 8
        %752 = vperm.xlu0 %751, %v374
        %v753 = vpop.permute.xlu0 %752
        %755 = vset.pattern.permute.xlu0 8
        %756 = vperm.xlu0 %755, %v375
        %v757 = vpop.permute.xlu0 %756
        %759 = vset.pattern.permute.xlu0 8
        %760 = vperm.xlu0 %759, %v376
        %v761 = vpop.permute.xlu0 %760
        %763 = vset.pattern.permute.xlu0 8
        %764 = vperm.xlu0 %763, %v377
        %v765 = vpop.permute.xlu0 %764
        %767 = vset.pattern.permute.xlu0 8
        %768 = vperm.xlu0 %767, %v378
        %v769 = vpop.permute.xlu0 %768
        %771 = vset.pattern.permute.xlu0 9
        %772 = vperm.xlu0 %771, %v371
        %v773 = vpop.permute.xlu0 %772
        %775 = vset.pattern.permute.xlu0 9
        %776 = vperm.xlu0 %775, %v372
        %v777 = vpop.permute.xlu0 %776
        %779 = vset.pattern.permute.xlu0 9
        %780 = vperm.xlu0 %779, %v373
        %v781 = vpop.permute.xlu0 %780
        %783 = vset.pattern.permute.xlu0 9
        %784 = vperm.xlu0 %783, %v374
        %v785 = vpop.permute.xlu0 %784
        %787 = vset.pattern.permute.xlu0 9
        %788 = vperm.xlu0 %787, %v375
        %v789 = vpop.permute.xlu0 %788
        %791 = vset.pattern.permute.xlu0 9
        %792 = vperm.xlu0 %791, %v376
        %v793 = vpop.permute.xlu0 %792
        %795 = vset.pattern.permute.xlu0 9
        %796 = vperm.xlu0 %795, %v377
        %v797 = vpop.permute.xlu0 %796
        %799 = vset.pattern.permute.xlu0 9
        %800 = vperm.xlu0 %799, %v378
        %v801 = vpop.permute.xlu0 %800
        %803 = vset.pattern.permute.xlu0 10
        %804 = vperm.xlu0 %803, %v371
        %v805 = vpop.permute.xlu0 %804
        %807 = vset.pattern.permute.xlu0 10
        %808 = vperm.xlu0 %807, %v372
        %v809 = vpop.permute.xlu0 %808
        %811 = vset.pattern.permute.xlu0 10
        %812 = vperm.xlu0 %811, %v373
        %v813 = vpop.permute.xlu0 %812
        %815 = vset.pattern.permute.xlu0 10
        %816 = vperm.xlu0 %815, %v374
        %v817 = vpop.permute.xlu0 %816
        %819 = vset.pattern.permute.xlu0 10
        %820 = vperm.xlu0 %819, %v375
        %v821 = vpop.permute.xlu0 %820
        %823 = vset.pattern.permute.xlu0 10
        %824 = vperm.xlu0 %823, %v376
        %v825 = vpop.permute.xlu0 %824
        %827 = vset.pattern.permute.xlu0 10
        %828 = vperm.xlu0 %827, %v377
        %v829 = vpop.permute.xlu0 %828
        %831 = vset.pattern.permute.xlu0 10
        %832 = vperm.xlu0 %831, %v378
        %v833 = vpop.permute.xlu0 %832
        %835 = vset.pattern.permute.xlu0 11
        %836 = vperm.xlu0 %835, %v371
        %v837 = vpop.permute.xlu0 %836
        %839 = vset.pattern.permute.xlu0 11
        %840 = vperm.xlu0 %839, %v372
        %v841 = vpop.permute.xlu0 %840
        %843 = vset.pattern.permute.xlu0 11
        %844 = vperm.xlu0 %843, %v373
        %v845 = vpop.permute.xlu0 %844
        %847 = vset.pattern.permute.xlu0 11
        %848 = vperm.xlu0 %847, %v374
        %v849 = vpop.permute.xlu0 %848
        %851 = vset.pattern.permute.xlu0 11
        %852 = vperm.xlu0 %851, %v375
        %v853 = vpop.permute.xlu0 %852
        %855 = vset.pattern.permute.xlu0 11
        %856 = vperm.xlu0 %855, %v376
        %v857 = vpop.permute.xlu0 %856
        %859 = vset.pattern.permute.xlu0 11
        %860 = vperm.xlu0 %859, %v377
        %v861 = vpop.permute.xlu0 %860
        %863 = vset.pattern.permute.xlu0 11
        %864 = vperm.xlu0 %863, %v378
        %v865 = vpop.permute.xlu0 %864
        %v867 = vld [vmem:[%s7] sm:$0xff]
        %v868 = vld [vmem:[%s7 + $0x8] sm:$0xff]
        %v869 = vld [vmem:[%s7 + $0x10] sm:$0xff]
        %v870 = vld [vmem:[%s7 + $0x18] sm:$0xff]
        %v871 = vld [vmem:[%s7 + $0x20] sm:$0xff]
        %v872 = vld [vmem:[%s7 + $0x28] sm:$0xff]
        %v873 = vld [vmem:[%s7 + $0x30] sm:$0xff]
        %v874 = vld [vmem:[%s7 + $0x38] sm:$0xff]
        %v875 = vld [vmem:[%s7 + $0x40] sm:$0xff]
        %v876 = vld [vmem:[%s7 + $0x48] sm:$0xff]
        %v877 = vld [vmem:[%s7 + $0x50] sm:$0xff]
        %v878 = vld [vmem:[%s7 + $0x58] sm:$0xff]
        %v879 = vld [vmem:[%s7 + $0x60] sm:$0xff]
        %v880 = vld [vmem:[%s7 + $0x68] sm:$0xff]
        %v881 = vld [vmem:[%s7 + $0x70] sm:$0xff]
        %v882 = vld [vmem:[%s7 + $0x78] sm:$0xff]
        %v883 = vld [vmem:[%s7 + $0x80] sm:$0xff]
        %v884 = vld [vmem:[%s7 + $0x88] sm:$0xff]
        %v885 = vld [vmem:[%s7 + $0x90] sm:$0xff]
        %v886 = vld [vmem:[%s7 + $0x98] sm:$0xff]
        %v887 = vld [vmem:[%s7 + $0xa0] sm:$0xff]
        %v888 = vld [vmem:[%s7 + $0xa8] sm:$0xff]
        %v889 = vld [vmem:[%s7 + $0xb0] sm:$0xff]
        %v890 = vld [vmem:[%s7 + $0xb8] sm:$0xff]
        %v891 = vld [vmem:[%s7 + $0xc0] sm:$0xff]
        %v892 = vld [vmem:[%s7 + $0xc8] sm:$0xff]
        %v893 = vld [vmem:[%s7 + $0xd0] sm:$0xff]
        %v894 = vld [vmem:[%s7 + $0xd8] sm:$0xff]
        %v895 = vld [vmem:[%s7 + $0xe0] sm:$0xff]
        %v896 = vld [vmem:[%s7 + $0xe8] sm:$0xff]
        %v897 = vld [vmem:[%s7 + $0xf0] sm:$0xff]
        %v898 = vld [vmem:[%s7 + $0xf8] sm:$0xff]
        %v899 = vld [vmem:[%s7 + $0x100] sm:$0xff]
        %v900 = vld [vmem:[%s7 + $0x108] sm:$0xff]
        %v901 = vld [vmem:[%s7 + $0x110] sm:$0xff]
        %v902 = vld [vmem:[%s7 + $0x118] sm:$0xff]
        %v903 = vld [vmem:[%s7 + $0x120] sm:$0xff]
        %v904 = vld [vmem:[%s7 + $0x128] sm:$0xff]
        %v905 = vld [vmem:[%s7 + $0x130] sm:$0xff]
        %v906 = vld [vmem:[%s7 + $0x138] sm:$0xff]
        %v907 = vld [vmem:[%s7 + $0x140] sm:$0xff]
        %v908 = vld [vmem:[%s7 + $0x148] sm:$0xff]
        %v909 = vld [vmem:[%s7 + $0x150] sm:$0xff]
        %v910 = vld [vmem:[%s7 + $0x158] sm:$0xff]
        %v911 = vld [vmem:[%s7 + $0x160] sm:$0xff]
        %v912 = vld [vmem:[%s7 + $0x168] sm:$0xff]
        %v913 = vld [vmem:[%s7 + $0x170] sm:$0xff]
        %v914 = vld [vmem:[%s7 + $0x178] sm:$0xff]
        %916 = vset.pattern.permute.xlu0 0
        %917 = vperm.xlu0 %916, %v867
        %v918 = vpop.permute.xlu0 %917
        %921 = vset.pattern.permute.xlu0 0
        %922 = vperm.xlu0 %921, %v868
        %v923 = vpop.permute.xlu0 %922
        %926 = vset.pattern.permute.xlu0 0
        %927 = vperm.xlu0 %926, %v869
        %v928 = vpop.permute.xlu0 %927
        %931 = vset.pattern.permute.xlu0 0
        %932 = vperm.xlu0 %931, %v870
        %v933 = vpop.permute.xlu0 %932
        %936 = vset.pattern.permute.xlu0 0
        %937 = vperm.xlu0 %936, %v871
        %v938 = vpop.permute.xlu0 %937
        %941 = vset.pattern.permute.xlu0 0
        %942 = vperm.xlu0 %941, %v872
        %v943 = vpop.permute.xlu0 %942
        %946 = vset.pattern.permute.xlu0 0
        %947 = vperm.xlu0 %946, %v873
        %v948 = vpop.permute.xlu0 %947
        %951 = vset.pattern.permute.xlu0 0
        %952 = vperm.xlu0 %951, %v874
        %v953 = vpop.permute.xlu0 %952
        %956 = vset.pattern.permute.xlu0 0
        %957 = vperm.xlu0 %956, %v875
        %v958 = vpop.permute.xlu0 %957
        %961 = vset.pattern.permute.xlu0 0
        %962 = vperm.xlu0 %961, %v876
        %v963 = vpop.permute.xlu0 %962
        %966 = vset.pattern.permute.xlu0 0
        %967 = vperm.xlu0 %966, %v877
        %v968 = vpop.permute.xlu0 %967
        %971 = vset.pattern.permute.xlu0 0
        %972 = vperm.xlu0 %971, %v878
        %v973 = vpop.permute.xlu0 %972
        %976 = vset.pattern.permute.xlu0 0
        %977 = vperm.xlu0 %976, %v879
        %v978 = vpop.permute.xlu0 %977
        %981 = vset.pattern.permute.xlu0 0
        %982 = vperm.xlu0 %981, %v880
        %v983 = vpop.permute.xlu0 %982
        %986 = vset.pattern.permute.xlu0 0
        %987 = vperm.xlu0 %986, %v881
        %v988 = vpop.permute.xlu0 %987
        %991 = vset.pattern.permute.xlu0 0
        %992 = vperm.xlu0 %991, %v882
        %v993 = vpop.permute.xlu0 %992
        %996 = vset.pattern.permute.xlu0 0
        %997 = vperm.xlu0 %996, %v883
        %v998 = vpop.permute.xlu0 %997
        %1001 = vset.pattern.permute.xlu0 0
        %1002 = vperm.xlu0 %1001, %v884
        %v1003 = vpop.permute.xlu0 %1002
        %1006 = vset.pattern.permute.xlu0 0
        %1007 = vperm.xlu0 %1006, %v885
        %v1008 = vpop.permute.xlu0 %1007
        %1011 = vset.pattern.permute.xlu0 0
        %1012 = vperm.xlu0 %1011, %v886
        %v1013 = vpop.permute.xlu0 %1012
        %1016 = vset.pattern.permute.xlu0 0
        %1017 = vperm.xlu0 %1016, %v887
        %v1018 = vpop.permute.xlu0 %1017
        %1021 = vset.pattern.permute.xlu0 0
        %1022 = vperm.xlu0 %1021, %v888
        %v1023 = vpop.permute.xlu0 %1022
        %1026 = vset.pattern.permute.xlu0 0
        %1027 = vperm.xlu0 %1026, %v889
        %v1028 = vpop.permute.xlu0 %1027
        %1031 = vset.pattern.permute.xlu0 0
        %1032 = vperm.xlu0 %1031, %v890
        %v1033 = vpop.permute.xlu0 %1032
        %1036 = vset.pattern.permute.xlu0 0
        %1037 = vperm.xlu0 %1036, %v891
        %v1038 = vpop.permute.xlu0 %1037
        %1041 = vset.pattern.permute.xlu0 0
        %1042 = vperm.xlu0 %1041, %v892
        %v1043 = vpop.permute.xlu0 %1042
        %1046 = vset.pattern.permute.xlu0 0
        %1047 = vperm.xlu0 %1046, %v893
        %v1048 = vpop.permute.xlu0 %1047
        %1051 = vset.pattern.permute.xlu0 0
        %1052 = vperm.xlu0 %1051, %v894
        %v1053 = vpop.permute.xlu0 %1052
        %1056 = vset.pattern.permute.xlu0 0
        %1057 = vperm.xlu0 %1056, %v895
        %v1058 = vpop.permute.xlu0 %1057
        %1061 = vset.pattern.permute.xlu0 0
        %1062 = vperm.xlu0 %1061, %v896
        %v1063 = vpop.permute.xlu0 %1062
        %1066 = vset.pattern.permute.xlu0 0
        %1067 = vperm.xlu0 %1066, %v897
        %v1068 = vpop.permute.xlu0 %1067
        %1071 = vset.pattern.permute.xlu0 0
        %1072 = vperm.xlu0 %1071, %v898
        %v1073 = vpop.permute.xlu0 %1072
        %1076 = vset.pattern.permute.xlu0 0
        %1077 = vperm.xlu0 %1076, %v899
        %v1078 = vpop.permute.xlu0 %1077
        %1081 = vset.pattern.permute.xlu0 0
        %1082 = vperm.xlu0 %1081, %v900
        %v1083 = vpop.permute.xlu0 %1082
        %1086 = vset.pattern.permute.xlu0 0
        %1087 = vperm.xlu0 %1086, %v901
        %v1088 = vpop.permute.xlu0 %1087
        %1091 = vset.pattern.permute.xlu0 0
        %1092 = vperm.xlu0 %1091, %v902
        %v1093 = vpop.permute.xlu0 %1092
        %1096 = vset.pattern.permute.xlu0 0
        %1097 = vperm.xlu0 %1096, %v903
        %v1098 = vpop.permute.xlu0 %1097
        %1101 = vset.pattern.permute.xlu0 0
        %1102 = vperm.xlu0 %1101, %v904
        %v1103 = vpop.permute.xlu0 %1102
        %1106 = vset.pattern.permute.xlu0 0
        %1107 = vperm.xlu0 %1106, %v905
        %v1108 = vpop.permute.xlu0 %1107
        %1111 = vset.pattern.permute.xlu0 0
        %1112 = vperm.xlu0 %1111, %v906
        %v1113 = vpop.permute.xlu0 %1112
        %1116 = vset.pattern.permute.xlu0 0
        %1117 = vperm.xlu0 %1116, %v907
        %v1118 = vpop.permute.xlu0 %1117
        %1121 = vset.pattern.permute.xlu0 0
        %1122 = vperm.xlu0 %1121, %v908
        %v1123 = vpop.permute.xlu0 %1122
        %1126 = vset.pattern.permute.xlu0 0
        %1127 = vperm.xlu0 %1126, %v909
        %v1128 = vpop.permute.xlu0 %1127
        %1131 = vset.pattern.permute.xlu0 0
        %1132 = vperm.xlu0 %1131, %v910
        %v1133 = vpop.permute.xlu0 %1132
        %1136 = vset.pattern.permute.xlu0 0
        %1137 = vperm.xlu0 %1136, %v911
        %v1138 = vpop.permute.xlu0 %1137
        %1141 = vset.pattern.permute.xlu0 0
        %1142 = vperm.xlu0 %1141, %v912
        %v1143 = vpop.permute.xlu0 %1142
        %1146 = vset.pattern.permute.xlu0 0
        %1147 = vperm.xlu0 %1146, %v913
        %v1148 = vpop.permute.xlu0 %1147
        %1151 = vset.pattern.permute.xlu0 0
        %1152 = vperm.xlu0 %1151, %v914
        %v1153 = vpop.permute.xlu0 %1152
        %v1155 = vld [vmem:[%s345] sm:$0xff]
        %v1156 = vld [vmem:[%s345 + $0x8] sm:$0xff]
        %v1157 = vld [vmem:[%s345 + $0x10] sm:$0xff]
        %v1158 = vld [vmem:[%s345 + $0x18] sm:$0xff]
        %v1159 = vld [vmem:[%s345 + $0x20] sm:$0xff]
        %v1160 = vld [vmem:[%s345 + $0x28] sm:$0xff]
        %v1161 = vld [vmem:[%s345 + $0x30] sm:$0xff]
        %v1162 = vld [vmem:[%s345 + $0x38] sm:$0xff]
        %v1163 = vld [vmem:[%s345 + $0x40] sm:$0xff]
        %v1164 = vld [vmem:[%s345 + $0x48] sm:$0xff]
        %v1165 = vld [vmem:[%s345 + $0x50] sm:$0xff]
        %v1166 = vld [vmem:[%s345 + $0x58] sm:$0xff]
        %v1167 = vld [vmem:[%s345 + $0x60] sm:$0xff]
        %v1168 = vld [vmem:[%s345 + $0x68] sm:$0xff]
        %v1169 = vld [vmem:[%s345 + $0x70] sm:$0xff]
        %v1170 = vld [vmem:[%s345 + $0x78] sm:$0xff]
        %v1171 = vadd.f32 %v1155, %v347
        %v1172 = vadd.f32 %v1156, %v348
        %v1173 = vadd.f32 %v1157, %v349
        %v1174 = vadd.f32 %v1158, %v350
        %v1175 = vadd.f32 %v1159, %v351
        %v1176 = vadd.f32 %v1160, %v352
        %v1177 = vadd.f32 %v1161, %v353
        %v1178 = vadd.f32 %v1162, %v354
        %v1179 = vadd.f32 %v1163, %v355
        %v1180 = vadd.f32 %v1164, %v356
        %v1181 = vadd.f32 %v1165, %v357
        %v1182 = vadd.f32 %v1166, %v358
        %v1183 = vadd.f32 %v1167, %v359
        %v1184 = vadd.f32 %v1168, %v360
        %v1185 = vadd.f32 %v1169, %v361
        %v1186 = vadd.f32 %v1170, %v362
        %v1187 = vadd.f32 %v1171, %v1173
        %v1188 = vadd.f32 %v1187, %v1175
        %v1189 = vadd.f32 %v1188, %v1177
        %v1190 = vadd.f32 %v1189, %v1179
        %v1191 = vadd.f32 %v1190, %v1181
        %v1192 = vadd.f32 %v1191, %v1183
        %v1193 = vadd.f32 %v1192, %v1185
        %v1194 = vrot.slane %v1193, 4
        %v1195 = vadd.f32 %v1193, %v1194
        %v1196 = vrot.slane %v1195, 2
        %v1197 = vadd.f32 %v1195, %v1196
        %v1198 = vrot.slane %v1197, 1
        %v1199 = vadd.f32 %v1197, %v1198
        %v1200 = vadd.f32 %v1172, %v1174
        %v1201 = vadd.f32 %v1200, %v1176
        %v1202 = vadd.f32 %v1201, %v1178
        %v1203 = vadd.f32 %v1202, %v1180
        %v1204 = vadd.f32 %v1203, %v1182
        %v1205 = vadd.f32 %v1204, %v1184
        %v1206 = vadd.f32 %v1205, %v1186
        %v1207 = vrot.slane %v1206, 4
        %v1208 = vadd.f32 %v1206, %v1207
        %v1209 = vrot.slane %v1208, 2
        %v1210 = vadd.f32 %v1208, %v1209
        %v1211 = vrot.slane %v1210, 1
        %v1212 = vadd.f32 %v1210, %v1211
        %v1213 = vrcp.pop 64.0
        %v1214 = vmul.f32 %v1199, %v1213
        %v1215 = vmul.f32 %v1212, %v1213
        %v1216 = vmul.f32 %v1171, %v1171
        %v1217 = vmul.f32 %v1172, %v1172
        %v1218 = vmul.f32 %v1173, %v1173
        %v1219 = vmul.f32 %v1174, %v1174
        %v1220 = vmul.f32 %v1175, %v1175
        %v1221 = vmul.f32 %v1176, %v1176
        %v1222 = vmul.f32 %v1177, %v1177
        %v1223 = vmul.f32 %v1178, %v1178
        %v1224 = vmul.f32 %v1179, %v1179
        %v1225 = vmul.f32 %v1180, %v1180
        %v1226 = vmul.f32 %v1181, %v1181
        %v1227 = vmul.f32 %v1182, %v1182
        %v1228 = vmul.f32 %v1183, %v1183
        %v1229 = vmul.f32 %v1184, %v1184
        %v1230 = vmul.f32 %v1185, %v1185
        %v1231 = vmul.f32 %v1186, %v1186
        %v1232 = vadd.f32 %v1216, %v1218
        %v1233 = vadd.f32 %v1232, %v1220
        %v1234 = vadd.f32 %v1233, %v1222
        %v1235 = vadd.f32 %v1234, %v1224
        %v1236 = vadd.f32 %v1235, %v1226
        %v1237 = vadd.f32 %v1236, %v1228
        %v1238 = vadd.f32 %v1237, %v1230
        %v1239 = vrot.slane %v1238, 4
        %v1240 = vadd.f32 %v1238, %v1239
        %v1241 = vrot.slane %v1240, 2
        %v1242 = vadd.f32 %v1240, %v1241
        %v1243 = vrot.slane %v1242, 1
        %v1244 = vadd.f32 %v1242, %v1243
        %v1245 = vadd.f32 %v1217, %v1219
        %v1246 = vadd.f32 %v1245, %v1221
        %v1247 = vadd.f32 %v1246, %v1223
        %v1248 = vadd.f32 %v1247, %v1225
        %v1249 = vadd.f32 %v1248, %v1227
        %v1250 = vadd.f32 %v1249, %v1229
        %v1251 = vadd.f32 %v1250, %v1231
        %v1252 = vrot.slane %v1251, 4
        %v1253 = vadd.f32 %v1251, %v1252
        %v1254 = vrot.slane %v1253, 2
        %v1255 = vadd.f32 %v1253, %v1254
        %v1256 = vrot.slane %v1255, 1
        %v1257 = vadd.f32 %v1255, %v1256
        %v1258 = vmul.f32 %v1244, %v1213
        %v1259 = vmul.f32 %v1257, %v1213
        %v1260 = vsub.f32 %v1171, %v1214
        %v1261 = vsub.f32 %v1172, %v1215
        %v1262 = vsub.f32 %v1173, %v1214
        %v1263 = vsub.f32 %v1174, %v1215
        %v1264 = vsub.f32 %v1175, %v1214
        %v1265 = vsub.f32 %v1176, %v1215
        %v1266 = vsub.f32 %v1177, %v1214
        %v1267 = vsub.f32 %v1178, %v1215
        %v1268 = vsub.f32 %v1179, %v1214
        %v1269 = vsub.f32 %v1180, %v1215
        %v1270 = vsub.f32 %v1181, %v1214
        %v1271 = vsub.f32 %v1182, %v1215
        %v1272 = vsub.f32 %v1183, %v1214
        %v1273 = vsub.f32 %v1184, %v1215
        %v1274 = vsub.f32 %v1185, %v1214
        %v1275 = vsub.f32 %v1186, %v1215
        %v1276 = vmul.f32 %v1214, %v1214
        %v1277 = vmul.f32 %v1215, %v1215
        %v1278 = vsub.f32 %v1258, %v1276
        %v1279 = vsub.f32 %v1259, %v1277
        %v1280 = vadd.f32 %v1278, 1e-06
        %v1281 = vadd.f32 %v1279, 1e-06
        %v1282 = vrsqrt.pop %v1280
        %v1283 = vrsqrt.pop %v1281
        %v1284 = vmul.f32 %v1260, %v1282
        %v1285 = vmul.f32 %v1261, %v1283
        %v1286 = vmul.f32 %v1262, %v1282
        %v1287 = vmul.f32 %v1263, %v1283
        %v1288 = vmul.f32 %v1264, %v1282
        %v1289 = vmul.f32 %v1265, %v1283
        %v1290 = vmul.f32 %v1266, %v1282
        %v1291 = vmul.f32 %v1267, %v1283
        %v1292 = vmul.f32 %v1268, %v1282
        %v1293 = vmul.f32 %v1269, %v1283
        %v1294 = vmul.f32 %v1270, %v1282
        %v1295 = vmul.f32 %v1271, %v1283
        %v1296 = vmul.f32 %v1272, %v1282
        %v1297 = vmul.f32 %v1273, %v1283
        %v1298 = vmul.f32 %v1274, %v1282
        %v1299 = vmul.f32 %v1275, %v1283
        %v1300 = vmul.f32 %v1284, %v478
        %v1301 = vmul.f32 %v1285, %v478
        %v1302 = vmul.f32 %v1286, %v483
        %v1303 = vmul.f32 %v1287, %v483
        %v1304 = vmul.f32 %v1288, %v488
        %v1305 = vmul.f32 %v1289, %v488
        %v1306 = vmul.f32 %v1290, %v493
        %v1307 = vmul.f32 %v1291, %v493
        %v1308 = vmul.f32 %v1292, %v498
        %v1309 = vmul.f32 %v1293, %v498
        %v1310 = vmul.f32 %v1294, %v503
        %v1311 = vmul.f32 %v1295, %v503
        %v1312 = vmul.f32 %v1296, %v508
        %v1313 = vmul.f32 %v1297, %v508
        %v1314 = vmul.f32 %v1298, %v513
        %v1315 = vmul.f32 %v1299, %v513
        %v1316 = vadd.f32 %v1300, %v517
        %v1317 = vadd.f32 %v1301, %v517
        %v1318 = vadd.f32 %v1302, %v521
        %v1319 = vadd.f32 %v1303, %v521
        %v1320 = vadd.f32 %v1304, %v525
        %v1321 = vadd.f32 %v1305, %v525
        %v1322 = vadd.f32 %v1306, %v529
        %v1323 = vadd.f32 %v1307, %v529
        %v1324 = vadd.f32 %v1308, %v533
        %v1325 = vadd.f32 %v1309, %v533
        %v1326 = vadd.f32 %v1310, %v537
        %v1327 = vadd.f32 %v1311, %v537
        %v1328 = vadd.f32 %v1312, %v541
        %v1329 = vadd.f32 %v1313, %v541
        %v1330 = vadd.f32 %v1314, %v545
        %v1331 = vadd.f32 %v1315, %v545
        %v1332 = vpack.c.bf16 %v1318, %v1316
        %v1333 = vpack.c.bf16 %v1319, %v1317
        %v1334 = vpack.c.bf16 %v1322, %v1320
        %v1335 = vpack.c.bf16 %v1323, %v1321
        %v1336 = vpack.c.bf16 %v1326, %v1324
        %v1337 = vpack.c.bf16 %v1327, %v1325
        %v1338 = vpack.c.bf16 %v1330, %v1328
        %v1339 = vpack.c.bf16 %v1331, %v1329
        %v1364 = vunpack.c.l.b16 %v379
        %v1365 = vunpack.c.l.b16 %v380
        %v1366 = vunpack.c.l.b16 %v381
        %v1367 = vunpack.c.l.b16 %v382
        %v1368 = vunpack.c.l.b16 %v383
        %v1369 = vunpack.c.l.b16 %v384
        %v1370 = vunpack.c.l.b16 %v385
        %v1371 = vunpack.c.l.b16 %v386
        %v1372 = vunpack.c.l.b16 %v387
        %v1373 = vunpack.c.l.b16 %v388
        %v1374 = vunpack.c.l.b16 %v389
        %v1375 = vunpack.c.l.b16 %v390
        %v1376 = vunpack.c.l.b16 %v391
        %v1377 = vunpack.c.l.b16 %v392
        %v1378 = vunpack.c.l.b16 %v393
        %v1379 = vunpack.c.l.b16 %v394
        %v1380 = vunpack.c.l.b16 %v395
        %v1381 = vunpack.c.l.b16 %v396
        %v1382 = vunpack.c.l.b16 %v397
        %v1383 = vunpack.c.l.b16 %v398
        %v1384 = vunpack.c.l.b16 %v399
        %v1385 = vunpack.c.l.b16 %v400
        %v1386 = vunpack.c.l.b16 %v401
        %v1387 = vunpack.c.l.b16 %v402
        %v1388 = vpack.c.b16 %v1365, %v1364
        %v1389 = vpack.c.b16 %v1367, %v1366
        %v1390 = vpack.c.b16 %v1369, %v1368
        %v1391 = vpack.c.b16 %v1371, %v1370
        %v1392 = vpack.c.b16 %v1373, %v1372
        %v1393 = vpack.c.b16 %v1375, %v1374
        %v1394 = vpack.c.b16 %v1377, %v1376
        %v1395 = vpack.c.b16 %v1379, %v1378
        %v1396 = vpack.c.b16 %v1381, %v1380
        %v1397 = vpack.c.b16 %v1383, %v1382
        %v1398 = vpack.c.b16 %v1385, %v1384
        %v1399 = vpack.c.b16 %v1387, %v1386
        %vm1400 = vcmask 523264
        %v1402 = vsel %vm1400, %v1388, 0
        %v1405 = vsel %vm1400, %v1389, 0
        %v1408 = vsel %vm1400, %v1390, 0
        %v1411 = vsel %vm1400, %v1391, 0
        %v1414 = vsel %vm1400, %v1392, 0
        %v1417 = vsel %vm1400, %v1393, 0
        %v1420 = vsel %vm1400, %v1394, 0
        %v1423 = vsel %vm1400, %v1395, 0
        %v1426 = vsel %vm1400, %v1396, 0
        %v1429 = vsel %vm1400, %v1397, 0
        %v1432 = vsel %vm1400, %v1398, 0
        %v1435 = vsel %vm1400, %v1399, 0
        %1437 = vmatprep.subr.bf16.mxu0 %v1333
        %1438 = vmatpush1.bf16.msra.mxu0 %v1332
        %1439 = vmatprep.subr.bf16.mxu0 %v1335
        %1440 = vmatpush1.bf16.msra.mxu0 %v1334
        %1441 = vmatprep.subr.bf16.mxu0 %v1337
        %1442 = vmatpush1.bf16.msra.mxu0 %v1336
        %1443 = vmatprep.subr.bf16.mxu0 %v1339
        %1444 = vmatpush1.bf16.msra.mxu0 %v1338
        %1445 = vmatprep.subr.bf16.mxu0 0
        %1446 = vmatpush1.bf16.msra.mxu0 0
        %1447 = vmatprep.subr.bf16.mxu0 0
        %1448 = vmatpush1.bf16.msra.mxu0 0
        %1449 = vmatprep.subr.bf16.mxu0 0
        %1450 = vmatpush1.bf16.msra.mxu0 0
        %1451 = vmatprep.subr.bf16.mxu0 0
        %1452 = vmatpush1.bf16.msra.mxu0 0
        %1453 = vmatprep.subr.bf16.mxu0 0
        %1454 = vmatpush1.bf16.msra.mxu0 0
        %1455 = vmatprep.subr.bf16.mxu0 0
        %1456 = vmatpush1.bf16.msra.mxu0 0
        %1457 = vmatprep.subr.bf16.mxu0 0
        %1458 = vmatpush1.bf16.msra.mxu0 0
        %1459 = vmatprep.subr.bf16.mxu0 0
        %1460 = vmatpush1.bf16.msra.mxu0 0
        %1461 = vmatprep.subr.bf16.mxu0 0
        %1462 = vmatpush1.bf16.msra.mxu0 0
        %1463 = vmatprep.subr.bf16.mxu0 0
        %1464 = vmatpush1.bf16.msra.mxu0 0
        %1465 = vmatprep.subr.bf16.mxu0 0
        %1466 = vmatpush1.bf16.msra.mxu0 0
        %1467 = vmatprep.subr.bf16.mxu0 0
        %1468 = vmatpush1.bf16.msra.mxu0 0
        %1469 = vmatprep.mubr.bf16.mxu0 0
        %1470 = vmatmul.mubr.bf16.gmra.mrb[0].mxu0 %v1402
        %v1471 = vpop.f32.mrb[0].mxu0
        %v1472 = vadd.f32 0.0, %v1471
        %v1473 = vpop.f32.mrb[0].mxu0
        %v1474 = vadd.f32 0.0, %v1473
        %v1475 = vpop.f32.mrb[0].mxu0
        %v1476 = vadd.f32 0.0, %v1475
        %v1477 = vpop.f32.mrb[0].mxu0
        %v1478 = vadd.f32 0.0, %v1477
        %1479 = vmatprep.mubr.bf16.mxu0 0
        %1480 = vmatmul.mubr.bf16.gmra.mrb[0].mxu0 %v1405
        %v1481 = vpop.f32.mrb[0].mxu0
        %v1482 = vadd.f32 0.0, %v1481
        %v1483 = vpop.f32.mrb[0].mxu0
        %v1484 = vadd.f32 0.0, %v1483
        %v1485 = vpop.f32.mrb[0].mxu0
        %v1486 = vadd.f32 0.0, %v1485
        %v1487 = vpop.f32.mrb[0].mxu0
        %v1488 = vadd.f32 0.0, %v1487
        %1489 = vmatprep.mubr.bf16.mxu0 0
        %1490 = vmatmul.mubr.bf16.gmra.mrb[0].mxu0 %v1408
        %v1491 = vpop.f32.mrb[0].mxu0
        %v1492 = vadd.f32 0.0, %v1491
        %v1493 = vpop.f32.mrb[0].mxu0
        %v1494 = vadd.f32 0.0, %v1493
        %v1495 = vpop.f32.mrb[0].mxu0
        %v1496 = vadd.f32 0.0, %v1495
        %v1497 = vpop.f32.mrb[0].mxu0
        %v1498 = vadd.f32 0.0, %v1497
        %1499 = vmatprep.mubr.bf16.mxu0 0
        %1500 = vmatmul.mubr.bf16.gmra.mrb[0].mxu0 %v1411
        %v1501 = vpop.f32.mrb[0].mxu0
        %v1502 = vadd.f32 0.0, %v1501
        %v1503 = vpop.f32.mrb[0].mxu0
        %v1504 = vadd.f32 0.0, %v1503
        %v1505 = vpop.f32.mrb[0].mxu0
        %v1506 = vadd.f32 0.0, %v1505
        %v1507 = vpop.f32.mrb[0].mxu0
        %v1508 = vadd.f32 0.0, %v1507
        %1509 = vmatprep.mubr.bf16.mxu0 0
        %1510 = vmatmul.mubr.bf16.gmra.mrb[0].mxu0 %v1414
        %v1511 = vpop.f32.mrb[0].mxu0
        %v1512 = vadd.f32 0.0, %v1511
        %v1513 = vpop.f32.mrb[0].mxu0
        %v1514 = vadd.f32 0.0, %v1513
        %v1515 = vpop.f32.mrb[0].mxu0
        %v1516 = vadd.f32 0.0, %v1515
        %v1517 = vpop.f32.mrb[0].mxu0
        %v1518 = vadd.f32 0.0, %v1517
        %1519 = vmatprep.mubr.bf16.mxu0 0
        %1520 = vmatmul.mubr.bf16.gmra.mrb[0].mxu0 %v1417
        %v1521 = vpop.f32.mrb[0].mxu0
        %v1522 = vadd.f32 0.0, %v1521
        %v1523 = vpop.f32.mrb[0].mxu0
        %v1524 = vadd.f32 0.0, %v1523
        %v1525 = vpop.f32.mrb[0].mxu0
        %v1526 = vadd.f32 0.0, %v1525
        %v1527 = vpop.f32.mrb[0].mxu0
        %v1528 = vadd.f32 0.0, %v1527
        %1529 = vmatprep.mubr.bf16.mxu0 0
        %1530 = vmatmul.mubr.bf16.gmra.mrb[0].mxu0 %v1420
        %v1531 = vpop.f32.mrb[0].mxu0
        %v1532 = vadd.f32 0.0, %v1531
        %v1533 = vpop.f32.mrb[0].mxu0
        %v1534 = vadd.f32 0.0, %v1533
        %v1535 = vpop.f32.mrb[0].mxu0
        %v1536 = vadd.f32 0.0, %v1535
        %v1537 = vpop.f32.mrb[0].mxu0
        %v1538 = vadd.f32 0.0, %v1537
        %1539 = vmatprep.mubr.bf16.mxu0 0
        %1540 = vmatmul.mubr.bf16.gmra.mrb[0].mxu0 %v1423
        %v1541 = vpop.f32.mrb[0].mxu0
        %v1542 = vadd.f32 0.0, %v1541
        %v1543 = vpop.f32.mrb[0].mxu0
        %v1544 = vadd.f32 0.0, %v1543
        %v1545 = vpop.f32.mrb[0].mxu0
        %v1546 = vadd.f32 0.0, %v1545
        %v1547 = vpop.f32.mrb[0].mxu0
        %v1548 = vadd.f32 0.0, %v1547
        %1549 = vmatprep.mubr.bf16.mxu0 0
        %1550 = vmatmul.mubr.bf16.gmra.mrb[0].mxu0 %v1426
        %v1551 = vpop.f32.mrb[0].mxu0
        %v1552 = vadd.f32 0.0, %v1551
        %v1553 = vpop.f32.mrb[0].mxu0
        %v1554 = vadd.f32 0.0, %v1553
        %v1555 = vpop.f32.mrb[0].mxu0
        %v1556 = vadd.f32 0.0, %v1555
        %v1557 = vpop.f32.mrb[0].mxu0
        %v1558 = vadd.f32 0.0, %v1557
        %1559 = vmatprep.mubr.bf16.mxu0 0
        %1560 = vmatmul.mubr.bf16.gmra.mrb[0].mxu0 %v1429
        %v1561 = vpop.f32.mrb[0].mxu0
        %v1562 = vadd.f32 0.0, %v1561
        %v1563 = vpop.f32.mrb[0].mxu0
        %v1564 = vadd.f32 0.0, %v1563
        %v1565 = vpop.f32.mrb[0].mxu0
        %v1566 = vadd.f32 0.0, %v1565
        %v1567 = vpop.f32.mrb[0].mxu0
        %v1568 = vadd.f32 0.0, %v1567
        %1569 = vmatprep.mubr.bf16.mxu0 0
        %1570 = vmatmul.mubr.bf16.gmra.mrb[0].mxu0 %v1432
        %v1571 = vpop.f32.mrb[0].mxu0
        %v1572 = vadd.f32 0.0, %v1571
        %v1573 = vpop.f32.mrb[0].mxu0
        %v1574 = vadd.f32 0.0, %v1573
        %v1575 = vpop.f32.mrb[0].mxu0
        %v1576 = vadd.f32 0.0, %v1575
        %v1577 = vpop.f32.mrb[0].mxu0
        %v1578 = vadd.f32 0.0, %v1577
        %1579 = vmatprep.mubr.bf16.mxu0 0
        %1580 = vmatmul.mubr.bf16.gmra.mrb[0].mxu0 %v1435
        %v1581 = vpop.f32.mrb[0].mxu0
        %v1582 = vadd.f32 0.0, %v1581
        %v1583 = vpop.f32.mrb[0].mxu0
        %v1584 = vadd.f32 0.0, %v1583
        %v1585 = vpop.f32.mrb[0].mxu0
        %v1586 = vadd.f32 0.0, %v1585
        %v1587 = vpop.f32.mrb[0].mxu0
        %v1588 = vadd.f32 0.0, %v1587
        %1589 = vdwg.mxu0
        %v1590 = vadd.f32 %v1472, %v549
        %v1591 = vadd.f32 %v1474, %v549
        %v1592 = vadd.f32 %v1476, %v553
        %v1593 = vadd.f32 %v1478, %v553
        %v1594 = vadd.f32 %v1482, %v557
        %v1595 = vadd.f32 %v1484, %v557
        %v1596 = vadd.f32 %v1486, %v561
        %v1597 = vadd.f32 %v1488, %v561
        %v1598 = vadd.f32 %v1492, %v565
        %v1599 = vadd.f32 %v1494, %v565
        %v1600 = vadd.f32 %v1496, %v569
        %v1601 = vadd.f32 %v1498, %v569
        %v1602 = vadd.f32 %v1502, %v573
        %v1603 = vadd.f32 %v1504, %v573
        %v1604 = vadd.f32 %v1506, %v577
        %v1605 = vadd.f32 %v1508, %v577
        %v1606 = vadd.f32 %v1512, %v581
        %v1607 = vadd.f32 %v1514, %v581
        %v1608 = vadd.f32 %v1516, %v585
        %v1609 = vadd.f32 %v1518, %v585
        %v1610 = vadd.f32 %v1522, %v589
        %v1611 = vadd.f32 %v1524, %v589
        %v1612 = vadd.f32 %v1526, %v593
        %v1613 = vadd.f32 %v1528, %v593
        %v1614 = vadd.f32 %v1532, %v597
        %v1615 = vadd.f32 %v1534, %v597
        %v1616 = vadd.f32 %v1536, %v601
        %v1617 = vadd.f32 %v1538, %v601
        %v1618 = vadd.f32 %v1542, %v605
        %v1619 = vadd.f32 %v1544, %v605
        %v1620 = vadd.f32 %v1546, %v609
        %v1621 = vadd.f32 %v1548, %v609
        %v1622 = vadd.f32 %v1552, %v613
        %v1623 = vadd.f32 %v1554, %v613
        %v1624 = vadd.f32 %v1556, %v617
        %v1625 = vadd.f32 %v1558, %v617
        %v1626 = vadd.f32 %v1562, %v621
        %v1627 = vadd.f32 %v1564, %v621
        %v1628 = vadd.f32 %v1566, %v625
        %v1629 = vadd.f32 %v1568, %v625
        %v1630 = vadd.f32 %v1572, %v629
        %v1631 = vadd.f32 %v1574, %v629
        %v1632 = vadd.f32 %v1576, %v633
        %v1633 = vadd.f32 %v1578, %v633
        %v1634 = vadd.f32 %v1582, %v637
        %v1635 = vadd.f32 %v1584, %v637
        %v1636 = vadd.f32 %v1586, %v641
        %v1637 = vadd.f32 %v1588, %v641
        %v1638 = vmul.f32 %v1590, %v1590
        %v1639 = vmul.f32 %v1591, %v1591
        %v1640 = vmul.f32 %v1592, %v1592
        %v1641 = vmul.f32 %v1593, %v1593
        %v1642 = vmul.f32 %v1594, %v1594
        %v1643 = vmul.f32 %v1595, %v1595
        %v1644 = vmul.f32 %v1596, %v1596
        %v1645 = vmul.f32 %v1597, %v1597
        %v1646 = vmul.f32 %v1598, %v1598
        %v1647 = vmul.f32 %v1599, %v1599
        %v1648 = vmul.f32 %v1600, %v1600
        %v1649 = vmul.f32 %v1601, %v1601
        %v1650 = vmul.f32 %v1602, %v1602
        %v1651 = vmul.f32 %v1603, %v1603
        %v1652 = vmul.f32 %v1604, %v1604
        %v1653 = vmul.f32 %v1605, %v1605
        %v1654 = vadd.f32 %v1638, %v1639
        %1655 = vadd.xlane.f32.xlu0 %v1654
        %v1656 = vpop.xlane.xlu0 %1655
        %v1657 = vadd.f32 %v1640, %v1641
        %1658 = vadd.xlane.f32.xlu0 %v1657
        %v1659 = vpop.xlane.xlu0 %1658
        %v1660 = vadd.f32 %v1642, %v1643
        %1661 = vadd.xlane.f32.xlu0 %v1660
        %v1662 = vpop.xlane.xlu0 %1661
        %v1663 = vadd.f32 %v1644, %v1645
        %1664 = vadd.xlane.f32.xlu0 %v1663
        %v1665 = vpop.xlane.xlu0 %1664
        %v1666 = vadd.f32 %v1646, %v1647
        %1667 = vadd.xlane.f32.xlu0 %v1666
        %v1668 = vpop.xlane.xlu0 %1667
        %v1669 = vadd.f32 %v1648, %v1649
        %1670 = vadd.xlane.f32.xlu0 %v1669
        %v1671 = vpop.xlane.xlu0 %1670
        %v1672 = vadd.f32 %v1650, %v1651
        %1673 = vadd.xlane.f32.xlu0 %v1672
        %v1674 = vpop.xlane.xlu0 %1673
        %v1675 = vadd.f32 %v1652, %v1653
        %1676 = vadd.xlane.f32.xlu0 %v1675
        %v1677 = vpop.xlane.xlu0 %1676
        %v1678 = vmax.f32 %v1656, 1e-24
        %v1679 = vmax.f32 %v1659, 1e-24
        %v1680 = vmax.f32 %v1662, 1e-24
        %v1681 = vmax.f32 %v1665, 1e-24
        %v1682 = vmax.f32 %v1668, 1e-24
        %v1683 = vmax.f32 %v1671, 1e-24
        %v1684 = vmax.f32 %v1674, 1e-24
        %v1685 = vmax.f32 %v1677, 1e-24
        %v1686 = vrsqrt.pop %v1678
        %v1687 = vrsqrt.pop %v1679
        %v1688 = vrsqrt.pop %v1680
        %v1689 = vrsqrt.pop %v1681
        %v1690 = vrsqrt.pop %v1682
        %v1691 = vrsqrt.pop %v1683
        %v1692 = vrsqrt.pop %v1684
        %v1693 = vrsqrt.pop %v1685
        %v1694 = vmul.f32 %v1590, %v1686
        %v1695 = vmul.f32 %v1591, %v1686
        %v1696 = vmul.f32 %v1592, %v1687
        %v1697 = vmul.f32 %v1593, %v1687
        %v1698 = vmul.f32 %v1594, %v1688
        %v1699 = vmul.f32 %v1595, %v1688
        %v1700 = vmul.f32 %v1596, %v1689
        %v1701 = vmul.f32 %v1597, %v1689
        %v1702 = vmul.f32 %v1598, %v1690
        %v1703 = vmul.f32 %v1599, %v1690
        %v1704 = vmul.f32 %v1600, %v1691
        %v1705 = vmul.f32 %v1601, %v1691
        %v1706 = vmul.f32 %v1602, %v1692
        %v1707 = vmul.f32 %v1603, %v1692
        %v1708 = vmul.f32 %v1604, %v1693
        %v1709 = vmul.f32 %v1605, %v1693
        %v1710 = vmul.f32 %v1606, %v1606
        %v1711 = vmul.f32 %v1607, %v1607
        %v1712 = vmul.f32 %v1608, %v1608
        %v1713 = vmul.f32 %v1609, %v1609
        %v1714 = vmul.f32 %v1610, %v1610
        %v1715 = vmul.f32 %v1611, %v1611
        %v1716 = vmul.f32 %v1612, %v1612
        %v1717 = vmul.f32 %v1613, %v1613
        %v1718 = vmul.f32 %v1614, %v1614
        %v1719 = vmul.f32 %v1615, %v1615
        %v1720 = vmul.f32 %v1616, %v1616
        %v1721 = vmul.f32 %v1617, %v1617
        %v1722 = vmul.f32 %v1618, %v1618
        %v1723 = vmul.f32 %v1619, %v1619
        %v1724 = vmul.f32 %v1620, %v1620
        %v1725 = vmul.f32 %v1621, %v1621
        %v1726 = vadd.f32 %v1710, %v1711
        %1727 = vadd.xlane.f32.xlu0 %v1726
        %v1728 = vpop.xlane.xlu0 %1727
        %v1729 = vadd.f32 %v1712, %v1713
        %1730 = vadd.xlane.f32.xlu0 %v1729
        %v1731 = vpop.xlane.xlu0 %1730
        %v1732 = vadd.f32 %v1714, %v1715
        %1733 = vadd.xlane.f32.xlu0 %v1732
        %v1734 = vpop.xlane.xlu0 %1733
        %v1735 = vadd.f32 %v1716, %v1717
        %1736 = vadd.xlane.f32.xlu0 %v1735
        %v1737 = vpop.xlane.xlu0 %1736
        %v1738 = vadd.f32 %v1718, %v1719
        %1739 = vadd.xlane.f32.xlu0 %v1738
        %v1740 = vpop.xlane.xlu0 %1739
        %v1741 = vadd.f32 %v1720, %v1721
        %1742 = vadd.xlane.f32.xlu0 %v1741
        %v1743 = vpop.xlane.xlu0 %1742
        %v1744 = vadd.f32 %v1722, %v1723
        %1745 = vadd.xlane.f32.xlu0 %v1744
        %v1746 = vpop.xlane.xlu0 %1745
        %v1747 = vadd.f32 %v1724, %v1725
        %1748 = vadd.xlane.f32.xlu0 %v1747
        %v1749 = vpop.xlane.xlu0 %1748
        %v1750 = vmax.f32 %v1728, 1e-24
        %v1751 = vmax.f32 %v1731, 1e-24
        %v1752 = vmax.f32 %v1734, 1e-24
        %v1753 = vmax.f32 %v1737, 1e-24
        %v1754 = vmax.f32 %v1740, 1e-24
        %v1755 = vmax.f32 %v1743, 1e-24
        %v1756 = vmax.f32 %v1746, 1e-24
        %v1757 = vmax.f32 %v1749, 1e-24
        %v1758 = vrsqrt.pop %v1750
        %v1759 = vrsqrt.pop %v1751
        %v1760 = vrsqrt.pop %v1752
        %v1761 = vrsqrt.pop %v1753
        %v1762 = vrsqrt.pop %v1754
        %v1763 = vrsqrt.pop %v1755
        %v1764 = vrsqrt.pop %v1756
        %v1765 = vrsqrt.pop %v1757
        %v1766 = vmul.f32 %v1606, %v1758
        %v1767 = vmul.f32 %v1607, %v1758
        %v1768 = vmul.f32 %v1608, %v1759
        %v1769 = vmul.f32 %v1609, %v1759
        %v1770 = vmul.f32 %v1610, %v1760
        %v1771 = vmul.f32 %v1611, %v1760
        %v1772 = vmul.f32 %v1612, %v1761
        %v1773 = vmul.f32 %v1613, %v1761
        %v1774 = vmul.f32 %v1614, %v1762
        %v1775 = vmul.f32 %v1615, %v1762
        %v1776 = vmul.f32 %v1616, %v1763
        %v1777 = vmul.f32 %v1617, %v1763
        %v1778 = vmul.f32 %v1618, %v1764
        %v1779 = vmul.f32 %v1619, %v1764
        %v1780 = vmul.f32 %v1620, %v1765
        %v1781 = vmul.f32 %v1621, %v1765
        %v1782 = vpack.c.bf16 %v1696, %v1694
        %v1783 = vpack.c.bf16 %v1697, %v1695
        %v1784 = vpack.c.bf16 %v1700, %v1698
        %v1785 = vpack.c.bf16 %v1701, %v1699
        %v1786 = vpack.c.bf16 %v1704, %v1702
        %v1787 = vpack.c.bf16 %v1705, %v1703
        %v1788 = vpack.c.bf16 %v1708, %v1706
        %v1789 = vpack.c.bf16 %v1709, %v1707
        %v1790 = vpack.c.bf16 %v1768, %v1766
        %v1791 = vpack.c.bf16 %v1769, %v1767
        %v1792 = vpack.c.bf16 %v1772, %v1770
        %v1793 = vpack.c.bf16 %v1773, %v1771
        %v1794 = vpack.c.bf16 %v1776, %v1774
        %v1795 = vpack.c.bf16 %v1777, %v1775
        %v1796 = vpack.c.bf16 %v1780, %v1778
        %v1797 = vpack.c.bf16 %v1781, %v1779
        %1798 = vmatprep.subr.bf16.mxu0 %v1791
        %1799 = vmatpush1.bf16.xpose.msra.mxu0 %v1790
        %1800 = vmatprep.subr.bf16.mxu0 %v1793
        %1801 = vmatpush1.bf16.xpose.msra.mxu0 %v1792
        %1802 = vmatprep.subr.bf16.mxu0 %v1795
        %1803 = vmatpush1.bf16.xpose.msra.mxu0 %v1794
        %1804 = vmatprep.subr.bf16.mxu0 %v1797
        %1805 = vmatpush1.bf16.xpose.msra.mxu0 %v1796
        %1806 = vmatprep.subr.bf16.mxu0 0
        %1807 = vmatpush1.bf16.xpose.msra.mxu0 0
        %1808 = vmatprep.subr.bf16.mxu0 0
        %1809 = vmatpush1.bf16.xpose.msra.mxu0 0
        %1810 = vmatprep.subr.bf16.mxu0 0
        %1811 = vmatpush1.bf16.xpose.msra.mxu0 0
        %1812 = vmatprep.subr.bf16.mxu0 0
        %1813 = vmatpush1.bf16.xpose.msra.mxu0 0
        %1814 = vmatprep.subr.bf16.mxu0 0
        %1815 = vmatpush1.bf16.xpose.msra.mxu0 0
        %1816 = vmatprep.subr.bf16.mxu0 0
        %1817 = vmatpush1.bf16.xpose.msra.mxu0 0
        %1818 = vmatprep.subr.bf16.mxu0 0
        %1819 = vmatpush1.bf16.xpose.msra.mxu0 0
        %1820 = vmatprep.subr.bf16.mxu0 0
        %1821 = vmatpush1.bf16.xpose.msra.mxu0 0
        %1822 = vmatprep.subr.bf16.mxu0 0
        %1823 = vmatpush1.bf16.xpose.msra.mxu0 0
        %1824 = vmatprep.subr.bf16.mxu0 0
        %1825 = vmatpush1.bf16.xpose.msra.mxu0 0
        %1826 = vmatprep.subr.bf16.mxu0 0
        %1827 = vmatpush1.bf16.xpose.msra.mxu0 0
        %1828 = vmatprep.subr.bf16.mxu0 0
        %1829 = vmatpush1.bf16.xpose.msra.mxu0 0
        %1830 = vmatprep.mubr.bf16.mxu0 %v1783
        %1831 = vmatmul.mubr.bf16.gmra.mrb[0].mxu0 %v1782
        %v1832 = vpop.f32.mrb[0].mxu0
        %v1833 = vadd.f32 0.0, %v1832
        %v1834 = vpop.f32.mrb[0].mxu0
        %v1835 = vpop.f32.mrb[0].mxu0
        %v1836 = vadd.f32 0.0, %v1835
        %v1837 = vpop.f32.mrb[0].mxu0
        %1838 = vmatprep.mubr.bf16.mxu0 %v1785
        %1839 = vmatmul.mubr.bf16.gmra.mrb[0].mxu0 %v1784
        %v1840 = vpop.f32.mrb[0].mxu0
        %v1841 = vadd.f32 0.0, %v1840
        %v1842 = vpop.f32.mrb[0].mxu0
        %v1843 = vpop.f32.mrb[0].mxu0
        %v1844 = vadd.f32 0.0, %v1843
        %v1845 = vpop.f32.mrb[0].mxu0
        %1846 = vmatprep.mubr.bf16.mxu0 %v1787
        %1847 = vmatmul.mubr.bf16.gmra.mrb[0].mxu0 %v1786
        %v1848 = vpop.f32.mrb[0].mxu0
        %v1849 = vadd.f32 0.0, %v1848
        %v1850 = vpop.f32.mrb[0].mxu0
        %v1851 = vpop.f32.mrb[0].mxu0
        %v1852 = vadd.f32 0.0, %v1851
        %v1853 = vpop.f32.mrb[0].mxu0
        %1854 = vmatprep.mubr.bf16.mxu0 %v1789
        %1855 = vmatmul.mubr.bf16.gmra.mrb[0].mxu0 %v1788
        %v1856 = vpop.f32.mrb[0].mxu0
        %v1857 = vadd.f32 0.0, %v1856
        %v1858 = vpop.f32.mrb[0].mxu0
        %v1859 = vpop.f32.mrb[0].mxu0
        %v1860 = vadd.f32 0.0, %v1859
        %v1861 = vpop.f32.mrb[0].mxu0
        %1862 = vdwg.mxu0
        %v1863 = vmul.f32 %v1833, %v837
        %v1864 = vmul.f32 %v1836, %v841
        %v1865 = vmul.f32 %v1841, %v845
        %v1866 = vmul.f32 %v1844, %v849
        %v1867 = vmul.f32 %v1849, %v853
        %v1868 = vmul.f32 %v1852, %v857
        %v1869 = vmul.f32 %v1857, %v861
        %v1870 = vmul.f32 %v1860, %v865
        %v1871 = vadd.f32 %v1863, %v363
        %v1872 = vadd.f32 %v1864, %v364
        %v1873 = vadd.f32 %v1865, %v365
        %v1874 = vadd.f32 %v1866, %v366
        %v1875 = vadd.f32 %v1867, %v367
        %v1876 = vadd.f32 %v1868, %v368
        %v1877 = vadd.f32 %v1869, %v369
        %v1878 = vadd.f32 %v1870, %v370
        %v1879 = vmul.f32 %v1871, 1.442695
        %v1880 = vpow.pop %v1879
        %v1881 = vmul.f32 %v1872, 1.442695
        %v1882 = vpow.pop %v1881
        %v1883 = vmul.f32 %v1873, 1.442695
        %v1884 = vpow.pop %v1883
        %v1885 = vmul.f32 %v1874, 1.442695
        %v1886 = vpow.pop %v1885
        %v1887 = vmul.f32 %v1875, 1.442695
        %v1888 = vpow.pop %v1887
        %v1889 = vmul.f32 %v1876, 1.442695
        %v1890 = vpow.pop %v1889
        %v1891 = vmul.f32 %v1877, 1.442695
        %v1892 = vpow.pop %v1891
        %v1893 = vmul.f32 %v1878, 1.442695
        %v1894 = vpow.pop %v1893
        %v1895 = vsel %vm1400, %v1880, 0.0
        %1896 = vadd.xlane.f32.xlu0 %v1895
        %v1897 = vpop.xlane.xlu0 %1896
        %v1898 = vsel %vm1400, %v1882, 0.0
        %1899 = vadd.xlane.f32.xlu0 %v1898
        %v1900 = vpop.xlane.xlu0 %1899
        %v1901 = vsel %vm1400, %v1884, 0.0
        %1902 = vadd.xlane.f32.xlu0 %v1901
        %v1903 = vpop.xlane.xlu0 %1902
        %v1904 = vsel %vm1400, %v1886, 0.0
        %1905 = vadd.xlane.f32.xlu0 %v1904
        %v1906 = vpop.xlane.xlu0 %1905
        %v1907 = vsel %vm1400, %v1888, 0.0
        %1908 = vadd.xlane.f32.xlu0 %v1907
        %v1909 = vpop.xlane.xlu0 %1908
        %v1910 = vsel %vm1400, %v1890, 0.0
        %1911 = vadd.xlane.f32.xlu0 %v1910
        %v1912 = vpop.xlane.xlu0 %1911
        %v1913 = vsel %vm1400, %v1892, 0.0
        %1914 = vadd.xlane.f32.xlu0 %v1913
        %v1915 = vpop.xlane.xlu0 %1914
        %v1916 = vsel %vm1400, %v1894, 0.0
        %1917 = vadd.xlane.f32.xlu0 %v1916
        %v1918 = vpop.xlane.xlu0 %1917
        %v1919 = vrcp.pop %v1897
        %v1920 = vrcp.pop %v1900
        %v1921 = vrcp.pop %v1903
        %v1922 = vrcp.pop %v1906
        %v1923 = vrcp.pop %v1909
        %v1924 = vrcp.pop %v1912
        %v1925 = vrcp.pop %v1915
        %v1926 = vrcp.pop %v1918
        %v1927 = vmul.f32 %v1880, %v1919
        %v1928 = vmul.f32 %v1882, %v1920
        %v1929 = vmul.f32 %v1884, %v1921
        %v1930 = vmul.f32 %v1886, %v1922
        %v1931 = vmul.f32 %v1888, %v1923
        %v1932 = vmul.f32 %v1890, %v1924
        %v1933 = vmul.f32 %v1892, %v1925
        %v1934 = vmul.f32 %v1894, %v1926
        %v1935 = vpack.c.bf16 %v1928, %v1927
        %v1936 = vpack.c.bf16 %v1930, %v1929
        %v1937 = vpack.c.bf16 %v1932, %v1931
        %v1938 = vpack.c.bf16 %v1934, %v1933
        %v1939 = vpack.c.bf16 %v1624, %v1622
        %v1940 = vpack.c.bf16 %v1625, %v1623
        %v1941 = vpack.c.bf16 %v1628, %v1626
        %v1942 = vpack.c.bf16 %v1629, %v1627
        %v1943 = vpack.c.bf16 %v1632, %v1630
        %v1944 = vpack.c.bf16 %v1633, %v1631
        %v1945 = vpack.c.bf16 %v1636, %v1634
        %v1946 = vpack.c.bf16 %v1637, %v1635
        %v1948 = vsel %vm1400, %v1935, 0
        %v1951 = vsel %vm1400, %v1936, 0
        %v1954 = vsel %vm1400, %v1937, 0
        %v1957 = vsel %vm1400, %v1938, 0
        %1959 = vmatprep.subr.bf16.mxu0 %v1940
        %1960 = vmatpush1.bf16.msra.mxu0 %v1939
        %1961 = vmatprep.subr.bf16.mxu0 %v1942
        %1962 = vmatpush1.bf16.msra.mxu0 %v1941
        %1963 = vmatprep.subr.bf16.mxu0 %v1944
        %1964 = vmatpush1.bf16.msra.mxu0 %v1943
        %1965 = vmatprep.subr.bf16.mxu0 %v1946
        %1966 = vmatpush1.bf16.msra.mxu0 %v1945
        %1967 = vmatprep.subr.bf16.mxu0 0
        %1968 = vmatpush1.bf16.msra.mxu0 0
        %1969 = vmatprep.subr.bf16.mxu0 0
        %1970 = vmatpush1.bf16.msra.mxu0 0
        %1971 = vmatprep.subr.bf16.mxu0 0
        %1972 = vmatpush1.bf16.msra.mxu0 0
        %1973 = vmatprep.subr.bf16.mxu0 0
        %1974 = vmatpush1.bf16.msra.mxu0 0
        %1975 = vmatprep.subr.bf16.mxu0 0
        %1976 = vmatpush1.bf16.msra.mxu0 0
        %1977 = vmatprep.subr.bf16.mxu0 0
        %1978 = vmatpush1.bf16.msra.mxu0 0
        %1979 = vmatprep.subr.bf16.mxu0 0
        %1980 = vmatpush1.bf16.msra.mxu0 0
        %1981 = vmatprep.subr.bf16.mxu0 0
        %1982 = vmatpush1.bf16.msra.mxu0 0
        %1983 = vmatprep.subr.bf16.mxu0 0
        %1984 = vmatpush1.bf16.msra.mxu0 0
        %1985 = vmatprep.subr.bf16.mxu0 0
        %1986 = vmatpush1.bf16.msra.mxu0 0
        %1987 = vmatprep.subr.bf16.mxu0 0
        %1988 = vmatpush1.bf16.msra.mxu0 0
        %1989 = vmatprep.subr.bf16.mxu0 0
        %1990 = vmatpush1.bf16.msra.mxu0 0
        %1991 = vmatprep.mubr.bf16.mxu0 0
        %1992 = vmatmul.mubr.bf16.gmra.mrb[0].mxu0 %v1948
        %v1993 = vpop.f32.mrb[0].mxu0
        %v1994 = vadd.f32 0.0, %v1993
        %v1995 = vpop.f32.mrb[0].mxu0
        %v1996 = vadd.f32 0.0, %v1995
        %v1997 = vpop.f32.mrb[0].mxu0
        %v1998 = vadd.f32 0.0, %v1997
        %v1999 = vpop.f32.mrb[0].mxu0
        %v2000 = vadd.f32 0.0, %v1999
        %2001 = vmatprep.mubr.bf16.mxu0 0
        %2002 = vmatmul.mubr.bf16.gmra.mrb[0].mxu0 %v1951
        %v2003 = vpop.f32.mrb[0].mxu0
        %v2004 = vadd.f32 0.0, %v2003
        %v2005 = vpop.f32.mrb[0].mxu0
        %v2006 = vadd.f32 0.0, %v2005
        %v2007 = vpop.f32.mrb[0].mxu0
        %v2008 = vadd.f32 0.0, %v2007
        %v2009 = vpop.f32.mrb[0].mxu0
        %v2010 = vadd.f32 0.0, %v2009
        %2011 = vmatprep.mubr.bf16.mxu0 0
        %2012 = vmatmul.mubr.bf16.gmra.mrb[0].mxu0 %v1954
        %v2013 = vpop.f32.mrb[0].mxu0
        %v2014 = vadd.f32 0.0, %v2013
        %v2015 = vpop.f32.mrb[0].mxu0
        %v2016 = vadd.f32 0.0, %v2015
        %v2017 = vpop.f32.mrb[0].mxu0
        %v2018 = vadd.f32 0.0, %v2017
        %v2019 = vpop.f32.mrb[0].mxu0
        %v2020 = vadd.f32 0.0, %v2019
        %2021 = vmatprep.mubr.bf16.mxu0 0
        %2022 = vmatmul.mubr.bf16.gmra.mrb[0].mxu0 %v1957
        %v2023 = vpop.f32.mrb[0].mxu0
        %v2024 = vadd.f32 0.0, %v2023
        %v2025 = vpop.f32.mrb[0].mxu0
        %v2026 = vadd.f32 0.0, %v2025
        %v2027 = vpop.f32.mrb[0].mxu0
        %v2028 = vadd.f32 0.0, %v2027
        %v2029 = vpop.f32.mrb[0].mxu0
        %v2030 = vadd.f32 0.0, %v2029
        %2031 = vdwg.mxu0
        %v2032 = vpack.c.bf16 %v1998, %v1994
        %v2033 = vpack.c.bf16 %v2000, %v1996
        %v2034 = vpack.c.bf16 %v2008, %v2004
        %v2035 = vpack.c.bf16 %v2010, %v2006
        %v2036 = vpack.c.bf16 %v2018, %v2014
        %v2037 = vpack.c.bf16 %v2020, %v2016
        %v2038 = vpack.c.bf16 %v2028, %v2024
        %v2039 = vpack.c.bf16 %v2030, %v2026
        %v2048 = vunpack.c.l.b16 %v403
        %v2049 = vunpack.c.l.b16 %v404
        %v2050 = vunpack.c.l.b16 %v405
        %v2051 = vunpack.c.l.b16 %v406
        %v2052 = vunpack.c.l.b16 %v407
        %v2053 = vunpack.c.l.b16 %v408
        %v2054 = vunpack.c.l.b16 %v409
        %v2055 = vunpack.c.l.b16 %v410
        %v2056 = vpack.c.b16 %v2049, %v2048
        %v2057 = vpack.c.b16 %v2051, %v2050
        %v2058 = vpack.c.b16 %v2053, %v2052
        %v2059 = vpack.c.b16 %v2055, %v2054
        %v2061 = vsel %vm1400, %v2056, 0
        %v2064 = vsel %vm1400, %v2057, 0
        %v2067 = vsel %vm1400, %v2058, 0
        %v2070 = vsel %vm1400, %v2059, 0
        %2072 = vmatprep.subr.bf16.mxu0 %v2033
        %2073 = vmatpush1.bf16.msra.mxu0 %v2032
        %2074 = vmatprep.subr.bf16.mxu0 %v2035
        %2075 = vmatpush1.bf16.msra.mxu0 %v2034
        %2076 = vmatprep.subr.bf16.mxu0 %v2037
        %2077 = vmatpush1.bf16.msra.mxu0 %v2036
        %2078 = vmatprep.subr.bf16.mxu0 %v2039
        %2079 = vmatpush1.bf16.msra.mxu0 %v2038
        %2080 = vmatprep.subr.bf16.mxu0 0
        %2081 = vmatpush1.bf16.msra.mxu0 0
        %2082 = vmatprep.subr.bf16.mxu0 0
        %2083 = vmatpush1.bf16.msra.mxu0 0
        %2084 = vmatprep.subr.bf16.mxu0 0
        %2085 = vmatpush1.bf16.msra.mxu0 0
        %2086 = vmatprep.subr.bf16.mxu0 0
        %2087 = vmatpush1.bf16.msra.mxu0 0
        %2088 = vmatprep.subr.bf16.mxu0 0
        %2089 = vmatpush1.bf16.msra.mxu0 0
        %2090 = vmatprep.subr.bf16.mxu0 0
        %2091 = vmatpush1.bf16.msra.mxu0 0
        %2092 = vmatprep.subr.bf16.mxu0 0
        %2093 = vmatpush1.bf16.msra.mxu0 0
        %2094 = vmatprep.subr.bf16.mxu0 0
        %2095 = vmatpush1.bf16.msra.mxu0 0
        %2096 = vmatprep.subr.bf16.mxu0 0
        %2097 = vmatpush1.bf16.msra.mxu0 0
        %2098 = vmatprep.subr.bf16.mxu0 0
        %2099 = vmatpush1.bf16.msra.mxu0 0
        %2100 = vmatprep.subr.bf16.mxu0 0
        %2101 = vmatpush1.bf16.msra.mxu0 0
        %2102 = vmatprep.subr.bf16.mxu0 0
        %2103 = vmatpush1.bf16.msra.mxu0 0
        %2104 = vmatprep.mubr.bf16.mxu0 0
        %2105 = vmatmul.mubr.bf16.gmra.mrb[0].mxu0 %v2061
        %v2106 = vpop.f32.mrb[0].mxu0
        %v2107 = vadd.f32 %v645, %v2106
        %v2108 = vpop.f32.mrb[0].mxu0
        %v2109 = vadd.f32 %v645, %v2108
        %v2110 = vpop.f32.mrb[0].mxu0
        %v2111 = vadd.f32 %v649, %v2110
        %v2112 = vpop.f32.mrb[0].mxu0
        %v2113 = vadd.f32 %v649, %v2112
        %2114 = vmatprep.mubr.bf16.mxu0 0
        %2115 = vmatmul.mubr.bf16.gmra.mrb[0].mxu0 %v2064
        %v2116 = vpop.f32.mrb[0].mxu0
        %v2117 = vadd.f32 %v653, %v2116
        %v2118 = vpop.f32.mrb[0].mxu0
        %v2119 = vadd.f32 %v653, %v2118
        %v2120 = vpop.f32.mrb[0].mxu0
        %v2121 = vadd.f32 %v657, %v2120
        %v2122 = vpop.f32.mrb[0].mxu0
        %v2123 = vadd.f32 %v657, %v2122
        %2124 = vmatprep.mubr.bf16.mxu0 0
        %2125 = vmatmul.mubr.bf16.gmra.mrb[0].mxu0 %v2067
        %v2126 = vpop.f32.mrb[0].mxu0
        %v2127 = vadd.f32 %v661, %v2126
        %v2128 = vpop.f32.mrb[0].mxu0
        %v2129 = vadd.f32 %v661, %v2128
        %v2130 = vpop.f32.mrb[0].mxu0
        %v2131 = vadd.f32 %v665, %v2130
        %v2132 = vpop.f32.mrb[0].mxu0
        %v2133 = vadd.f32 %v665, %v2132
        %2134 = vmatprep.mubr.bf16.mxu0 0
        %2135 = vmatmul.mubr.bf16.gmra.mrb[0].mxu0 %v2070
        %v2136 = vpop.f32.mrb[0].mxu0
        %v2137 = vadd.f32 %v669, %v2136
        %v2138 = vpop.f32.mrb[0].mxu0
        %v2139 = vadd.f32 %v669, %v2138
        %v2140 = vpop.f32.mrb[0].mxu0
        %v2141 = vadd.f32 %v673, %v2140
        %v2142 = vpop.f32.mrb[0].mxu0
        %v2143 = vadd.f32 %v673, %v2142
        %2144 = vdwg.mxu0
        %v2145 = vmul.f32 %v677, %v2107
        %v2146 = vmul.f32 %v677, %v2109
        %v2147 = vmul.f32 %v681, %v2111
        %v2148 = vmul.f32 %v681, %v2113
        %v2149 = vmul.f32 %v685, %v2117
        %v2150 = vmul.f32 %v685, %v2119
        %v2151 = vmul.f32 %v689, %v2121
        %v2152 = vmul.f32 %v689, %v2123
        %v2153 = vmul.f32 %v693, %v2127
        %v2154 = vmul.f32 %v693, %v2129
        %v2155 = vmul.f32 %v697, %v2131
        %v2156 = vmul.f32 %v697, %v2133
        %v2157 = vmul.f32 %v701, %v2137
        %v2158 = vmul.f32 %v701, %v2139
        %v2159 = vmul.f32 %v705, %v2141
        %v2160 = vmul.f32 %v705, %v2143
        %v2161 = vadd.f32 %v1171, %v2145
        %v2162 = vadd.f32 %v1172, %v2146
        %v2163 = vadd.f32 %v1173, %v2147
        %v2164 = vadd.f32 %v1174, %v2148
        %v2165 = vadd.f32 %v1175, %v2149
        %v2166 = vadd.f32 %v1176, %v2150
        %v2167 = vadd.f32 %v1177, %v2151
        %v2168 = vadd.f32 %v1178, %v2152
        %v2169 = vadd.f32 %v1179, %v2153
        %v2170 = vadd.f32 %v1180, %v2154
        %v2171 = vadd.f32 %v1181, %v2155
        %v2172 = vadd.f32 %v1182, %v2156
        %v2173 = vadd.f32 %v1183, %v2157
        %v2174 = vadd.f32 %v1184, %v2158
        %v2175 = vadd.f32 %v1185, %v2159
        %v2176 = vadd.f32 %v1186, %v2160
        %v2177 = vadd.f32 %v2161, %v2163
        %v2178 = vadd.f32 %v2177, %v2165
        %v2179 = vadd.f32 %v2178, %v2167
        %v2180 = vadd.f32 %v2179, %v2169
        %v2181 = vadd.f32 %v2180, %v2171
        %v2182 = vadd.f32 %v2181, %v2173
        %v2183 = vadd.f32 %v2182, %v2175
        %v2184 = vrot.slane %v2183, 4
        %v2185 = vadd.f32 %v2183, %v2184
        %v2186 = vrot.slane %v2185, 2
        %v2187 = vadd.f32 %v2185, %v2186
        %v2188 = vrot.slane %v2187, 1
        %v2189 = vadd.f32 %v2187, %v2188
        %v2190 = vadd.f32 %v2162, %v2164
        %v2191 = vadd.f32 %v2190, %v2166
        %v2192 = vadd.f32 %v2191, %v2168
        %v2193 = vadd.f32 %v2192, %v2170
        %v2194 = vadd.f32 %v2193, %v2172
        %v2195 = vadd.f32 %v2194, %v2174
        %v2196 = vadd.f32 %v2195, %v2176
        %v2197 = vrot.slane %v2196, 4
        %v2198 = vadd.f32 %v2196, %v2197
        %v2199 = vrot.slane %v2198, 2
        %v2200 = vadd.f32 %v2198, %v2199
        %v2201 = vrot.slane %v2200, 1
        %v2202 = vadd.f32 %v2200, %v2201
        %v2203 = vmul.f32 %v2189, %v1213
        %v2204 = vmul.f32 %v2202, %v1213
        %v2205 = vmul.f32 %v2161, %v2161
        %v2206 = vmul.f32 %v2162, %v2162
        %v2207 = vmul.f32 %v2163, %v2163
        %v2208 = vmul.f32 %v2164, %v2164
        %v2209 = vmul.f32 %v2165, %v2165
        %v2210 = vmul.f32 %v2166, %v2166
        %v2211 = vmul.f32 %v2167, %v2167
        %v2212 = vmul.f32 %v2168, %v2168
        %v2213 = vmul.f32 %v2169, %v2169
        %v2214 = vmul.f32 %v2170, %v2170
        %v2215 = vmul.f32 %v2171, %v2171
        %v2216 = vmul.f32 %v2172, %v2172
        %v2217 = vmul.f32 %v2173, %v2173
        %v2218 = vmul.f32 %v2174, %v2174
        %v2219 = vmul.f32 %v2175, %v2175
        %v2220 = vmul.f32 %v2176, %v2176
        %v2221 = vadd.f32 %v2205, %v2207
        %v2222 = vadd.f32 %v2221, %v2209
        %v2223 = vadd.f32 %v2222, %v2211
        %v2224 = vadd.f32 %v2223, %v2213
        %v2225 = vadd.f32 %v2224, %v2215
        %v2226 = vadd.f32 %v2225, %v2217
        %v2227 = vadd.f32 %v2226, %v2219
        %v2228 = vrot.slane %v2227, 4
        %v2229 = vadd.f32 %v2227, %v2228
        %v2230 = vrot.slane %v2229, 2
        %v2231 = vadd.f32 %v2229, %v2230
        %v2232 = vrot.slane %v2231, 1
        %v2233 = vadd.f32 %v2231, %v2232
        %v2234 = vadd.f32 %v2206, %v2208
        %v2235 = vadd.f32 %v2234, %v2210
        %v2236 = vadd.f32 %v2235, %v2212
        %v2237 = vadd.f32 %v2236, %v2214
        %v2238 = vadd.f32 %v2237, %v2216
        %v2239 = vadd.f32 %v2238, %v2218
        %v2240 = vadd.f32 %v2239, %v2220
        %v2241 = vrot.slane %v2240, 4
        %v2242 = vadd.f32 %v2240, %v2241
        %v2243 = vrot.slane %v2242, 2
        %v2244 = vadd.f32 %v2242, %v2243
        %v2245 = vrot.slane %v2244, 1
        %v2246 = vadd.f32 %v2244, %v2245
        %v2247 = vmul.f32 %v2233, %v1213
        %v2248 = vmul.f32 %v2246, %v1213
        %v2249 = vsub.f32 %v2161, %v2203
        %v2250 = vsub.f32 %v2162, %v2204
        %v2251 = vsub.f32 %v2163, %v2203
        %v2252 = vsub.f32 %v2164, %v2204
        %v2253 = vsub.f32 %v2165, %v2203
        %v2254 = vsub.f32 %v2166, %v2204
        %v2255 = vsub.f32 %v2167, %v2203
        %v2256 = vsub.f32 %v2168, %v2204
        %v2257 = vsub.f32 %v2169, %v2203
        %v2258 = vsub.f32 %v2170, %v2204
        %v2259 = vsub.f32 %v2171, %v2203
        %v2260 = vsub.f32 %v2172, %v2204
        %v2261 = vsub.f32 %v2173, %v2203
        %v2262 = vsub.f32 %v2174, %v2204
        %v2263 = vsub.f32 %v2175, %v2203
        %v2264 = vsub.f32 %v2176, %v2204
        %v2265 = vmul.f32 %v2203, %v2203
        %v2266 = vmul.f32 %v2204, %v2204
        %v2267 = vsub.f32 %v2247, %v2265
        %v2268 = vsub.f32 %v2248, %v2266
        %v2269 = vadd.f32 %v2267, 1e-06
        %v2270 = vadd.f32 %v2268, 1e-06
        %v2271 = vrsqrt.pop %v2269
        %v2272 = vrsqrt.pop %v2270
        %v2273 = vmul.f32 %v2249, %v2271
        %v2274 = vmul.f32 %v2250, %v2272
        %v2275 = vmul.f32 %v2251, %v2271
        %v2276 = vmul.f32 %v2252, %v2272
        %v2277 = vmul.f32 %v2253, %v2271
        %v2278 = vmul.f32 %v2254, %v2272
        %v2279 = vmul.f32 %v2255, %v2271
        %v2280 = vmul.f32 %v2256, %v2272
        %v2281 = vmul.f32 %v2257, %v2271
        %v2282 = vmul.f32 %v2258, %v2272
        %v2283 = vmul.f32 %v2259, %v2271
        %v2284 = vmul.f32 %v2260, %v2272
        %v2285 = vmul.f32 %v2261, %v2271
        %v2286 = vmul.f32 %v2262, %v2272
        %v2287 = vmul.f32 %v2263, %v2271
        %v2288 = vmul.f32 %v2264, %v2272
        %v2289 = vmul.f32 %v2273, %v709
        %v2290 = vmul.f32 %v2274, %v709
        %v2291 = vmul.f32 %v2275, %v713
        %v2292 = vmul.f32 %v2276, %v713
        %v2293 = vmul.f32 %v2277, %v717
        %v2294 = vmul.f32 %v2278, %v717
        %v2295 = vmul.f32 %v2279, %v721
        %v2296 = vmul.f32 %v2280, %v721
        %v2297 = vmul.f32 %v2281, %v725
        %v2298 = vmul.f32 %v2282, %v725
        %v2299 = vmul.f32 %v2283, %v729
        %v2300 = vmul.f32 %v2284, %v729
        %v2301 = vmul.f32 %v2285, %v733
        %v2302 = vmul.f32 %v2286, %v733
        %v2303 = vmul.f32 %v2287, %v737
        %v2304 = vmul.f32 %v2288, %v737
        %v2305 = vadd.f32 %v2289, %v741
        %v2306 = vadd.f32 %v2290, %v741
        %v2307 = vadd.f32 %v2291, %v745
        %v2308 = vadd.f32 %v2292, %v745
        %v2309 = vadd.f32 %v2293, %v749
        %v2310 = vadd.f32 %v2294, %v749
        %v2311 = vadd.f32 %v2295, %v753
        %v2312 = vadd.f32 %v2296, %v753
        %v2313 = vadd.f32 %v2297, %v757
        %v2314 = vadd.f32 %v2298, %v757
        %v2315 = vadd.f32 %v2299, %v761
        %v2316 = vadd.f32 %v2300, %v761
        %v2317 = vadd.f32 %v2301, %v765
        %v2318 = vadd.f32 %v2302, %v765
        %v2319 = vadd.f32 %v2303, %v769
        %v2320 = vadd.f32 %v2304, %v769
        %v2321 = vpack.c.bf16 %v2307, %v2305
        %v2322 = vpack.c.bf16 %v2308, %v2306
        %v2323 = vpack.c.bf16 %v2311, %v2309
        %v2324 = vpack.c.bf16 %v2312, %v2310
        %v2325 = vpack.c.bf16 %v2315, %v2313
        %v2326 = vpack.c.bf16 %v2316, %v2314
        %v2327 = vpack.c.bf16 %v2319, %v2317
        %v2328 = vpack.c.bf16 %v2320, %v2318
        %v2377 = vunpack.c.l.b16 %v411
        %v2378 = vunpack.c.l.b16 %v412
        %v2379 = vunpack.c.l.b16 %v413
        %v2380 = vunpack.c.l.b16 %v414
        %v2381 = vunpack.c.l.b16 %v415
        %v2382 = vunpack.c.l.b16 %v416
        %v2383 = vunpack.c.l.b16 %v417
        %v2384 = vunpack.c.l.b16 %v418
        %v2385 = vunpack.c.l.b16 %v419
        %v2386 = vunpack.c.l.b16 %v420
        %v2387 = vunpack.c.l.b16 %v421
        %v2388 = vunpack.c.l.b16 %v422
        %v2389 = vunpack.c.l.b16 %v423
        %v2390 = vunpack.c.l.b16 %v424
        %v2391 = vunpack.c.l.b16 %v425
        %v2392 = vunpack.c.l.b16 %v426
        %v2393 = vunpack.c.l.b16 %v427
        %v2394 = vunpack.c.l.b16 %v428
        %v2395 = vunpack.c.l.b16 %v429
        %v2396 = vunpack.c.l.b16 %v430
        %v2397 = vunpack.c.l.b16 %v431
        %v2398 = vunpack.c.l.b16 %v432
        %v2399 = vunpack.c.l.b16 %v433
        %v2400 = vunpack.c.l.b16 %v434
        %v2401 = vunpack.c.l.b16 %v435
        %v2402 = vunpack.c.l.b16 %v436
        %v2403 = vunpack.c.l.b16 %v437
        %v2404 = vunpack.c.l.b16 %v438
        %v2405 = vunpack.c.l.b16 %v439
        %v2406 = vunpack.c.l.b16 %v440
        %v2407 = vunpack.c.l.b16 %v441
        %v2408 = vunpack.c.l.b16 %v442
        %v2409 = vunpack.c.l.b16 %v443
        %v2410 = vunpack.c.l.b16 %v444
        %v2411 = vunpack.c.l.b16 %v445
        %v2412 = vunpack.c.l.b16 %v446
        %v2413 = vunpack.c.l.b16 %v447
        %v2414 = vunpack.c.l.b16 %v448
        %v2415 = vunpack.c.l.b16 %v449
        %v2416 = vunpack.c.l.b16 %v450
        %v2417 = vunpack.c.l.b16 %v451
        %v2418 = vunpack.c.l.b16 %v452
        %v2419 = vunpack.c.l.b16 %v453
        %v2420 = vunpack.c.l.b16 %v454
        %v2421 = vunpack.c.l.b16 %v455
        %v2422 = vunpack.c.l.b16 %v456
        %v2423 = vunpack.c.l.b16 %v457
        %v2424 = vunpack.c.l.b16 %v458
        %v2425 = vpack.c.b16 %v2378, %v2377
        %v2426 = vpack.c.b16 %v2380, %v2379
        %v2427 = vpack.c.b16 %v2382, %v2381
        %v2428 = vpack.c.b16 %v2384, %v2383
        %v2429 = vpack.c.b16 %v2386, %v2385
        %v2430 = vpack.c.b16 %v2388, %v2387
        %v2431 = vpack.c.b16 %v2390, %v2389
        %v2432 = vpack.c.b16 %v2392, %v2391
        %v2433 = vpack.c.b16 %v2394, %v2393
        %v2434 = vpack.c.b16 %v2396, %v2395
        %v2435 = vpack.c.b16 %v2398, %v2397
        %v2436 = vpack.c.b16 %v2400, %v2399
        %v2437 = vpack.c.b16 %v2402, %v2401
        %v2438 = vpack.c.b16 %v2404, %v2403
        %v2439 = vpack.c.b16 %v2406, %v2405
        %v2440 = vpack.c.b16 %v2408, %v2407
        %v2441 = vpack.c.b16 %v2410, %v2409
        %v2442 = vpack.c.b16 %v2412, %v2411
        %v2443 = vpack.c.b16 %v2414, %v2413
        %v2444 = vpack.c.b16 %v2416, %v2415
        %v2445 = vpack.c.b16 %v2418, %v2417
        %v2446 = vpack.c.b16 %v2420, %v2419
        %v2447 = vpack.c.b16 %v2422, %v2421
        %v2448 = vpack.c.b16 %v2424, %v2423
        %v2450 = vsel %vm1400, %v2425, 0
        %v2453 = vsel %vm1400, %v2426, 0
        %v2456 = vsel %vm1400, %v2427, 0
        %v2459 = vsel %vm1400, %v2428, 0
        %v2462 = vsel %vm1400, %v2429, 0
        %v2465 = vsel %vm1400, %v2430, 0
        %v2468 = vsel %vm1400, %v2431, 0
        %v2471 = vsel %vm1400, %v2432, 0
        %v2474 = vsel %vm1400, %v2433, 0
        %v2477 = vsel %vm1400, %v2434, 0
        %v2480 = vsel %vm1400, %v2435, 0
        %v2483 = vsel %vm1400, %v2436, 0
        %v2486 = vsel %vm1400, %v2437, 0
        %v2489 = vsel %vm1400, %v2438, 0
        %v2492 = vsel %vm1400, %v2439, 0
        %v2495 = vsel %vm1400, %v2440, 0
        %v2498 = vsel %vm1400, %v2441, 0
        %v2501 = vsel %vm1400, %v2442, 0
        %v2504 = vsel %vm1400, %v2443, 0
        %v2507 = vsel %vm1400, %v2444, 0
        %v2510 = vsel %vm1400, %v2445, 0
        %v2513 = vsel %vm1400, %v2446, 0
        %v2516 = vsel %vm1400, %v2447, 0
        %v2519 = vsel %vm1400, %v2448, 0
        %2521 = vmatprep.subr.bf16.mxu0 %v2322
        %2522 = vmatpush1.bf16.msra.mxu0 %v2321
        %2523 = vmatprep.subr.bf16.mxu0 %v2324
        %2524 = vmatpush1.bf16.msra.mxu0 %v2323
        %2525 = vmatprep.subr.bf16.mxu0 %v2326
        %2526 = vmatpush1.bf16.msra.mxu0 %v2325
        %2527 = vmatprep.subr.bf16.mxu0 %v2328
        %2528 = vmatpush1.bf16.msra.mxu0 %v2327
        %2529 = vmatprep.subr.bf16.mxu0 0
        %2530 = vmatpush1.bf16.msra.mxu0 0
        %2531 = vmatprep.subr.bf16.mxu0 0
        %2532 = vmatpush1.bf16.msra.mxu0 0
        %2533 = vmatprep.subr.bf16.mxu0 0
        %2534 = vmatpush1.bf16.msra.mxu0 0
        %2535 = vmatprep.subr.bf16.mxu0 0
        %2536 = vmatpush1.bf16.msra.mxu0 0
        %2537 = vmatprep.subr.bf16.mxu0 0
        %2538 = vmatpush1.bf16.msra.mxu0 0
        %2539 = vmatprep.subr.bf16.mxu0 0
        %2540 = vmatpush1.bf16.msra.mxu0 0
        %2541 = vmatprep.subr.bf16.mxu0 0
        %2542 = vmatpush1.bf16.msra.mxu0 0
        %2543 = vmatprep.subr.bf16.mxu0 0
        %2544 = vmatpush1.bf16.msra.mxu0 0
        %2545 = vmatprep.subr.bf16.mxu0 0
        %2546 = vmatpush1.bf16.msra.mxu0 0
        %2547 = vmatprep.subr.bf16.mxu0 0
        %2548 = vmatpush1.bf16.msra.mxu0 0
        %2549 = vmatprep.subr.bf16.mxu0 0
        %2550 = vmatpush1.bf16.msra.mxu0 0
        %2551 = vmatprep.subr.bf16.mxu0 0
        %2552 = vmatpush1.bf16.msra.mxu0 0
        %2553 = vmatprep.mubr.bf16.mxu0 0
        %2554 = vmatmul.mubr.bf16.gmra.mrb[0].mxu0 %v2450
        %v2555 = vpop.f32.mrb[0].mxu0
        %v2556 = vadd.f32 %v918, %v2555
        %v2557 = vpop.f32.mrb[0].mxu0
        %v2558 = vadd.f32 %v918, %v2557
        %v2559 = vpop.f32.mrb[0].mxu0
        %v2560 = vadd.f32 %v923, %v2559
        %v2561 = vpop.f32.mrb[0].mxu0
        %v2562 = vadd.f32 %v923, %v2561
        %2563 = vmatprep.mubr.bf16.mxu0 0
        %2564 = vmatmul.mubr.bf16.gmra.mrb[0].mxu0 %v2453
        %v2565 = vpop.f32.mrb[0].mxu0
        %v2566 = vadd.f32 %v928, %v2565
        %v2567 = vpop.f32.mrb[0].mxu0
        %v2568 = vadd.f32 %v928, %v2567
        %v2569 = vpop.f32.mrb[0].mxu0
        %v2570 = vadd.f32 %v933, %v2569
        %v2571 = vpop.f32.mrb[0].mxu0
        %v2572 = vadd.f32 %v933, %v2571
        %2573 = vmatprep.mubr.bf16.mxu0 0
        %2574 = vmatmul.mubr.bf16.gmra.mrb[0].mxu0 %v2456
        %v2575 = vpop.f32.mrb[0].mxu0
        %v2576 = vadd.f32 %v938, %v2575
        %v2577 = vpop.f32.mrb[0].mxu0
        %v2578 = vadd.f32 %v938, %v2577
        %v2579 = vpop.f32.mrb[0].mxu0
        %v2580 = vadd.f32 %v943, %v2579
        %v2581 = vpop.f32.mrb[0].mxu0
        %v2582 = vadd.f32 %v943, %v2581
        %2583 = vmatprep.mubr.bf16.mxu0 0
        %2584 = vmatmul.mubr.bf16.gmra.mrb[0].mxu0 %v2459
        %v2585 = vpop.f32.mrb[0].mxu0
        %v2586 = vadd.f32 %v948, %v2585
        %v2587 = vpop.f32.mrb[0].mxu0
        %v2588 = vadd.f32 %v948, %v2587
        %v2589 = vpop.f32.mrb[0].mxu0
        %v2590 = vadd.f32 %v953, %v2589
        %v2591 = vpop.f32.mrb[0].mxu0
        %v2592 = vadd.f32 %v953, %v2591
        %2593 = vmatprep.mubr.bf16.mxu0 0
        %2594 = vmatmul.mubr.bf16.gmra.mrb[0].mxu0 %v2462
        %v2595 = vpop.f32.mrb[0].mxu0
        %v2596 = vadd.f32 %v958, %v2595
        %v2597 = vpop.f32.mrb[0].mxu0
        %v2598 = vadd.f32 %v958, %v2597
        %v2599 = vpop.f32.mrb[0].mxu0
        %v2600 = vadd.f32 %v963, %v2599
        %v2601 = vpop.f32.mrb[0].mxu0
        %v2602 = vadd.f32 %v963, %v2601
        %2603 = vmatprep.mubr.bf16.mxu0 0
        %2604 = vmatmul.mubr.bf16.gmra.mrb[0].mxu0 %v2465
        %v2605 = vpop.f32.mrb[0].mxu0
        %v2606 = vadd.f32 %v968, %v2605
        %v2607 = vpop.f32.mrb[0].mxu0
        %v2608 = vadd.f32 %v968, %v2607
        %v2609 = vpop.f32.mrb[0].mxu0
        %v2610 = vadd.f32 %v973, %v2609
        %v2611 = vpop.f32.mrb[0].mxu0
        %v2612 = vadd.f32 %v973, %v2611
        %2613 = vmatprep.mubr.bf16.mxu0 0
        %2614 = vmatmul.mubr.bf16.gmra.mrb[0].mxu0 %v2468
        %v2615 = vpop.f32.mrb[0].mxu0
        %v2616 = vadd.f32 %v978, %v2615
        %v2617 = vpop.f32.mrb[0].mxu0
        %v2618 = vadd.f32 %v978, %v2617
        %v2619 = vpop.f32.mrb[0].mxu0
        %v2620 = vadd.f32 %v983, %v2619
        %v2621 = vpop.f32.mrb[0].mxu0
        %v2622 = vadd.f32 %v983, %v2621
        %2623 = vmatprep.mubr.bf16.mxu0 0
        %2624 = vmatmul.mubr.bf16.gmra.mrb[0].mxu0 %v2471
        %v2625 = vpop.f32.mrb[0].mxu0
        %v2626 = vadd.f32 %v988, %v2625
        %v2627 = vpop.f32.mrb[0].mxu0
        %v2628 = vadd.f32 %v988, %v2627
        %v2629 = vpop.f32.mrb[0].mxu0
        %v2630 = vadd.f32 %v993, %v2629
        %v2631 = vpop.f32.mrb[0].mxu0
        %v2632 = vadd.f32 %v993, %v2631
        %2633 = vmatprep.mubr.bf16.mxu0 0
        %2634 = vmatmul.mubr.bf16.gmra.mrb[0].mxu0 %v2474
        %v2635 = vpop.f32.mrb[0].mxu0
        %v2636 = vadd.f32 %v998, %v2635
        %v2637 = vpop.f32.mrb[0].mxu0
        %v2638 = vadd.f32 %v998, %v2637
        %v2639 = vpop.f32.mrb[0].mxu0
        %v2640 = vadd.f32 %v1003, %v2639
        %v2641 = vpop.f32.mrb[0].mxu0
        %v2642 = vadd.f32 %v1003, %v2641
        %2643 = vmatprep.mubr.bf16.mxu0 0
        %2644 = vmatmul.mubr.bf16.gmra.mrb[0].mxu0 %v2477
        %v2645 = vpop.f32.mrb[0].mxu0
        %v2646 = vadd.f32 %v1008, %v2645
        %v2647 = vpop.f32.mrb[0].mxu0
        %v2648 = vadd.f32 %v1008, %v2647
        %v2649 = vpop.f32.mrb[0].mxu0
        %v2650 = vadd.f32 %v1013, %v2649
        %v2651 = vpop.f32.mrb[0].mxu0
        %v2652 = vadd.f32 %v1013, %v2651
        %2653 = vmatprep.mubr.bf16.mxu0 0
        %2654 = vmatmul.mubr.bf16.gmra.mrb[0].mxu0 %v2480
        %v2655 = vpop.f32.mrb[0].mxu0
        %v2656 = vadd.f32 %v1018, %v2655
        %v2657 = vpop.f32.mrb[0].mxu0
        %v2658 = vadd.f32 %v1018, %v2657
        %v2659 = vpop.f32.mrb[0].mxu0
        %v2660 = vadd.f32 %v1023, %v2659
        %v2661 = vpop.f32.mrb[0].mxu0
        %v2662 = vadd.f32 %v1023, %v2661
        %2663 = vmatprep.mubr.bf16.mxu0 0
        %2664 = vmatmul.mubr.bf16.gmra.mrb[0].mxu0 %v2483
        %v2665 = vpop.f32.mrb[0].mxu0
        %v2666 = vadd.f32 %v1028, %v2665
        %v2667 = vpop.f32.mrb[0].mxu0
        %v2668 = vadd.f32 %v1028, %v2667
        %v2669 = vpop.f32.mrb[0].mxu0
        %v2670 = vadd.f32 %v1033, %v2669
        %v2671 = vpop.f32.mrb[0].mxu0
        %v2672 = vadd.f32 %v1033, %v2671
        %2673 = vmatprep.mubr.bf16.mxu0 0
        %2674 = vmatmul.mubr.bf16.gmra.mrb[0].mxu0 %v2486
        %v2675 = vpop.f32.mrb[0].mxu0
        %v2676 = vadd.f32 %v1038, %v2675
        %v2677 = vpop.f32.mrb[0].mxu0
        %v2678 = vadd.f32 %v1038, %v2677
        %v2679 = vpop.f32.mrb[0].mxu0
        %v2680 = vadd.f32 %v1043, %v2679
        %v2681 = vpop.f32.mrb[0].mxu0
        %v2682 = vadd.f32 %v1043, %v2681
        %2683 = vmatprep.mubr.bf16.mxu0 0
        %2684 = vmatmul.mubr.bf16.gmra.mrb[0].mxu0 %v2489
        %v2685 = vpop.f32.mrb[0].mxu0
        %v2686 = vadd.f32 %v1048, %v2685
        %v2687 = vpop.f32.mrb[0].mxu0
        %v2688 = vadd.f32 %v1048, %v2687
        %v2689 = vpop.f32.mrb[0].mxu0
        %v2690 = vadd.f32 %v1053, %v2689
        %v2691 = vpop.f32.mrb[0].mxu0
        %v2692 = vadd.f32 %v1053, %v2691
        %2693 = vmatprep.mubr.bf16.mxu0 0
        %2694 = vmatmul.mubr.bf16.gmra.mrb[0].mxu0 %v2492
        %v2695 = vpop.f32.mrb[0].mxu0
        %v2696 = vadd.f32 %v1058, %v2695
        %v2697 = vpop.f32.mrb[0].mxu0
        %v2698 = vadd.f32 %v1058, %v2697
        %v2699 = vpop.f32.mrb[0].mxu0
        %v2700 = vadd.f32 %v1063, %v2699
        %v2701 = vpop.f32.mrb[0].mxu0
        %v2702 = vadd.f32 %v1063, %v2701
        %2703 = vmatprep.mubr.bf16.mxu0 0
        %2704 = vmatmul.mubr.bf16.gmra.mrb[0].mxu0 %v2495
        %v2705 = vpop.f32.mrb[0].mxu0
        %v2706 = vadd.f32 %v1068, %v2705
        %v2707 = vpop.f32.mrb[0].mxu0
        %v2708 = vadd.f32 %v1068, %v2707
        %v2709 = vpop.f32.mrb[0].mxu0
        %v2710 = vadd.f32 %v1073, %v2709
        %v2711 = vpop.f32.mrb[0].mxu0
        %v2712 = vadd.f32 %v1073, %v2711
        %2713 = vmatprep.mubr.bf16.mxu0 0
        %2714 = vmatmul.mubr.bf16.gmra.mrb[0].mxu0 %v2498
        %v2715 = vpop.f32.mrb[0].mxu0
        %v2716 = vadd.f32 %v1078, %v2715
        %v2717 = vpop.f32.mrb[0].mxu0
        %v2718 = vadd.f32 %v1078, %v2717
        %v2719 = vpop.f32.mrb[0].mxu0
        %v2720 = vadd.f32 %v1083, %v2719
        %v2721 = vpop.f32.mrb[0].mxu0
        %v2722 = vadd.f32 %v1083, %v2721
        %2723 = vmatprep.mubr.bf16.mxu0 0
        %2724 = vmatmul.mubr.bf16.gmra.mrb[0].mxu0 %v2501
        %v2725 = vpop.f32.mrb[0].mxu0
        %v2726 = vadd.f32 %v1088, %v2725
        %v2727 = vpop.f32.mrb[0].mxu0
        %v2728 = vadd.f32 %v1088, %v2727
        %v2729 = vpop.f32.mrb[0].mxu0
        %v2730 = vadd.f32 %v1093, %v2729
        %v2731 = vpop.f32.mrb[0].mxu0
        %v2732 = vadd.f32 %v1093, %v2731
        %2733 = vmatprep.mubr.bf16.mxu0 0
        %2734 = vmatmul.mubr.bf16.gmra.mrb[0].mxu0 %v2504
        %v2735 = vpop.f32.mrb[0].mxu0
        %v2736 = vadd.f32 %v1098, %v2735
        %v2737 = vpop.f32.mrb[0].mxu0
        %v2738 = vadd.f32 %v1098, %v2737
        %v2739 = vpop.f32.mrb[0].mxu0
        %v2740 = vadd.f32 %v1103, %v2739
        %v2741 = vpop.f32.mrb[0].mxu0
        %v2742 = vadd.f32 %v1103, %v2741
        %2743 = vmatprep.mubr.bf16.mxu0 0
        %2744 = vmatmul.mubr.bf16.gmra.mrb[0].mxu0 %v2507
        %v2745 = vpop.f32.mrb[0].mxu0
        %v2746 = vadd.f32 %v1108, %v2745
        %v2747 = vpop.f32.mrb[0].mxu0
        %v2748 = vadd.f32 %v1108, %v2747
        %v2749 = vpop.f32.mrb[0].mxu0
        %v2750 = vadd.f32 %v1113, %v2749
        %v2751 = vpop.f32.mrb[0].mxu0
        %v2752 = vadd.f32 %v1113, %v2751
        %2753 = vmatprep.mubr.bf16.mxu0 0
        %2754 = vmatmul.mubr.bf16.gmra.mrb[0].mxu0 %v2510
        %v2755 = vpop.f32.mrb[0].mxu0
        %v2756 = vadd.f32 %v1118, %v2755
        %v2757 = vpop.f32.mrb[0].mxu0
        %v2758 = vadd.f32 %v1118, %v2757
        %v2759 = vpop.f32.mrb[0].mxu0
        %v2760 = vadd.f32 %v1123, %v2759
        %v2761 = vpop.f32.mrb[0].mxu0
        %v2762 = vadd.f32 %v1123, %v2761
        %2763 = vmatprep.mubr.bf16.mxu0 0
        %2764 = vmatmul.mubr.bf16.gmra.mrb[0].mxu0 %v2513
        %v2765 = vpop.f32.mrb[0].mxu0
        %v2766 = vadd.f32 %v1128, %v2765
        %v2767 = vpop.f32.mrb[0].mxu0
        %v2768 = vadd.f32 %v1128, %v2767
        %v2769 = vpop.f32.mrb[0].mxu0
        %v2770 = vadd.f32 %v1133, %v2769
        %v2771 = vpop.f32.mrb[0].mxu0
        %v2772 = vadd.f32 %v1133, %v2771
        %2773 = vmatprep.mubr.bf16.mxu0 0
        %2774 = vmatmul.mubr.bf16.gmra.mrb[0].mxu0 %v2516
        %v2775 = vpop.f32.mrb[0].mxu0
        %v2776 = vadd.f32 %v1138, %v2775
        %v2777 = vpop.f32.mrb[0].mxu0
        %v2778 = vadd.f32 %v1138, %v2777
        %v2779 = vpop.f32.mrb[0].mxu0
        %v2780 = vadd.f32 %v1143, %v2779
        %v2781 = vpop.f32.mrb[0].mxu0
        %v2782 = vadd.f32 %v1143, %v2781
        %2783 = vmatprep.mubr.bf16.mxu0 0
        %2784 = vmatmul.mubr.bf16.gmra.mrb[0].mxu0 %v2519
        %v2785 = vpop.f32.mrb[0].mxu0
        %v2786 = vadd.f32 %v1148, %v2785
        %v2787 = vpop.f32.mrb[0].mxu0
        %v2788 = vadd.f32 %v1148, %v2787
        %v2789 = vpop.f32.mrb[0].mxu0
        %v2790 = vadd.f32 %v1153, %v2789
        %v2791 = vpop.f32.mrb[0].mxu0
        %v2792 = vadd.f32 %v1153, %v2791
        %2793 = vdwg.mxu0
        %v2794 = vmul.f32 %v2556, 0.5
        %v2795 = vmul.f32 %v2558, 0.5
        %v2796 = vmul.f32 %v2560, 0.5
        %v2797 = vmul.f32 %v2562, 0.5
        %v2798 = vmul.f32 %v2566, 0.5
        %v2799 = vmul.f32 %v2568, 0.5
        %v2800 = vmul.f32 %v2570, 0.5
        %v2801 = vmul.f32 %v2572, 0.5
        %v2802 = vmul.f32 %v2576, 0.5
        %v2803 = vmul.f32 %v2578, 0.5
        %v2804 = vmul.f32 %v2580, 0.5
        %v2805 = vmul.f32 %v2582, 0.5
        %v2806 = vmul.f32 %v2586, 0.5
        %v2807 = vmul.f32 %v2588, 0.5
        %v2808 = vmul.f32 %v2590, 0.5
        %v2809 = vmul.f32 %v2592, 0.5
        %v2810 = vmul.f32 %v2596, 0.5
        %v2811 = vmul.f32 %v2598, 0.5
        %v2812 = vmul.f32 %v2600, 0.5
        %v2813 = vmul.f32 %v2602, 0.5
        %v2814 = vmul.f32 %v2606, 0.5
        %v2815 = vmul.f32 %v2608, 0.5
        %v2816 = vmul.f32 %v2610, 0.5
        %v2817 = vmul.f32 %v2612, 0.5
        %v2818 = vmul.f32 %v2616, 0.5
        %v2819 = vmul.f32 %v2618, 0.5
        %v2820 = vmul.f32 %v2620, 0.5
        %v2821 = vmul.f32 %v2622, 0.5
        %v2822 = vmul.f32 %v2626, 0.5
        %v2823 = vmul.f32 %v2628, 0.5
        %v2824 = vmul.f32 %v2630, 0.5
        %v2825 = vmul.f32 %v2632, 0.5
        %v2826 = vmul.f32 %v2636, 0.5
        %v2827 = vmul.f32 %v2638, 0.5
        %v2828 = vmul.f32 %v2640, 0.5
        %v2829 = vmul.f32 %v2642, 0.5
        %v2830 = vmul.f32 %v2646, 0.5
        %v2831 = vmul.f32 %v2648, 0.5
        %v2832 = vmul.f32 %v2650, 0.5
        %v2833 = vmul.f32 %v2652, 0.5
        %v2834 = vmul.f32 %v2656, 0.5
        %v2835 = vmul.f32 %v2658, 0.5
        %v2836 = vmul.f32 %v2660, 0.5
        %v2837 = vmul.f32 %v2662, 0.5
        %v2838 = vmul.f32 %v2666, 0.5
        %v2839 = vmul.f32 %v2668, 0.5
        %v2840 = vmul.f32 %v2670, 0.5
        %v2841 = vmul.f32 %v2672, 0.5
        %v2842 = vmul.f32 %v2676, 0.5
        %v2843 = vmul.f32 %v2678, 0.5
        %v2844 = vmul.f32 %v2680, 0.5
        %v2845 = vmul.f32 %v2682, 0.5
        %v2846 = vmul.f32 %v2686, 0.5
        %v2847 = vmul.f32 %v2688, 0.5
        %v2848 = vmul.f32 %v2690, 0.5
        %v2849 = vmul.f32 %v2692, 0.5
        %v2850 = vmul.f32 %v2696, 0.5
        %v2851 = vmul.f32 %v2698, 0.5
        %v2852 = vmul.f32 %v2700, 0.5
        %v2853 = vmul.f32 %v2702, 0.5
        %v2854 = vmul.f32 %v2706, 0.5
        %v2855 = vmul.f32 %v2708, 0.5
        %v2856 = vmul.f32 %v2710, 0.5
        %v2857 = vmul.f32 %v2712, 0.5
        %v2858 = vmul.f32 %v2716, 0.5
        %v2859 = vmul.f32 %v2718, 0.5
        %v2860 = vmul.f32 %v2720, 0.5
        %v2861 = vmul.f32 %v2722, 0.5
        %v2862 = vmul.f32 %v2726, 0.5
        %v2863 = vmul.f32 %v2728, 0.5
        %v2864 = vmul.f32 %v2730, 0.5
        %v2865 = vmul.f32 %v2732, 0.5
        %v2866 = vmul.f32 %v2736, 0.5
        %v2867 = vmul.f32 %v2738, 0.5
        %v2868 = vmul.f32 %v2740, 0.5
        %v2869 = vmul.f32 %v2742, 0.5
        %v2870 = vmul.f32 %v2746, 0.5
        %v2871 = vmul.f32 %v2748, 0.5
        %v2872 = vmul.f32 %v2750, 0.5
        %v2873 = vmul.f32 %v2752, 0.5
        %v2874 = vmul.f32 %v2756, 0.5
        %v2875 = vmul.f32 %v2758, 0.5
        %v2876 = vmul.f32 %v2760, 0.5
        %v2877 = vmul.f32 %v2762, 0.5
        %v2878 = vmul.f32 %v2766, 0.5
        %v2879 = vmul.f32 %v2768, 0.5
        %v2880 = vmul.f32 %v2770, 0.5
        %v2881 = vmul.f32 %v2772, 0.5
        %v2882 = vmul.f32 %v2776, 0.5
        %v2883 = vmul.f32 %v2778, 0.5
        %v2884 = vmul.f32 %v2780, 0.5
        %v2885 = vmul.f32 %v2782, 0.5
        %v2886 = vmul.f32 %v2786, 0.5
        %v2887 = vmul.f32 %v2788, 0.5
        %v2888 = vmul.f32 %v2790, 0.5
        %v2889 = vmul.f32 %v2792, 0.5
        %v2890 = vmul.f32 %v2556, 0.044715
        %v2891 = vmul.f32 %v2558, 0.044715
        %v2892 = vmul.f32 %v2560, 0.044715
        %v2893 = vmul.f32 %v2562, 0.044715
        %v2894 = vmul.f32 %v2566, 0.044715
        %v2895 = vmul.f32 %v2568, 0.044715
        %v2896 = vmul.f32 %v2570, 0.044715
        %v2897 = vmul.f32 %v2572, 0.044715
        %v2898 = vmul.f32 %v2576, 0.044715
        %v2899 = vmul.f32 %v2578, 0.044715
        %v2900 = vmul.f32 %v2580, 0.044715
        %v2901 = vmul.f32 %v2582, 0.044715
        %v2902 = vmul.f32 %v2586, 0.044715
        %v2903 = vmul.f32 %v2588, 0.044715
        %v2904 = vmul.f32 %v2590, 0.044715
        %v2905 = vmul.f32 %v2592, 0.044715
        %v2906 = vmul.f32 %v2596, 0.044715
        %v2907 = vmul.f32 %v2598, 0.044715
        %v2908 = vmul.f32 %v2600, 0.044715
        %v2909 = vmul.f32 %v2602, 0.044715
        %v2910 = vmul.f32 %v2606, 0.044715
        %v2911 = vmul.f32 %v2608, 0.044715
        %v2912 = vmul.f32 %v2610, 0.044715
        %v2913 = vmul.f32 %v2612, 0.044715
        %v2914 = vmul.f32 %v2616, 0.044715
        %v2915 = vmul.f32 %v2618, 0.044715
        %v2916 = vmul.f32 %v2620, 0.044715
        %v2917 = vmul.f32 %v2622, 0.044715
        %v2918 = vmul.f32 %v2626, 0.044715
        %v2919 = vmul.f32 %v2628, 0.044715
        %v2920 = vmul.f32 %v2630, 0.044715
        %v2921 = vmul.f32 %v2632, 0.044715
        %v2922 = vmul.f32 %v2636, 0.044715
        %v2923 = vmul.f32 %v2638, 0.044715
        %v2924 = vmul.f32 %v2640, 0.044715
        %v2925 = vmul.f32 %v2642, 0.044715
        %v2926 = vmul.f32 %v2646, 0.044715
        %v2927 = vmul.f32 %v2648, 0.044715
        %v2928 = vmul.f32 %v2650, 0.044715
        %v2929 = vmul.f32 %v2652, 0.044715
        %v2930 = vmul.f32 %v2656, 0.044715
        %v2931 = vmul.f32 %v2658, 0.044715
        %v2932 = vmul.f32 %v2660, 0.044715
        %v2933 = vmul.f32 %v2662, 0.044715
        %v2934 = vmul.f32 %v2666, 0.044715
        %v2935 = vmul.f32 %v2668, 0.044715
        %v2936 = vmul.f32 %v2670, 0.044715
        %v2937 = vmul.f32 %v2672, 0.044715
        %v2938 = vmul.f32 %v2676, 0.044715
        %v2939 = vmul.f32 %v2678, 0.044715
        %v2940 = vmul.f32 %v2680, 0.044715
        %v2941 = vmul.f32 %v2682, 0.044715
        %v2942 = vmul.f32 %v2686, 0.044715
        %v2943 = vmul.f32 %v2688, 0.044715
        %v2944 = vmul.f32 %v2690, 0.044715
        %v2945 = vmul.f32 %v2692, 0.044715
        %v2946 = vmul.f32 %v2696, 0.044715
        %v2947 = vmul.f32 %v2698, 0.044715
        %v2948 = vmul.f32 %v2700, 0.044715
        %v2949 = vmul.f32 %v2702, 0.044715
        %v2950 = vmul.f32 %v2706, 0.044715
        %v2951 = vmul.f32 %v2708, 0.044715
        %v2952 = vmul.f32 %v2710, 0.044715
        %v2953 = vmul.f32 %v2712, 0.044715
        %v2954 = vmul.f32 %v2716, 0.044715
        %v2955 = vmul.f32 %v2718, 0.044715
        %v2956 = vmul.f32 %v2720, 0.044715
        %v2957 = vmul.f32 %v2722, 0.044715
        %v2958 = vmul.f32 %v2726, 0.044715
        %v2959 = vmul.f32 %v2728, 0.044715
        %v2960 = vmul.f32 %v2730, 0.044715
        %v2961 = vmul.f32 %v2732, 0.044715
        %v2962 = vmul.f32 %v2736, 0.044715
        %v2963 = vmul.f32 %v2738, 0.044715
        %v2964 = vmul.f32 %v2740, 0.044715
        %v2965 = vmul.f32 %v2742, 0.044715
        %v2966 = vmul.f32 %v2746, 0.044715
        %v2967 = vmul.f32 %v2748, 0.044715
        %v2968 = vmul.f32 %v2750, 0.044715
        %v2969 = vmul.f32 %v2752, 0.044715
        %v2970 = vmul.f32 %v2756, 0.044715
        %v2971 = vmul.f32 %v2758, 0.044715
        %v2972 = vmul.f32 %v2760, 0.044715
        %v2973 = vmul.f32 %v2762, 0.044715
        %v2974 = vmul.f32 %v2766, 0.044715
        %v2975 = vmul.f32 %v2768, 0.044715
        %v2976 = vmul.f32 %v2770, 0.044715
        %v2977 = vmul.f32 %v2772, 0.044715
        %v2978 = vmul.f32 %v2776, 0.044715
        %v2979 = vmul.f32 %v2778, 0.044715
        %v2980 = vmul.f32 %v2780, 0.044715
        %v2981 = vmul.f32 %v2782, 0.044715
        %v2982 = vmul.f32 %v2786, 0.044715
        %v2983 = vmul.f32 %v2788, 0.044715
        %v2984 = vmul.f32 %v2790, 0.044715
        %v2985 = vmul.f32 %v2792, 0.044715
        %v2986 = vmul.f32 %v2890, %v2556
        %v2987 = vmul.f32 %v2891, %v2558
        %v2988 = vmul.f32 %v2892, %v2560
        %v2989 = vmul.f32 %v2893, %v2562
        %v2990 = vmul.f32 %v2894, %v2566
        %v2991 = vmul.f32 %v2895, %v2568
        %v2992 = vmul.f32 %v2896, %v2570
        %v2993 = vmul.f32 %v2897, %v2572
        %v2994 = vmul.f32 %v2898, %v2576
        %v2995 = vmul.f32 %v2899, %v2578
        %v2996 = vmul.f32 %v2900, %v2580
        %v2997 = vmul.f32 %v2901, %v2582
        %v2998 = vmul.f32 %v2902, %v2586
        %v2999 = vmul.f32 %v2903, %v2588
        %v3000 = vmul.f32 %v2904, %v2590
        %v3001 = vmul.f32 %v2905, %v2592
        %v3002 = vmul.f32 %v2906, %v2596
        %v3003 = vmul.f32 %v2907, %v2598
        %v3004 = vmul.f32 %v2908, %v2600
        %v3005 = vmul.f32 %v2909, %v2602
        %v3006 = vmul.f32 %v2910, %v2606
        %v3007 = vmul.f32 %v2911, %v2608
        %v3008 = vmul.f32 %v2912, %v2610
        %v3009 = vmul.f32 %v2913, %v2612
        %v3010 = vmul.f32 %v2914, %v2616
        %v3011 = vmul.f32 %v2915, %v2618
        %v3012 = vmul.f32 %v2916, %v2620
        %v3013 = vmul.f32 %v2917, %v2622
        %v3014 = vmul.f32 %v2918, %v2626
        %v3015 = vmul.f32 %v2919, %v2628
        %v3016 = vmul.f32 %v2920, %v2630
        %v3017 = vmul.f32 %v2921, %v2632
        %v3018 = vmul.f32 %v2922, %v2636
        %v3019 = vmul.f32 %v2923, %v2638
        %v3020 = vmul.f32 %v2924, %v2640
        %v3021 = vmul.f32 %v2925, %v2642
        %v3022 = vmul.f32 %v2926, %v2646
        %v3023 = vmul.f32 %v2927, %v2648
        %v3024 = vmul.f32 %v2928, %v2650
        %v3025 = vmul.f32 %v2929, %v2652
        %v3026 = vmul.f32 %v2930, %v2656
        %v3027 = vmul.f32 %v2931, %v2658
        %v3028 = vmul.f32 %v2932, %v2660
        %v3029 = vmul.f32 %v2933, %v2662
        %v3030 = vmul.f32 %v2934, %v2666
        %v3031 = vmul.f32 %v2935, %v2668
        %v3032 = vmul.f32 %v2936, %v2670
        %v3033 = vmul.f32 %v2937, %v2672
        %v3034 = vmul.f32 %v2938, %v2676
        %v3035 = vmul.f32 %v2939, %v2678
        %v3036 = vmul.f32 %v2940, %v2680
        %v3037 = vmul.f32 %v2941, %v2682
        %v3038 = vmul.f32 %v2942, %v2686
        %v3039 = vmul.f32 %v2943, %v2688
        %v3040 = vmul.f32 %v2944, %v2690
        %v3041 = vmul.f32 %v2945, %v2692
        %v3042 = vmul.f32 %v2946, %v2696
        %v3043 = vmul.f32 %v2947, %v2698
        %v3044 = vmul.f32 %v2948, %v2700
        %v3045 = vmul.f32 %v2949, %v2702
        %v3046 = vmul.f32 %v2950, %v2706
        %v3047 = vmul.f32 %v2951, %v2708
        %v3048 = vmul.f32 %v2952, %v2710
        %v3049 = vmul.f32 %v2953, %v2712
        %v3050 = vmul.f32 %v2954, %v2716
        %v3051 = vmul.f32 %v2955, %v2718
        %v3052 = vmul.f32 %v2956, %v2720
        %v3053 = vmul.f32 %v2957, %v2722
        %v3054 = vmul.f32 %v2958, %v2726
        %v3055 = vmul.f32 %v2959, %v2728
        %v3056 = vmul.f32 %v2960, %v2730
        %v3057 = vmul.f32 %v2961, %v2732
        %v3058 = vmul.f32 %v2962, %v2736
        %v3059 = vmul.f32 %v2963, %v2738
        %v3060 = vmul.f32 %v2964, %v2740
        %v3061 = vmul.f32 %v2965, %v2742
        %v3062 = vmul.f32 %v2966, %v2746
        %v3063 = vmul.f32 %v2967, %v2748
        %v3064 = vmul.f32 %v2968, %v2750
        %v3065 = vmul.f32 %v2969, %v2752
        %v3066 = vmul.f32 %v2970, %v2756
        %v3067 = vmul.f32 %v2971, %v2758
        %v3068 = vmul.f32 %v2972, %v2760
        %v3069 = vmul.f32 %v2973, %v2762
        %v3070 = vmul.f32 %v2974, %v2766
        %v3071 = vmul.f32 %v2975, %v2768
        %v3072 = vmul.f32 %v2976, %v2770
        %v3073 = vmul.f32 %v2977, %v2772
        %v3074 = vmul.f32 %v2978, %v2776
        %v3075 = vmul.f32 %v2979, %v2778
        %v3076 = vmul.f32 %v2980, %v2780
        %v3077 = vmul.f32 %v2981, %v2782
        %v3078 = vmul.f32 %v2982, %v2786
        %v3079 = vmul.f32 %v2983, %v2788
        %v3080 = vmul.f32 %v2984, %v2790
        %v3081 = vmul.f32 %v2985, %v2792
        %v3082 = vmul.f32 %v2986, %v2556
        %v3083 = vmul.f32 %v2987, %v2558
        %v3084 = vmul.f32 %v2988, %v2560
        %v3085 = vmul.f32 %v2989, %v2562
        %v3086 = vmul.f32 %v2990, %v2566
        %v3087 = vmul.f32 %v2991, %v2568
        %v3088 = vmul.f32 %v2992, %v2570
        %v3089 = vmul.f32 %v2993, %v2572
        %v3090 = vmul.f32 %v2994, %v2576
        %v3091 = vmul.f32 %v2995, %v2578
        %v3092 = vmul.f32 %v2996, %v2580
        %v3093 = vmul.f32 %v2997, %v2582
        %v3094 = vmul.f32 %v2998, %v2586
        %v3095 = vmul.f32 %v2999, %v2588
        %v3096 = vmul.f32 %v3000, %v2590
        %v3097 = vmul.f32 %v3001, %v2592
        %v3098 = vmul.f32 %v3002, %v2596
        %v3099 = vmul.f32 %v3003, %v2598
        %v3100 = vmul.f32 %v3004, %v2600
        %v3101 = vmul.f32 %v3005, %v2602
        %v3102 = vmul.f32 %v3006, %v2606
        %v3103 = vmul.f32 %v3007, %v2608
        %v3104 = vmul.f32 %v3008, %v2610
        %v3105 = vmul.f32 %v3009, %v2612
        %v3106 = vmul.f32 %v3010, %v2616
        %v3107 = vmul.f32 %v3011, %v2618
        %v3108 = vmul.f32 %v3012, %v2620
        %v3109 = vmul.f32 %v3013, %v2622
        %v3110 = vmul.f32 %v3014, %v2626
        %v3111 = vmul.f32 %v3015, %v2628
        %v3112 = vmul.f32 %v3016, %v2630
        %v3113 = vmul.f32 %v3017, %v2632
        %v3114 = vmul.f32 %v3018, %v2636
        %v3115 = vmul.f32 %v3019, %v2638
        %v3116 = vmul.f32 %v3020, %v2640
        %v3117 = vmul.f32 %v3021, %v2642
        %v3118 = vmul.f32 %v3022, %v2646
        %v3119 = vmul.f32 %v3023, %v2648
        %v3120 = vmul.f32 %v3024, %v2650
        %v3121 = vmul.f32 %v3025, %v2652
        %v3122 = vmul.f32 %v3026, %v2656
        %v3123 = vmul.f32 %v3027, %v2658
        %v3124 = vmul.f32 %v3028, %v2660
        %v3125 = vmul.f32 %v3029, %v2662
        %v3126 = vmul.f32 %v3030, %v2666
        %v3127 = vmul.f32 %v3031, %v2668
        %v3128 = vmul.f32 %v3032, %v2670
        %v3129 = vmul.f32 %v3033, %v2672
        %v3130 = vmul.f32 %v3034, %v2676
        %v3131 = vmul.f32 %v3035, %v2678
        %v3132 = vmul.f32 %v3036, %v2680
        %v3133 = vmul.f32 %v3037, %v2682
        %v3134 = vmul.f32 %v3038, %v2686
        %v3135 = vmul.f32 %v3039, %v2688
        %v3136 = vmul.f32 %v3040, %v2690
        %v3137 = vmul.f32 %v3041, %v2692
        %v3138 = vmul.f32 %v3042, %v2696
        %v3139 = vmul.f32 %v3043, %v2698
        %v3140 = vmul.f32 %v3044, %v2700
        %v3141 = vmul.f32 %v3045, %v2702
        %v3142 = vmul.f32 %v3046, %v2706
        %v3143 = vmul.f32 %v3047, %v2708
        %v3144 = vmul.f32 %v3048, %v2710
        %v3145 = vmul.f32 %v3049, %v2712
        %v3146 = vmul.f32 %v3050, %v2716
        %v3147 = vmul.f32 %v3051, %v2718
        %v3148 = vmul.f32 %v3052, %v2720
        %v3149 = vmul.f32 %v3053, %v2722
        %v3150 = vmul.f32 %v3054, %v2726
        %v3151 = vmul.f32 %v3055, %v2728
        %v3152 = vmul.f32 %v3056, %v2730
        %v3153 = vmul.f32 %v3057, %v2732
        %v3154 = vmul.f32 %v3058, %v2736
        %v3155 = vmul.f32 %v3059, %v2738
        %v3156 = vmul.f32 %v3060, %v2740
        %v3157 = vmul.f32 %v3061, %v2742
        %v3158 = vmul.f32 %v3062, %v2746
        %v3159 = vmul.f32 %v3063, %v2748
        %v3160 = vmul.f32 %v3064, %v2750
        %v3161 = vmul.f32 %v3065, %v2752
        %v3162 = vmul.f32 %v3066, %v2756
        %v3163 = vmul.f32 %v3067, %v2758
        %v3164 = vmul.f32 %v3068, %v2760
        %v3165 = vmul.f32 %v3069, %v2762
        %v3166 = vmul.f32 %v3070, %v2766
        %v3167 = vmul.f32 %v3071, %v2768
        %v3168 = vmul.f32 %v3072, %v2770
        %v3169 = vmul.f32 %v3073, %v2772
        %v3170 = vmul.f32 %v3074, %v2776
        %v3171 = vmul.f32 %v3075, %v2778
        %v3172 = vmul.f32 %v3076, %v2780
        %v3173 = vmul.f32 %v3077, %v2782
        %v3174 = vmul.f32 %v3078, %v2786
        %v3175 = vmul.f32 %v3079, %v2788
        %v3176 = vmul.f32 %v3080, %v2790
        %v3177 = vmul.f32 %v3081, %v2792
        %v3178 = vadd.f32 %v2556, %v3082
        %v3179 = vadd.f32 %v2558, %v3083
        %v3180 = vadd.f32 %v2560, %v3084
        %v3181 = vadd.f32 %v2562, %v3085
        %v3182 = vadd.f32 %v2566, %v3086
        %v3183 = vadd.f32 %v2568, %v3087
        %v3184 = vadd.f32 %v2570, %v3088
        %v3185 = vadd.f32 %v2572, %v3089
        %v3186 = vadd.f32 %v2576, %v3090
        %v3187 = vadd.f32 %v2578, %v3091
        %v3188 = vadd.f32 %v2580, %v3092
        %v3189 = vadd.f32 %v2582, %v3093
        %v3190 = vadd.f32 %v2586, %v3094
        %v3191 = vadd.f32 %v2588, %v3095
        %v3192 = vadd.f32 %v2590, %v3096
        %v3193 = vadd.f32 %v2592, %v3097
        %v3194 = vadd.f32 %v2596, %v3098
        %v3195 = vadd.f32 %v2598, %v3099
        %v3196 = vadd.f32 %v2600, %v3100
        %v3197 = vadd.f32 %v2602, %v3101
        %v3198 = vadd.f32 %v2606, %v3102
        %v3199 = vadd.f32 %v2608, %v3103
        %v3200 = vadd.f32 %v2610, %v3104
        %v3201 = vadd.f32 %v2612, %v3105
        %v3202 = vadd.f32 %v2616, %v3106
        %v3203 = vadd.f32 %v2618, %v3107
        %v3204 = vadd.f32 %v2620, %v3108
        %v3205 = vadd.f32 %v2622, %v3109
        %v3206 = vadd.f32 %v2626, %v3110
        %v3207 = vadd.f32 %v2628, %v3111
        %v3208 = vadd.f32 %v2630, %v3112
        %v3209 = vadd.f32 %v2632, %v3113
        %v3210 = vadd.f32 %v2636, %v3114
        %v3211 = vadd.f32 %v2638, %v3115
        %v3212 = vadd.f32 %v2640, %v3116
        %v3213 = vadd.f32 %v2642, %v3117
        %v3214 = vadd.f32 %v2646, %v3118
        %v3215 = vadd.f32 %v2648, %v3119
        %v3216 = vadd.f32 %v2650, %v3120
        %v3217 = vadd.f32 %v2652, %v3121
        %v3218 = vadd.f32 %v2656, %v3122
        %v3219 = vadd.f32 %v2658, %v3123
        %v3220 = vadd.f32 %v2660, %v3124
        %v3221 = vadd.f32 %v2662, %v3125
        %v3222 = vadd.f32 %v2666, %v3126
        %v3223 = vadd.f32 %v2668, %v3127
        %v3224 = vadd.f32 %v2670, %v3128
        %v3225 = vadd.f32 %v2672, %v3129
        %v3226 = vadd.f32 %v2676, %v3130
        %v3227 = vadd.f32 %v2678, %v3131
        %v3228 = vadd.f32 %v2680, %v3132
        %v3229 = vadd.f32 %v2682, %v3133
        %v3230 = vadd.f32 %v2686, %v3134
        %v3231 = vadd.f32 %v2688, %v3135
        %v3232 = vadd.f32 %v2690, %v3136
        %v3233 = vadd.f32 %v2692, %v3137
        %v3234 = vadd.f32 %v2696, %v3138
        %v3235 = vadd.f32 %v2698, %v3139
        %v3236 = vadd.f32 %v2700, %v3140
        %v3237 = vadd.f32 %v2702, %v3141
        %v3238 = vadd.f32 %v2706, %v3142
        %v3239 = vadd.f32 %v2708, %v3143
        %v3240 = vadd.f32 %v2710, %v3144
        %v3241 = vadd.f32 %v2712, %v3145
        %v3242 = vadd.f32 %v2716, %v3146
        %v3243 = vadd.f32 %v2718, %v3147
        %v3244 = vadd.f32 %v2720, %v3148
        %v3245 = vadd.f32 %v2722, %v3149
        %v3246 = vadd.f32 %v2726, %v3150
        %v3247 = vadd.f32 %v2728, %v3151
        %v3248 = vadd.f32 %v2730, %v3152
        %v3249 = vadd.f32 %v2732, %v3153
        %v3250 = vadd.f32 %v2736, %v3154
        %v3251 = vadd.f32 %v2738, %v3155
        %v3252 = vadd.f32 %v2740, %v3156
        %v3253 = vadd.f32 %v2742, %v3157
        %v3254 = vadd.f32 %v2746, %v3158
        %v3255 = vadd.f32 %v2748, %v3159
        %v3256 = vadd.f32 %v2750, %v3160
        %v3257 = vadd.f32 %v2752, %v3161
        %v3258 = vadd.f32 %v2756, %v3162
        %v3259 = vadd.f32 %v2758, %v3163
        %v3260 = vadd.f32 %v2760, %v3164
        %v3261 = vadd.f32 %v2762, %v3165
        %v3262 = vadd.f32 %v2766, %v3166
        %v3263 = vadd.f32 %v2768, %v3167
        %v3264 = vadd.f32 %v2770, %v3168
        %v3265 = vadd.f32 %v2772, %v3169
        %v3266 = vadd.f32 %v2776, %v3170
        %v3267 = vadd.f32 %v2778, %v3171
        %v3268 = vadd.f32 %v2780, %v3172
        %v3269 = vadd.f32 %v2782, %v3173
        %v3270 = vadd.f32 %v2786, %v3174
        %v3271 = vadd.f32 %v2788, %v3175
        %v3272 = vadd.f32 %v2790, %v3176
        %v3273 = vadd.f32 %v2792, %v3177
        %v3274 = vmul.f32 %v3178, 0.7978846
        %v3275 = vmul.f32 %v3179, 0.7978846
        %v3276 = vmul.f32 %v3180, 0.7978846
        %v3277 = vmul.f32 %v3181, 0.7978846
        %v3278 = vmul.f32 %v3182, 0.7978846
        %v3279 = vmul.f32 %v3183, 0.7978846
        %v3280 = vmul.f32 %v3184, 0.7978846
        %v3281 = vmul.f32 %v3185, 0.7978846
        %v3282 = vmul.f32 %v3186, 0.7978846
        %v3283 = vmul.f32 %v3187, 0.7978846
        %v3284 = vmul.f32 %v3188, 0.7978846
        %v3285 = vmul.f32 %v3189, 0.7978846
        %v3286 = vmul.f32 %v3190, 0.7978846
        %v3287 = vmul.f32 %v3191, 0.7978846
        %v3288 = vmul.f32 %v3192, 0.7978846
        %v3289 = vmul.f32 %v3193, 0.7978846
        %v3290 = vmul.f32 %v3194, 0.7978846
        %v3291 = vmul.f32 %v3195, 0.7978846
        %v3292 = vmul.f32 %v3196, 0.7978846
        %v3293 = vmul.f32 %v3197, 0.7978846
        %v3294 = vmul.f32 %v3198, 0.7978846
        %v3295 = vmul.f32 %v3199, 0.7978846
        %v3296 = vmul.f32 %v3200, 0.7978846
        %v3297 = vmul.f32 %v3201, 0.7978846
        %v3298 = vmul.f32 %v3202, 0.7978846
        %v3299 = vmul.f32 %v3203, 0.7978846
        %v3300 = vmul.f32 %v3204, 0.7978846
        %v3301 = vmul.f32 %v3205, 0.7978846
        %v3302 = vmul.f32 %v3206, 0.7978846
        %v3303 = vmul.f32 %v3207, 0.7978846
        %v3304 = vmul.f32 %v3208, 0.7978846
        %v3305 = vmul.f32 %v3209, 0.7978846
        %v3306 = vmul.f32 %v3210, 0.7978846
        %v3307 = vmul.f32 %v3211, 0.7978846
        %v3308 = vmul.f32 %v3212, 0.7978846
        %v3309 = vmul.f32 %v3213, 0.7978846
        %v3310 = vmul.f32 %v3214, 0.7978846
        %v3311 = vmul.f32 %v3215, 0.7978846
        %v3312 = vmul.f32 %v3216, 0.7978846
        %v3313 = vmul.f32 %v3217, 0.7978846
        %v3314 = vmul.f32 %v3218, 0.7978846
        %v3315 = vmul.f32 %v3219, 0.7978846
        %v3316 = vmul.f32 %v3220, 0.7978846
        %v3317 = vmul.f32 %v3221, 0.7978846
        %v3318 = vmul.f32 %v3222, 0.7978846
        %v3319 = vmul.f32 %v3223, 0.7978846
        %v3320 = vmul.f32 %v3224, 0.7978846
        %v3321 = vmul.f32 %v3225, 0.7978846
        %v3322 = vmul.f32 %v3226, 0.7978846
        %v3323 = vmul.f32 %v3227, 0.7978846
        %v3324 = vmul.f32 %v3228, 0.7978846
        %v3325 = vmul.f32 %v3229, 0.7978846
        %v3326 = vmul.f32 %v3230, 0.7978846
        %v3327 = vmul.f32 %v3231, 0.7978846
        %v3328 = vmul.f32 %v3232, 0.7978846
        %v3329 = vmul.f32 %v3233, 0.7978846
        %v3330 = vmul.f32 %v3234, 0.7978846
        %v3331 = vmul.f32 %v3235, 0.7978846
        %v3332 = vmul.f32 %v3236, 0.7978846
        %v3333 = vmul.f32 %v3237, 0.7978846
        %v3334 = vmul.f32 %v3238, 0.7978846
        %v3335 = vmul.f32 %v3239, 0.7978846
        %v3336 = vmul.f32 %v3240, 0.7978846
        %v3337 = vmul.f32 %v3241, 0.7978846
        %v3338 = vmul.f32 %v3242, 0.7978846
        %v3339 = vmul.f32 %v3243, 0.7978846
        %v3340 = vmul.f32 %v3244, 0.7978846
        %v3341 = vmul.f32 %v3245, 0.7978846
        %v3342 = vmul.f32 %v3246, 0.7978846
        %v3343 = vmul.f32 %v3247, 0.7978846
        %v3344 = vmul.f32 %v3248, 0.7978846
        %v3345 = vmul.f32 %v3249, 0.7978846
        %v3346 = vmul.f32 %v3250, 0.7978846
        %v3347 = vmul.f32 %v3251, 0.7978846
        %v3348 = vmul.f32 %v3252, 0.7978846
        %v3349 = vmul.f32 %v3253, 0.7978846
        %v3350 = vmul.f32 %v3254, 0.7978846
        %v3351 = vmul.f32 %v3255, 0.7978846
        %v3352 = vmul.f32 %v3256, 0.7978846
        %v3353 = vmul.f32 %v3257, 0.7978846
        %v3354 = vmul.f32 %v3258, 0.7978846
        %v3355 = vmul.f32 %v3259, 0.7978846
        %v3356 = vmul.f32 %v3260, 0.7978846
        %v3357 = vmul.f32 %v3261, 0.7978846
        %v3358 = vmul.f32 %v3262, 0.7978846
        %v3359 = vmul.f32 %v3263, 0.7978846
        %v3360 = vmul.f32 %v3264, 0.7978846
        %v3361 = vmul.f32 %v3265, 0.7978846
        %v3362 = vmul.f32 %v3266, 0.7978846
        %v3363 = vmul.f32 %v3267, 0.7978846
        %v3364 = vmul.f32 %v3268, 0.7978846
        %v3365 = vmul.f32 %v3269, 0.7978846
        %v3366 = vmul.f32 %v3270, 0.7978846
        %v3367 = vmul.f32 %v3271, 0.7978846
        %v3368 = vmul.f32 %v3272, 0.7978846
        %v3369 = vmul.f32 %v3273, 0.7978846
        %v3370 = vtanh.pop %v3274
        %v3371 = vtanh.pop %v3275
        %v3372 = vtanh.pop %v3276
        %v3373 = vtanh.pop %v3277
        %v3374 = vtanh.pop %v3278
        %v3375 = vtanh.pop %v3279
        %v3376 = vtanh.pop %v3280
        %v3377 = vtanh.pop %v3281
        %v3378 = vtanh.pop %v3282
        %v3379 = vtanh.pop %v3283
        %v3380 = vtanh.pop %v3284
        %v3381 = vtanh.pop %v3285
        %v3382 = vtanh.pop %v3286
        %v3383 = vtanh.pop %v3287
        %v3384 = vtanh.pop %v3288
        %v3385 = vtanh.pop %v3289
        %v3386 = vtanh.pop %v3290
        %v3387 = vtanh.pop %v3291
        %v3388 = vtanh.pop %v3292
        %v3389 = vtanh.pop %v3293
        %v3390 = vtanh.pop %v3294
        %v3391 = vtanh.pop %v3295
        %v3392 = vtanh.pop %v3296
        %v3393 = vtanh.pop %v3297
        %v3394 = vtanh.pop %v3298
        %v3395 = vtanh.pop %v3299
        %v3396 = vtanh.pop %v3300
        %v3397 = vtanh.pop %v3301
        %v3398 = vtanh.pop %v3302
        %v3399 = vtanh.pop %v3303
        %v3400 = vtanh.pop %v3304
        %v3401 = vtanh.pop %v3305
        %v3402 = vtanh.pop %v3306
        %v3403 = vtanh.pop %v3307
        %v3404 = vtanh.pop %v3308
        %v3405 = vtanh.pop %v3309
        %v3406 = vtanh.pop %v3310
        %v3407 = vtanh.pop %v3311
        %v3408 = vtanh.pop %v3312
        %v3409 = vtanh.pop %v3313
        %v3410 = vtanh.pop %v3314
        %v3411 = vtanh.pop %v3315
        %v3412 = vtanh.pop %v3316
        %v3413 = vtanh.pop %v3317
        %v3414 = vtanh.pop %v3318
        %v3415 = vtanh.pop %v3319
        %v3416 = vtanh.pop %v3320
        %v3417 = vtanh.pop %v3321
        %v3418 = vtanh.pop %v3322
        %v3419 = vtanh.pop %v3323
        %v3420 = vtanh.pop %v3324
        %v3421 = vtanh.pop %v3325
        %v3422 = vtanh.pop %v3326
        %v3423 = vtanh.pop %v3327
        %v3424 = vtanh.pop %v3328
        %v3425 = vtanh.pop %v3329
        %v3426 = vtanh.pop %v3330
        %v3427 = vtanh.pop %v3331
        %v3428 = vtanh.pop %v3332
        %v3429 = vtanh.pop %v3333
        %v3430 = vtanh.pop %v3334
        %v3431 = vtanh.pop %v3335
        %v3432 = vtanh.pop %v3336
        %v3433 = vtanh.pop %v3337
        %v3434 = vtanh.pop %v3338
        %v3435 = vtanh.pop %v3339
        %v3436 = vtanh.pop %v3340
        %v3437 = vtanh.pop %v3341
        %v3438 = vtanh.pop %v3342
        %v3439 = vtanh.pop %v3343
        %v3440 = vtanh.pop %v3344
        %v3441 = vtanh.pop %v3345
        %v3442 = vtanh.pop %v3346
        %v3443 = vtanh.pop %v3347
        %v3444 = vtanh.pop %v3348
        %v3445 = vtanh.pop %v3349
        %v3446 = vtanh.pop %v3350
        %v3447 = vtanh.pop %v3351
        %v3448 = vtanh.pop %v3352
        %v3449 = vtanh.pop %v3353
        %v3450 = vtanh.pop %v3354
        %v3451 = vtanh.pop %v3355
        %v3452 = vtanh.pop %v3356
        %v3453 = vtanh.pop %v3357
        %v3454 = vtanh.pop %v3358
        %v3455 = vtanh.pop %v3359
        %v3456 = vtanh.pop %v3360
        %v3457 = vtanh.pop %v3361
        %v3458 = vtanh.pop %v3362
        %v3459 = vtanh.pop %v3363
        %v3460 = vtanh.pop %v3364
        %v3461 = vtanh.pop %v3365
        %v3462 = vtanh.pop %v3366
        %v3463 = vtanh.pop %v3367
        %v3464 = vtanh.pop %v3368
        %v3465 = vtanh.pop %v3369
        %v3466 = vadd.f32 %v3370, 1.0
        %v3467 = vadd.f32 %v3371, 1.0
        %v3468 = vadd.f32 %v3372, 1.0
        %v3469 = vadd.f32 %v3373, 1.0
        %v3470 = vadd.f32 %v3374, 1.0
        %v3471 = vadd.f32 %v3375, 1.0
        %v3472 = vadd.f32 %v3376, 1.0
        %v3473 = vadd.f32 %v3377, 1.0
        %v3474 = vadd.f32 %v3378, 1.0
        %v3475 = vadd.f32 %v3379, 1.0
        %v3476 = vadd.f32 %v3380, 1.0
        %v3477 = vadd.f32 %v3381, 1.0
        %v3478 = vadd.f32 %v3382, 1.0
        %v3479 = vadd.f32 %v3383, 1.0
        %v3480 = vadd.f32 %v3384, 1.0
        %v3481 = vadd.f32 %v3385, 1.0
        %v3482 = vadd.f32 %v3386, 1.0
        %v3483 = vadd.f32 %v3387, 1.0
        %v3484 = vadd.f32 %v3388, 1.0
        %v3485 = vadd.f32 %v3389, 1.0
        %v3486 = vadd.f32 %v3390, 1.0
        %v3487 = vadd.f32 %v3391, 1.0
        %v3488 = vadd.f32 %v3392, 1.0
        %v3489 = vadd.f32 %v3393, 1.0
        %v3490 = vadd.f32 %v3394, 1.0
        %v3491 = vadd.f32 %v3395, 1.0
        %v3492 = vadd.f32 %v3396, 1.0
        %v3493 = vadd.f32 %v3397, 1.0
        %v3494 = vadd.f32 %v3398, 1.0
        %v3495 = vadd.f32 %v3399, 1.0
        %v3496 = vadd.f32 %v3400, 1.0
        %v3497 = vadd.f32 %v3401, 1.0
        %v3498 = vadd.f32 %v3402, 1.0
        %v3499 = vadd.f32 %v3403, 1.0
        %v3500 = vadd.f32 %v3404, 1.0
        %v3501 = vadd.f32 %v3405, 1.0
        %v3502 = vadd.f32 %v3406, 1.0
        %v3503 = vadd.f32 %v3407, 1.0
        %v3504 = vadd.f32 %v3408, 1.0
        %v3505 = vadd.f32 %v3409, 1.0
        %v3506 = vadd.f32 %v3410, 1.0
        %v3507 = vadd.f32 %v3411, 1.0
        %v3508 = vadd.f32 %v3412, 1.0
        %v3509 = vadd.f32 %v3413, 1.0
        %v3510 = vadd.f32 %v3414, 1.0
        %v3511 = vadd.f32 %v3415, 1.0
        %v3512 = vadd.f32 %v3416, 1.0
        %v3513 = vadd.f32 %v3417, 1.0
        %v3514 = vadd.f32 %v3418, 1.0
        %v3515 = vadd.f32 %v3419, 1.0
        %v3516 = vadd.f32 %v3420, 1.0
        %v3517 = vadd.f32 %v3421, 1.0
        %v3518 = vadd.f32 %v3422, 1.0
        %v3519 = vadd.f32 %v3423, 1.0
        %v3520 = vadd.f32 %v3424, 1.0
        %v3521 = vadd.f32 %v3425, 1.0
        %v3522 = vadd.f32 %v3426, 1.0
        %v3523 = vadd.f32 %v3427, 1.0
        %v3524 = vadd.f32 %v3428, 1.0
        %v3525 = vadd.f32 %v3429, 1.0
        %v3526 = vadd.f32 %v3430, 1.0
        %v3527 = vadd.f32 %v3431, 1.0
        %v3528 = vadd.f32 %v3432, 1.0
        %v3529 = vadd.f32 %v3433, 1.0
        %v3530 = vadd.f32 %v3434, 1.0
        %v3531 = vadd.f32 %v3435, 1.0
        %v3532 = vadd.f32 %v3436, 1.0
        %v3533 = vadd.f32 %v3437, 1.0
        %v3534 = vadd.f32 %v3438, 1.0
        %v3535 = vadd.f32 %v3439, 1.0
        %v3536 = vadd.f32 %v3440, 1.0
        %v3537 = vadd.f32 %v3441, 1.0
        %v3538 = vadd.f32 %v3442, 1.0
        %v3539 = vadd.f32 %v3443, 1.0
        %v3540 = vadd.f32 %v3444, 1.0
        %v3541 = vadd.f32 %v3445, 1.0
        %v3542 = vadd.f32 %v3446, 1.0
        %v3543 = vadd.f32 %v3447, 1.0
        %v3544 = vadd.f32 %v3448, 1.0
        %v3545 = vadd.f32 %v3449, 1.0
        %v3546 = vadd.f32 %v3450, 1.0
        %v3547 = vadd.f32 %v3451, 1.0
        %v3548 = vadd.f32 %v3452, 1.0
        %v3549 = vadd.f32 %v3453, 1.0
        %v3550 = vadd.f32 %v3454, 1.0
        %v3551 = vadd.f32 %v3455, 1.0
        %v3552 = vadd.f32 %v3456, 1.0
        %v3553 = vadd.f32 %v3457, 1.0
        %v3554 = vadd.f32 %v3458, 1.0
        %v3555 = vadd.f32 %v3459, 1.0
        %v3556 = vadd.f32 %v3460, 1.0
        %v3557 = vadd.f32 %v3461, 1.0
        %v3558 = vadd.f32 %v3462, 1.0
        %v3559 = vadd.f32 %v3463, 1.0
        %v3560 = vadd.f32 %v3464, 1.0
        %v3561 = vadd.f32 %v3465, 1.0
        %v3562 = vmul.f32 %v2794, %v3466
        %v3563 = vmul.f32 %v2795, %v3467
        %v3564 = vmul.f32 %v2796, %v3468
        %v3565 = vmul.f32 %v2797, %v3469
        %v3566 = vmul.f32 %v2798, %v3470
        %v3567 = vmul.f32 %v2799, %v3471
        %v3568 = vmul.f32 %v2800, %v3472
        %v3569 = vmul.f32 %v2801, %v3473
        %v3570 = vmul.f32 %v2802, %v3474
        %v3571 = vmul.f32 %v2803, %v3475
        %v3572 = vmul.f32 %v2804, %v3476
        %v3573 = vmul.f32 %v2805, %v3477
        %v3574 = vmul.f32 %v2806, %v3478
        %v3575 = vmul.f32 %v2807, %v3479
        %v3576 = vmul.f32 %v2808, %v3480
        %v3577 = vmul.f32 %v2809, %v3481
        %v3578 = vmul.f32 %v2810, %v3482
        %v3579 = vmul.f32 %v2811, %v3483
        %v3580 = vmul.f32 %v2812, %v3484
        %v3581 = vmul.f32 %v2813, %v3485
        %v3582 = vmul.f32 %v2814, %v3486
        %v3583 = vmul.f32 %v2815, %v3487
        %v3584 = vmul.f32 %v2816, %v3488
        %v3585 = vmul.f32 %v2817, %v3489
        %v3586 = vmul.f32 %v2818, %v3490
        %v3587 = vmul.f32 %v2819, %v3491
        %v3588 = vmul.f32 %v2820, %v3492
        %v3589 = vmul.f32 %v2821, %v3493
        %v3590 = vmul.f32 %v2822, %v3494
        %v3591 = vmul.f32 %v2823, %v3495
        %v3592 = vmul.f32 %v2824, %v3496
        %v3593 = vmul.f32 %v2825, %v3497
        %v3594 = vmul.f32 %v2826, %v3498
        %v3595 = vmul.f32 %v2827, %v3499
        %v3596 = vmul.f32 %v2828, %v3500
        %v3597 = vmul.f32 %v2829, %v3501
        %v3598 = vmul.f32 %v2830, %v3502
        %v3599 = vmul.f32 %v2831, %v3503
        %v3600 = vmul.f32 %v2832, %v3504
        %v3601 = vmul.f32 %v2833, %v3505
        %v3602 = vmul.f32 %v2834, %v3506
        %v3603 = vmul.f32 %v2835, %v3507
        %v3604 = vmul.f32 %v2836, %v3508
        %v3605 = vmul.f32 %v2837, %v3509
        %v3606 = vmul.f32 %v2838, %v3510
        %v3607 = vmul.f32 %v2839, %v3511
        %v3608 = vmul.f32 %v2840, %v3512
        %v3609 = vmul.f32 %v2841, %v3513
        %v3610 = vmul.f32 %v2842, %v3514
        %v3611 = vmul.f32 %v2843, %v3515
        %v3612 = vmul.f32 %v2844, %v3516
        %v3613 = vmul.f32 %v2845, %v3517
        %v3614 = vmul.f32 %v2846, %v3518
        %v3615 = vmul.f32 %v2847, %v3519
        %v3616 = vmul.f32 %v2848, %v3520
        %v3617 = vmul.f32 %v2849, %v3521
        %v3618 = vmul.f32 %v2850, %v3522
        %v3619 = vmul.f32 %v2851, %v3523
        %v3620 = vmul.f32 %v2852, %v3524
        %v3621 = vmul.f32 %v2853, %v3525
        %v3622 = vmul.f32 %v2854, %v3526
        %v3623 = vmul.f32 %v2855, %v3527
        %v3624 = vmul.f32 %v2856, %v3528
        %v3625 = vmul.f32 %v2857, %v3529
        %v3626 = vmul.f32 %v2858, %v3530
        %v3627 = vmul.f32 %v2859, %v3531
        %v3628 = vmul.f32 %v2860, %v3532
        %v3629 = vmul.f32 %v2861, %v3533
        %v3630 = vmul.f32 %v2862, %v3534
        %v3631 = vmul.f32 %v2863, %v3535
        %v3632 = vmul.f32 %v2864, %v3536
        %v3633 = vmul.f32 %v2865, %v3537
        %v3634 = vmul.f32 %v2866, %v3538
        %v3635 = vmul.f32 %v2867, %v3539
        %v3636 = vmul.f32 %v2868, %v3540
        %v3637 = vmul.f32 %v2869, %v3541
        %v3638 = vmul.f32 %v2870, %v3542
        %v3639 = vmul.f32 %v2871, %v3543
        %v3640 = vmul.f32 %v2872, %v3544
        %v3641 = vmul.f32 %v2873, %v3545
        %v3642 = vmul.f32 %v2874, %v3546
        %v3643 = vmul.f32 %v2875, %v3547
        %v3644 = vmul.f32 %v2876, %v3548
        %v3645 = vmul.f32 %v2877, %v3549
        %v3646 = vmul.f32 %v2878, %v3550
        %v3647 = vmul.f32 %v2879, %v3551
        %v3648 = vmul.f32 %v2880, %v3552
        %v3649 = vmul.f32 %v2881, %v3553
        %v3650 = vmul.f32 %v2882, %v3554
        %v3651 = vmul.f32 %v2883, %v3555
        %v3652 = vmul.f32 %v2884, %v3556
        %v3653 = vmul.f32 %v2885, %v3557
        %v3654 = vmul.f32 %v2886, %v3558
        %v3655 = vmul.f32 %v2887, %v3559
        %v3656 = vmul.f32 %v2888, %v3560
        %v3657 = vmul.f32 %v2889, %v3561
        %v3658 = vpack.c.bf16 %v3564, %v3562
        %v3659 = vpack.c.bf16 %v3565, %v3563
        %v3660 = vpack.c.bf16 %v3568, %v3566
        %v3661 = vpack.c.bf16 %v3569, %v3567
        %v3662 = vpack.c.bf16 %v3572, %v3570
        %v3663 = vpack.c.bf16 %v3573, %v3571
        %v3664 = vpack.c.bf16 %v3576, %v3574
        %v3665 = vpack.c.bf16 %v3577, %v3575
        %v3666 = vpack.c.bf16 %v3580, %v3578
        %v3667 = vpack.c.bf16 %v3581, %v3579
        %v3668 = vpack.c.bf16 %v3584, %v3582
        %v3669 = vpack.c.bf16 %v3585, %v3583
        %v3670 = vpack.c.bf16 %v3588, %v3586
        %v3671 = vpack.c.bf16 %v3589, %v3587
        %v3672 = vpack.c.bf16 %v3592, %v3590
        %v3673 = vpack.c.bf16 %v3593, %v3591
        %v3674 = vpack.c.bf16 %v3596, %v3594
        %v3675 = vpack.c.bf16 %v3597, %v3595
        %v3676 = vpack.c.bf16 %v3600, %v3598
        %v3677 = vpack.c.bf16 %v3601, %v3599
        %v3678 = vpack.c.bf16 %v3604, %v3602
        %v3679 = vpack.c.bf16 %v3605, %v3603
        %v3680 = vpack.c.bf16 %v3608, %v3606
        %v3681 = vpack.c.bf16 %v3609, %v3607
        %v3682 = vpack.c.bf16 %v3612, %v3610
        %v3683 = vpack.c.bf16 %v3613, %v3611
        %v3684 = vpack.c.bf16 %v3616, %v3614
        %v3685 = vpack.c.bf16 %v3617, %v3615
        %v3686 = vpack.c.bf16 %v3620, %v3618
        %v3687 = vpack.c.bf16 %v3621, %v3619
        %v3688 = vpack.c.bf16 %v3624, %v3622
        %v3689 = vpack.c.bf16 %v3625, %v3623
        %v3690 = vpack.c.bf16 %v3628, %v3626
        %v3691 = vpack.c.bf16 %v3629, %v3627
        %v3692 = vpack.c.bf16 %v3632, %v3630
        %v3693 = vpack.c.bf16 %v3633, %v3631
        %v3694 = vpack.c.bf16 %v3636, %v3634
        %v3695 = vpack.c.bf16 %v3637, %v3635
        %v3696 = vpack.c.bf16 %v3640, %v3638
        %v3697 = vpack.c.bf16 %v3641, %v3639
        %v3698 = vpack.c.bf16 %v3644, %v3642
        %v3699 = vpack.c.bf16 %v3645, %v3643
        %v3700 = vpack.c.bf16 %v3648, %v3646
        %v3701 = vpack.c.bf16 %v3649, %v3647
        %v3702 = vpack.c.bf16 %v3652, %v3650
        %v3703 = vpack.c.bf16 %v3653, %v3651
        %v3704 = vpack.c.bf16 %v3656, %v3654
        %v3705 = vpack.c.bf16 %v3657, %v3655
        %v3722 = vunpack.c.l.b16 %v459
        %v3723 = vunpack.c.h.b16 %v459
        %v3724 = vunpack.c.l.b16 %v460
        %v3725 = vunpack.c.l.b16 %v461
        %v3726 = vunpack.c.h.b16 %v461
        %v3727 = vunpack.c.l.b16 %v462
        %v3728 = vunpack.c.l.b16 %v463
        %v3729 = vunpack.c.h.b16 %v463
        %v3730 = vunpack.c.l.b16 %v464
        %v3731 = vunpack.c.l.b16 %v465
        %v3732 = vunpack.c.h.b16 %v465
        %v3733 = vunpack.c.l.b16 %v466
        %v3734 = vunpack.c.l.b16 %v467
        %v3735 = vunpack.c.h.b16 %v467
        %v3736 = vunpack.c.l.b16 %v468
        %v3737 = vunpack.c.l.b16 %v469
        %v3738 = vunpack.c.h.b16 %v469
        %v3739 = vunpack.c.l.b16 %v470
        %v3740 = vunpack.c.l.b16 %v471
        %v3741 = vunpack.c.h.b16 %v471
        %v3742 = vunpack.c.l.b16 %v472
        %v3743 = vunpack.c.l.b16 %v473
        %v3744 = vunpack.c.h.b16 %v473
        %v3745 = vunpack.c.l.b16 %v474
        %v3746 = vpack.c.b16 %v3725, %v3722
        %v3747 = vpack.c.b16 %v3726, %v3723
        %v3748 = vpack.c.b16 %v3727, %v3724
        %v3749 = vpack.c.b16 %v3731, %v3728
        %v3750 = vpack.c.b16 %v3732, %v3729
        %v3751 = vpack.c.b16 %v3733, %v3730
        %v3752 = vpack.c.b16 %v3737, %v3734
        %v3753 = vpack.c.b16 %v3738, %v3735
        %v3754 = vpack.c.b16 %v3739, %v3736
        %v3755 = vpack.c.b16 %v3743, %v3740
        %v3756 = vpack.c.b16 %v3744, %v3741
        %v3757 = vpack.c.b16 %v3745, %v3742
        %3770 = vmatprep.subr.bf16.mxu0 %v3659
        %3771 = vmatpush1.bf16.msra.mxu0 %v3658
        %3772 = vmatprep.subr.bf16.mxu0 %v3661
        %3773 = vmatpush1.bf16.msra.mxu0 %v3660
        %3774 = vmatprep.subr.bf16.mxu0 %v3663
        %3775 = vmatpush1.bf16.msra.mxu0 %v3662
        %3776 = vmatprep.subr.bf16.mxu0 %v3665
        %3777 = vmatpush1.bf16.msra.mxu0 %v3664
        %3778 = vmatprep.subr.bf16.mxu0 %v3667
        %3779 = vmatpush1.bf16.msra.mxu0 %v3666
        %3780 = vmatprep.subr.bf16.mxu0 %v3669
        %3781 = vmatpush1.bf16.msra.mxu0 %v3668
        %3782 = vmatprep.subr.bf16.mxu0 %v3671
        %3783 = vmatpush1.bf16.msra.mxu0 %v3670
        %3784 = vmatprep.subr.bf16.mxu0 %v3673
        %3785 = vmatpush1.bf16.msra.mxu0 %v3672
        %3786 = vmatprep.subr.bf16.mxu0 %v3675
        %3787 = vmatpush1.bf16.msra.mxu0 %v3674
        %3788 = vmatprep.subr.bf16.mxu0 %v3677
        %3789 = vmatpush1.bf16.msra.mxu0 %v3676
        %3790 = vmatprep.subr.bf16.mxu0 %v3679
        %3791 = vmatpush1.bf16.msra.mxu0 %v3678
        %3792 = vmatprep.subr.bf16.mxu0 %v3681
        %3793 = vmatpush1.bf16.msra.mxu0 %v3680
        %3794 = vmatprep.subr.bf16.mxu0 %v3683
        %3795 = vmatpush1.bf16.msra.mxu0 %v3682
        %3796 = vmatprep.subr.bf16.mxu0 %v3685
        %3797 = vmatpush1.bf16.msra.mxu0 %v3684
        %3798 = vmatprep.subr.bf16.mxu0 %v3687
        %3799 = vmatpush1.bf16.msra.mxu0 %v3686
        %3800 = vmatprep.subr.bf16.mxu0 %v3689
        %3801 = vmatpush1.bf16.msra.mxu0 %v3688
        %3802 = vmatprep.mubr.bf16.mxu0 %v3747
        %3803 = vmatmul.mubr.bf16.gmra.mrb[0].mxu0 %v3746
        %v3804 = vpop.f32.mrb[0].mxu0
        %v3805 = vadd.f32 %v773, %v3804
        %v3806 = vpop.f32.mrb[0].mxu0
        %v3807 = vadd.f32 %v773, %v3806
        %v3808 = vpop.f32.mrb[0].mxu0
        %v3809 = vadd.f32 %v777, %v3808
        %v3810 = vpop.f32.mrb[0].mxu0
        %v3811 = vadd.f32 %v777, %v3810
        %3812 = vmatprep.mubr.bf16.mxu0 %v3750
        %3813 = vmatmul.mubr.bf16.gmra.mrb[0].mxu0 %v3749
        %v3814 = vpop.f32.mrb[0].mxu0
        %v3815 = vadd.f32 %v781, %v3814
        %v3816 = vpop.f32.mrb[0].mxu0
        %v3817 = vadd.f32 %v781, %v3816
        %v3818 = vpop.f32.mrb[0].mxu0
        %v3819 = vadd.f32 %v785, %v3818
        %v3820 = vpop.f32.mrb[0].mxu0
        %v3821 = vadd.f32 %v785, %v3820
        %3822 = vmatprep.mubr.bf16.mxu0 %v3753
        %3823 = vmatmul.mubr.bf16.gmra.mrb[0].mxu0 %v3752
        %v3824 = vpop.f32.mrb[0].mxu0
        %v3825 = vadd.f32 %v789, %v3824
        %v3826 = vpop.f32.mrb[0].mxu0
        %v3827 = vadd.f32 %v789, %v3826
        %v3828 = vpop.f32.mrb[0].mxu0
        %v3829 = vadd.f32 %v793, %v3828
        %v3830 = vpop.f32.mrb[0].mxu0
        %v3831 = vadd.f32 %v793, %v3830
        %3832 = vmatprep.mubr.bf16.mxu0 %v3756
        %3833 = vmatmul.mubr.bf16.gmra.mrb[0].mxu0 %v3755
        %v3834 = vpop.f32.mrb[0].mxu0
        %v3835 = vadd.f32 %v797, %v3834
        %v3836 = vpop.f32.mrb[0].mxu0
        %v3837 = vadd.f32 %v797, %v3836
        %v3838 = vpop.f32.mrb[0].mxu0
        %v3839 = vadd.f32 %v801, %v3838
        %v3840 = vpop.f32.mrb[0].mxu0
        %v3841 = vadd.f32 %v801, %v3840
        %3842 = vdwg.mxu0
        %3843 = vmatprep.subr.bf16.mxu0 %v3691
        %3844 = vmatpush1.bf16.msra.mxu0 %v3690
        %3845 = vmatprep.subr.bf16.mxu0 %v3693
        %3846 = vmatpush1.bf16.msra.mxu0 %v3692
        %3847 = vmatprep.subr.bf16.mxu0 %v3695
        %3848 = vmatpush1.bf16.msra.mxu0 %v3694
        %3849 = vmatprep.subr.bf16.mxu0 %v3697
        %3850 = vmatpush1.bf16.msra.mxu0 %v3696
        %3851 = vmatprep.subr.bf16.mxu0 %v3699
        %3852 = vmatpush1.bf16.msra.mxu0 %v3698
        %3853 = vmatprep.subr.bf16.mxu0 %v3701
        %3854 = vmatpush1.bf16.msra.mxu0 %v3700
        %3855 = vmatprep.subr.bf16.mxu0 %v3703
        %3856 = vmatpush1.bf16.msra.mxu0 %v3702
        %3857 = vmatprep.subr.bf16.mxu0 %v3705
        %3858 = vmatpush1.bf16.msra.mxu0 %v3704
        %3859 = vmatprep.subr.bf16.mxu0 0
        %3860 = vmatpush1.bf16.msra.mxu0 0
        %3861 = vmatprep.subr.bf16.mxu0 0
        %3862 = vmatpush1.bf16.msra.mxu0 0
        %3863 = vmatprep.subr.bf16.mxu0 0
        %3864 = vmatpush1.bf16.msra.mxu0 0
        %3865 = vmatprep.subr.bf16.mxu0 0
        %3866 = vmatpush1.bf16.msra.mxu0 0
        %3867 = vmatprep.subr.bf16.mxu0 0
        %3868 = vmatpush1.bf16.msra.mxu0 0
        %3869 = vmatprep.subr.bf16.mxu0 0
        %3870 = vmatpush1.bf16.msra.mxu0 0
        %3871 = vmatprep.subr.bf16.mxu0 0
        %3872 = vmatpush1.bf16.msra.mxu0 0
        %3873 = vmatprep.subr.bf16.mxu0 0
        %3874 = vmatpush1.bf16.msra.mxu0 0
        %3875 = vmatprep.mubr.bf16.mxu0 0
        %3876 = vmatmul.mubr.bf16.gmra.mrb[0].mxu0 %v3748
        %v3877 = vpop.f32.mrb[0].mxu0
        %v3878 = vadd.f32 %v3805, %v3877
        %v3879 = vpop.f32.mrb[0].mxu0
        %v3880 = vadd.f32 %v3807, %v3879
        %v3881 = vpop.f32.mrb[0].mxu0
        %v3882 = vadd.f32 %v3809, %v3881
        %v3883 = vpop.f32.mrb[0].mxu0
        %v3884 = vadd.f32 %v3811, %v3883
        %3885 = vmatprep.mubr.bf16.mxu0 0
        %3886 = vmatmul.mubr.bf16.gmra.mrb[0].mxu0 %v3751
        %v3887 = vpop.f32.mrb[0].mxu0
        %v3888 = vadd.f32 %v3815, %v3887
        %v3889 = vpop.f32.mrb[0].mxu0
        %v3890 = vadd.f32 %v3817, %v3889
        %v3891 = vpop.f32.mrb[0].mxu0
        %v3892 = vadd.f32 %v3819, %v3891
        %v3893 = vpop.f32.mrb[0].mxu0
        %v3894 = vadd.f32 %v3821, %v3893
        %3895 = vmatprep.mubr.bf16.mxu0 0
        %3896 = vmatmul.mubr.bf16.gmra.mrb[0].mxu0 %v3754
        %v3897 = vpop.f32.mrb[0].mxu0
        %v3898 = vadd.f32 %v3825, %v3897
        %v3899 = vpop.f32.mrb[0].mxu0
        %v3900 = vadd.f32 %v3827, %v3899
        %v3901 = vpop.f32.mrb[0].mxu0
        %v3902 = vadd.f32 %v3829, %v3901
        %v3903 = vpop.f32.mrb[0].mxu0
        %v3904 = vadd.f32 %v3831, %v3903
        %3905 = vmatprep.mubr.bf16.mxu0 0
        %3906 = vmatmul.mubr.bf16.gmra.mrb[0].mxu0 %v3757
        %v3907 = vpop.f32.mrb[0].mxu0
        %v3908 = vadd.f32 %v3835, %v3907
        %v3909 = vpop.f32.mrb[0].mxu0
        %v3910 = vadd.f32 %v3837, %v3909
        %v3911 = vpop.f32.mrb[0].mxu0
        %v3912 = vadd.f32 %v3839, %v3911
        %v3913 = vpop.f32.mrb[0].mxu0
        %v3914 = vadd.f32 %v3841, %v3913
        %3915 = vdwg.mxu0
        %v3916 = vmul.f32 %v805, %v3878
        %v3917 = vmul.f32 %v805, %v3880
        %v3918 = vmul.f32 %v809, %v3882
        %v3919 = vmul.f32 %v809, %v3884
        %v3920 = vmul.f32 %v813, %v3888
        %v3921 = vmul.f32 %v813, %v3890
        %v3922 = vmul.f32 %v817, %v3892
        %v3923 = vmul.f32 %v817, %v3894
        %v3924 = vmul.f32 %v821, %v3898
        %v3925 = vmul.f32 %v821, %v3900
        %v3926 = vmul.f32 %v825, %v3902
        %v3927 = vmul.f32 %v825, %v3904
        %v3928 = vmul.f32 %v829, %v3908
        %v3929 = vmul.f32 %v829, %v3910
        %v3930 = vmul.f32 %v833, %v3912
        %v3931 = vmul.f32 %v833, %v3914
        %v3932 = vadd.f32 %v1155, %v3916
        %v3933 = vadd.f32 %v1156, %v3917
        %v3934 = vadd.f32 %v1157, %v3918
        %v3935 = vadd.f32 %v1158, %v3919
        %v3936 = vadd.f32 %v1159, %v3920
        %v3937 = vadd.f32 %v1160, %v3921
        %v3938 = vadd.f32 %v1161, %v3922
        %v3939 = vadd.f32 %v1162, %v3923
        %v3940 = vadd.f32 %v1163, %v3924
        %v3941 = vadd.f32 %v1164, %v3925
        %v3942 = vadd.f32 %v1165, %v3926
        %v3943 = vadd.f32 %v1166, %v3927
        %v3944 = vadd.f32 %v1167, %v3928
        %v3945 = vadd.f32 %v1168, %v3929
        %v3946 = vadd.f32 %v1169, %v3930
        %v3947 = vadd.f32 %v1170, %v3931
        %3948 = vst [vmem:[%s340] sm:$0xff] %v3932
        %3949 = vst [vmem:[%s340 + $0x8] sm:$0xff] %v3933
        %3950 = vst [vmem:[%s340 + $0x10] sm:$0xff] %v3934
        %3951 = vst [vmem:[%s340 + $0x18] sm:$0xff] %v3935
        %3952 = vst [vmem:[%s340 + $0x20] sm:$0xff] %v3936
        %3953 = vst [vmem:[%s340 + $0x28] sm:$0xff] %v3937
        %3954 = vst [vmem:[%s340 + $0x30] sm:$0xff] %v3938
        %3955 = vst [vmem:[%s340 + $0x38] sm:$0xff] %v3939
        %3956 = vst [vmem:[%s340 + $0x40] sm:$0xff] %v3940
        %3957 = vst [vmem:[%s340 + $0x48] sm:$0xff] %v3941
        %3958 = vst [vmem:[%s340 + $0x50] sm:$0xff] %v3942
        %3959 = vst [vmem:[%s340 + $0x58] sm:$0xff] %v3943
        %3960 = vst [vmem:[%s340 + $0x60] sm:$0xff] %v3944
        %3961 = vst [vmem:[%s340 + $0x68] sm:$0xff] %v3945
        %3962 = vst [vmem:[%s340 + $0x70] sm:$0xff] %v3946
        %3963 = vst [vmem:[%s340 + $0x78] sm:$0xff] %v3947
        %s3964 = sand.u32 %s226, 1
        %s3965 = scalar_lea.sflag [#allocation4], %s3964
        %s3966 = sand.u32 %s226, 1
        %s3967 = smul.addr %s3966, 128
        %s3968 = scalar_lea.vmem [#allocation5], %s3967
        // Predicated region
        $region61: #{tpu_custom_call.1} parent=55 // pred_check
          %p3969 = pneg %p236
        $region62: #{tpu_custom_call.1} parent=55 // pred_check_branch
          %3971 = sbr.rel (%p3969) target = $region64
        $region63: #{tpu_custom_call.1} parent=55 // pred_region
          %s3973 = ssub.s32 2048, 2048
          %3974 = vsyncadd %s3965, %s3973
          %s3975 = smul.addr %s24, 16
          %s3976 = smul.addr %s3975, 128
          %s3977 = scalar_lea.hbm %s9, %s3976
          %s3978 = sshll.u32 %s3968, 4
          %s3979 = int_to_ptr.vmem [resolvable:$true] %s3978
          %3984 = dma.vmem_to_hbm [thread:$0]  %s3979, 2048, %s3977, %s3965, 256, 256, 16
        $region64: #{tpu_custom_call.1} parent=55 // pred_fallthru
          _
      $region56: #{tpu_custom_call.1} parent=5 // pred_fallthru
        _
      %p3985 = scmp.le.s32.totalorder 2, %s19
      // Predicated region
      $region65: #{tpu_custom_call.1} parent=5 // pred_check
        %p3986 = pneg %p3985
      $region66: #{tpu_custom_call.1} parent=5 // pred_check_branch
        %3988 = sbr.rel (%p3986) target = $region68
      $region67: #{tpu_custom_call.1} parent=5 // pred_region
        %s3989 = ssub.s32 %s19, 2
        // Predicated region
        $region69: #{tpu_custom_call.1} parent=67 // pred_check
          %p3990 = pneg %p242
        $region70: #{tpu_custom_call.1} parent=67 // pred_check_branch
          %3992 = sbr.rel (%p3990) target = $region72
        $region71: #{tpu_custom_call.1} parent=67 // pred_region
          %s3993 = sand.u32 %s227, 1
          %s3994 = scalar_lea.sflag [#allocation4], %s3993
          %s3995 = sand.u32 %s227, 1
          %s3996 = smul.addr %s3995, 128
          %s3997 = scalar_lea.vmem [#allocation5], %s3996
          %3998 = dma.done %s3994, 2048
        $region72: #{tpu_custom_call.1} parent=67 // pred_fallthru
          _
      $region68: #{tpu_custom_call.1} parent=5 // pred_fallthru
        _
    $region6: #{tpu_custom_call.1} parent=1 // loop_footer
      %s23 = sadd.s32 1, %s19
    $region7: #{tpu_custom_call.1} parent=1 // loop_footer_branch
      %18 = sbr.rel target = $region3
    $region8: #{tpu_custom_call.1} parent=1 // loop_exit
      _
    %3999 = vsyncpa [#allocation3], 1
    %s4000 = scalar_lea.sflag [#allocation3], 1
    %4001 = vsyncpa %s4000, 1
    %4002 = vsyncpa [#allocation4], 1
    %s4003 = scalar_lea.sflag [#allocation4], 1
    %4004 = vsyncpa %s4003, 1

</llo_original>
